<compile_context>
chip_gen: v6e
topology: v6e:2x2x1
jax: 0.10.0
libtpu: 0.0.40
codegen_flags: <defaults>
</compile_context>

<pallas_src>
import math

import numpy as np
import jax
import jax.numpy as jnp
from jax.experimental import pallas as pl
from jax.experimental.pallas import tpu as pltpu

LANES = 128
SUBLANES = 8


def _pair(v):
    return (v, v) if isinstance(v, int) else tuple(v)


def _round_up(x, m):
    return ((x + m - 1) // m) * m


def _tile_bytes(shape, bytes_per_elem=4):
    """VMEM bytes of an f32 array with (8,128)-padded trailing tile."""
    lead = 1
    for d in shape[:-2]:
        lead *= int(d)
    return (lead * _round_up(int(shape[-2]), SUBLANES)
            * _round_up(int(shape[-1]), LANES) * bytes_per_elem)


# ---------------------------------------------------------------------------
# Parameter setup (matches the PyTorch module defaults)
# ---------------------------------------------------------------------------

def _tied_stage_coeffs(twiddle, stride, n):
    """twiddle: (S, n-1, 2, 2). Returns (2, n, S): [A, B] with
    new[i] = A[i]*x[i] + B[i]*x[i ^ stride]  (tied-weight butterfly stage)."""
    t = twiddle[:, stride - 1: 2 * stride - 1]   # (S, stride, 2, 2)
    a_rows, b_rows = [], []
    for i in range(n):
        j = i % stride
        h = (i // stride) % 2
        a_rows.append(t[:, j, h, h])
        b_rows.append(t[:, j, h, 1 - h])
    return jnp.stack([jnp.stack(a_rows, 0), jnp.stack(b_rows, 0)], 0)


def init_butterfly_bmm(key, in_size, out_size, matrix_batch, increasing_stride, bias):
    m = int(math.ceil(math.log2(in_size))) if in_size > 1 else 0
    n = 1 << m
    nstack = int(math.ceil(out_size / n))
    S = matrix_batch * nstack
    k_tw, k_b = jax.random.split(key)
    scaling = 1.0 / math.sqrt(2.0)               # 'regular' (non-ortho) init scale
    twiddle = jax.random.uniform(k_tw, (S, max(n - 1, 1), 2, 2), jnp.float32,
                                 minval=-scaling, maxval=scaling)
    if bias:
        bound = 1.0 / math.sqrt(in_size)
        b = jax.random.uniform(k_b, (matrix_batch, out_size), jnp.float32,
                               minval=-bound, maxval=bound)
    else:
        b = None
    strides = tuple(1 << ls for ls in (range(m) if increasing_stride else range(m - 1, -1, -1)))
    return dict(in_size=in_size, out_size=out_size, n=n, nstack=nstack,
                matrix_batch=matrix_batch, S=S, increasing_stride=increasing_stride,
                strides=strides, twiddle=twiddle, bias=b)


def init_butterfly_conv2d_bbt(key, in_channels, out_channels, kernel_size, stride=1,
                              padding=0, dilation=1, bias=True, nblocks=1):
    ks = _pair(kernel_size)
    cfg = dict(kernel_size=ks, stride=_pair(stride), padding=_pair(padding),
               dilation=_pair(dilation))
    k2 = ks[0] * ks[1]
    keys = jax.random.split(key, 2 * nblocks)
    layers = []
    for i in range(nblocks):
        layers.append(init_butterfly_bmm(keys[2 * i],
                                         in_channels if i == 0 else out_channels,
                                         out_channels, k2,
                                         increasing_stride=False, bias=False))
        layers.append(init_butterfly_bmm(keys[2 * i + 1], out_channels, out_channels, k2,
                                         increasing_stride=True,
                                         bias=(bias if i == nblocks - 1 else False)))
    return dict(layers=layers), cfg


# ---------------------------------------------------------------------------
# Fused Pallas kernel: all butterfly layers + stack regroup + mean + bias
# ---------------------------------------------------------------------------

def _make_fused_kernel(layers_meta, k2):
    n_layers = len(layers_meta)

    def kernel(*refs):
        x_ref = refs[0]
        coef_refs = refs[1:1 + n_layers]
        bias_ref = refs[1 + n_layers]
        o_ref = refs[n_layers + 2]

        x = x_ref[...].astype(jnp.float32)            # (c_in, k2, bb1, 128)
        bb1 = x.shape[2]

        for meta, cref in zip(layers_meta, coef_refs):
            n, nstack = meta["n"], meta["nstack"]
            strides, out_size = meta["strides"], meta["out_size"]
            c = x.shape[0]

            # pre_process: zero-pad channels to the power-of-2 size n (VMEM only)
            if c < n:
                x = jnp.concatenate(
                    [x, jnp.zeros((n - c,) + x.shape[1:], jnp.float32)], axis=0)
            # pre_process: replicate over nstack (stack index = mb*nstack + ns),
            # never materialized in HBM.
            if nstack > 1:
                x = jnp.broadcast_to(x[:, :, None], (n, k2, nstack, bb1, LANES))
                x = x.reshape(n, k2 * nstack, bb1, LANES)
            S = k2 * nstack

            # tied-weight butterfly factors (partner = channel ^ stride)
            for st_idx, s in enumerate(strides):
                a = cref[st_idx, 0].astype(jnp.float32)   # (n, S, 1, 128)
                b = cref[st_idx, 1].astype(jnp.float32)
                nb = n // (2 * s)
                x6 = x.reshape(nb, 2, s, S, bb1, LANES)
                a6 = a.reshape(nb, 2, s, S, 1, LANES)
                b6 = b.reshape(nb, 2, s, S, 1, LANES)
                lo, hi = x6[:, 0], x6[:, 1]
                out_lo = a6[:, 0] * lo + b6[:, 0] * hi
                out_hi = a6[:, 1] * hi + b6[:, 1] * lo
                x = jnp.stack([out_lo, out_hi], axis=1).reshape(n, S, bb1, LANES)

            # post_process: regroup stacks back into channels, crop to out_size
            if nstack > 1:
                x5 = x.reshape(n, k2, nstack, bb1, LANES)
                x = jnp.concatenate([x5[:, :, ns] for ns in range(nstack)], axis=0)
            x = x[:out_size]                          # (out_size, k2, bb1, 128)

        # mean over the matrix_batch (= k2) axis, fused bias add
        acc = x[:, 0]
        for t in range(1, k2):
            acc = acc + x[:, t]
        y = acc * jnp.float32(1.0 / k2)
        y = y + bias_ref[...].astype(jnp.float32)     # (out_ch, 1, 128) -> sublane bcast
        o_ref[...] = y.astype(o_ref.dtype)

    return kernel


# ---------------------------------------------------------------------------
# Forward wrapper
# ---------------------------------------------------------------------------

def butterfly_conv2d_bbt_forward(x_nchw, params, cfg, block_b_max=2048):
    batch, c, h, w = x_nchw.shape
    (kh, kw), (sh, sw) = cfg["kernel_size"], cfg["stride"]
    (ph, pw), (dh, dw) = cfg["padding"], cfg["dilation"]
    # Reproduce the PyTorch formulas exactly (note: w_out uses `h`, as in the reference).
    h_out = (h + 2 * ph - dh * (kh - 1) - 1) // sh + 1
    w_out = (h + 2 * pw - dw * (kw - 1) - 1) // sw + 1
    k2, L = kh * kw, h_out * w_out
    B = batch * L

    # ---- im2col glue (XLA), matching F.unfold ordering ----------------------
    padded = jnp.pad(x_nchw, ((0, 0), (0, 0), (ph, ph), (pw, pw)))
    pats = []
    for ki in range(kh):
        for kj in range(kw):
            pats.append(padded[:, :,
                               ki * dh: ki * dh + (h_out - 1) * sh + 1: sh,
                               kj * dw: kj * dw + (w_out - 1) * sw + 1: sw])
    patches = jnp.stack(pats, axis=2)                 # (batch, c, k2, h_out, w_out)
    x_ckb = jnp.transpose(patches, (1, 2, 0, 3, 4)).reshape(c, k2, B)

    # ---- pad the pixel batch to a lane-dense multiple of the block size -----
    block_b = min(block_b_max, _round_up(B, LANES))
    B_pad = _round_up(B, block_b)
    if B_pad > B:
        x_ckb = jnp.pad(x_ckb, ((0, 0), (0, 0), (0, B_pad - B)))
    nB, bb1 = B_pad // LANES, block_b // LANES
    x4 = x_ckb.reshape(c, k2, nB, LANES)

    # ---- per-layer tied butterfly coefficients, lane-replicated --------------
    layers_meta, coef_arrays, coef_specs = [], [], []
    for layer in params["layers"]:
        n, S = layer["n"], layer["S"]
        if layer["strides"]:
            coefs = jnp.stack([_tied_stage_coeffs(layer["twiddle"], s, n)
                               for s in layer["strides"]], axis=0)     # (m, 2, n, S)
        else:
            coefs = jnp.zeros((1, 2, n, S), jnp.float32)
        coefs = jnp.broadcast_to(coefs[..., None, None],
                                 coefs.shape + (1, LANES))             # (m,2,n,S,1,128)
        coef_arrays.append(coefs)
        coef_specs.append(pl.BlockSpec(coefs.shape,
                                       lambda i: (0, 0, 0, 0, 0, 0)))
        layers_meta.append(dict(n=n, nstack=layer["nstack"],
                                strides=layer["strides"],
                                out_size=layer["out_size"]))

    # Bias only ever exists on the final layer; the mean over matrix_batch commutes
    # with the (batch-independent) bias add, so fold it to a single per-channel add.
    for lyr in params["layers"][:-1]:
        assert lyr["bias"] is None
    last = params["layers"][-1]
    out_ch = last["out_size"]
    if last["bias"] is not None:
        bias_mean = jnp.mean(last["bias"].astype(jnp.float32), axis=0)
    else:
        bias_mean = jnp.zeros((out_ch,), jnp.float32)
    bias_in = jnp.broadcast_to(bias_mean[:, None, None], (out_ch, 1, LANES))

    kernel = _make_fused_kernel(layers_meta, k2)

    in_specs = ([pl.BlockSpec((c, k2, bb1, LANES), lambda i: (0, 0, i, 0))]
                + coef_specs
                + [pl.BlockSpec((out_ch, 1, LANES), lambda i: (0, 0, 0))])
    out_spec = pl.BlockSpec((out_ch, bb1, LANES), lambda i: (0, i, 0))

    # rough VMEM budget: double-buffered blocks + in-kernel working arrays
    est = 2 * _tile_bytes((c, k2, bb1, LANES)) + 2 * _tile_bytes((out_ch, bb1, LANES))
    est += 2 * _tile_bytes((out_ch, 1, LANES))
    for ca in coef_arrays:
        est += 2 * _tile_bytes(ca.shape)
    est += 8 * max(_tile_bytes((mt["n"], k2 * mt["nstack"], bb1, LANES))
                   for mt in layers_meta)
    cp = dict(dimension_semantics=("parallel",))
    if est > 12 * 2 ** 20:
        cp["vmem_limit_bytes"] = int(min(2 * est, 56 * 2 ** 20))

    out4 = pl.pallas_call(
        kernel,
        out_shape=jax.ShapeDtypeStruct((out_ch, nB, LANES), x_nchw.dtype),
        grid_spec=pltpu.PrefetchScalarGridSpec(
            num_scalar_prefetch=0,
            grid=(nB // bb1,),
            in_specs=in_specs,
            out_specs=out_spec),
        compiler_params=pltpu.CompilerParams(**cp),
    )(x4, *coef_arrays, bias_in)

    out_cb = out4.reshape(out_ch, B_pad)[:, :B]
    out = out_cb.reshape(out_ch, batch, L).transpose(1, 0, 2)
    return out.reshape(batch, out_ch, h_out, w_out)


# ---------------------------------------------------------------------------
# Pure-JAX reference (mirrors the PyTorch module), for verification
# ---------------------------------------------------------------------------

def _butterfly_mult_tied_ref(twiddle, x, increasing_stride):
    bsz, S, n = x.shape
    m = int(round(math.log2(n))) if n > 1 else 0
    out = x
    order = range(m) if increasing_stride else range(m - 1, -1, -1)
    for ls in order:
        stride = 1 << ls
        t = jnp.transpose(twiddle[:, stride - 1: 2 * stride - 1], (0, 2, 3, 1))  # (S,2,2,st)
        o = out.reshape(bsz, S, n // (2 * stride), 1, 2, stride)
        out = (t[:, None] * o).sum(axis=4).reshape(bsz, S, n)
    return out


def _butterfly_bmm_ref(layer, x):
    bsz = x.shape[0]
    mb, n, nstack = layer["matrix_batch"], layer["n"], layer["nstack"]
    if layer["in_size"] < n:
        x = jnp.pad(x, ((0, 0), (0, 0), (0, n - layer["in_size"])))
    xe = jnp.broadcast_to(x[:, :, None, :], (bsz, mb, nstack, n)).reshape(bsz, mb * nstack, n)
    out = _butterfly_mult_tied_ref(layer["twiddle"], xe, layer["increasing_stride"])
    out = out.reshape(bsz, mb, nstack * n)[:, :, : layer["out_size"]]
    if layer["bias"] is not None:
        out = out + layer["bias"]
    return out


def butterfly_conv2d_bbt_ref(x_nchw, params, cfg):
    batch, c, h, w = x_nchw.shape
    (kh, kw), (sh, sw) = cfg["kernel_size"], cfg["stride"]
    (ph, pw), (dh, dw) = cfg["padding"], cfg["dilation"]
    h_out = (h + 2 * ph - dh * (kh - 1) - 1) // sh + 1
    w_out = (h + 2 * pw - dw * (kw - 1) - 1) // sw + 1
    k2, L = kh * kw, h_out * w_out
    padded = jnp.pad(x_nchw, ((0, 0), (0, 0), (ph, ph), (pw, pw)))
    pats = []
    for ki in range(kh):
        for kj in range(kw):
            pats.append(padded[:, :,
                               ki * dh: ki * dh + (h_out - 1) * sh + 1: sh,
                               kj * dw: kj * dw + (w_out - 1) * sw + 1: sw])
    patches = jnp.stack(pats, axis=2).reshape(batch, c, k2, L)
    y = jnp.transpose(patches, (0, 3, 2, 1)).reshape(batch * L, k2, c)
    for layer in params["layers"]:
        y = _butterfly_bmm_ref(layer, y)
    out_ch = params["layers"][-1]["out_size"]
    out = y.mean(axis=1).reshape(batch, L, out_ch)
    return jnp.transpose(out, (0, 2, 1)).reshape(batch, out_ch, h_out, w_out)


# ---------------------------------------------------------------------------

if __name__ == "__main__":
    key = jax.random.PRNGKey(0)
    k_params, k_x = jax.random.split(key)

    # Test 1: module defaults, nblocks=1
    batch, in_ch, out_ch, H, W = 2, 4, 8, 16, 16
    params, cfg = init_butterfly_conv2d_bbt(
        k_params, in_ch, out_ch, kernel_size=3, stride=1, padding=1,
        dilation=1, bias=True, nblocks=1)
    x = jax.random.normal(k_x, (batch, in_ch, H, W), jnp.float32)

    fwd = jax.jit(lambda xx: butterfly_conv2d_bbt_forward(xx, params, cfg))
    out = jax.block_until_ready(fwd(x))
    assert out.shape == (batch, out_ch, H, W), out.shape
    ref = butterfly_conv2d_bbt_ref(x, params, cfg)
    np.testing.assert_allclose(np.asarray(out), np.asarray(ref), rtol=1e-4, atol=1e-4)

    # Test 2: non-power-of-2 channels, pixel batch not a multiple of 128, nblocks=2
    params2, cfg2 = init_butterfly_conv2d_bbt(
        jax.random.PRNGKey(1), 3, 8, kernel_size=3, stride=1, padding=1,
        dilation=1, bias=True, nblocks=2)
    x2 = jax.random.normal(jax.random.PRNGKey(2), (1, 3, 7, 7), jnp.float32)
    fwd2 = jax.jit(lambda xx: butterfly_conv2d_bbt_forward(xx, params2, cfg2))
    out2 = jax.block_until_ready(fwd2(x2))
    assert out2.shape == (1, 8, 7, 7), out2.shape
    ref2 = butterfly_conv2d_bbt_ref(x2, params2, cfg2)
    np.testing.assert_allclose(np.asarray(out2), np.asarray(ref2), rtol=1e-4, atol=1e-4)

    print("KERNEL_OK")
</pallas_src>

<mosaic_0001>
module attributes {stable_mosaic.version = 11 : i64} {
  func.func @kernel(%arg0: i32, %arg1: memref<4x9x4x128xf32, #tpu.memory_space<vmem>>, %arg2: memref<2x2x4x18x1x128xf32, #tpu.memory_space<vmem>>, %arg3: memref<3x2x8x9x1x128xf32, #tpu.memory_space<vmem>>, %arg4: memref<8x1x128xf32, #tpu.memory_space<vmem>>, %arg5: memref<8x4x128xf32, #tpu.memory_space<vmem>>) attributes {dimension_semantics = [#tpu.dimension_semantics<parallel>], iteration_bounds = array<i64: 1>, scalar_prefetch = 0 : i64, scratch_operands = 0 : i64, tpu.core_type = #tpu.core_type<tc>, window_params = [{transform_indices = @transform_0, window_bounds = array<i64: 4, 9, 4, 128>}, {pipeline_mode = #tpu.pipeline_mode<synchronous>, transform_indices = @transform_1, window_bounds = array<i64: 2, 2, 4, 18, 1, 128>}, {pipeline_mode = #tpu.pipeline_mode<synchronous>, transform_indices = @transform_2, window_bounds = array<i64: 3, 2, 8, 9, 1, 128>}, {pipeline_mode = #tpu.pipeline_mode<synchronous>, transform_indices = @transform_3, window_bounds = array<i64: 8, 1, 128>}, {transform_indices = @transform_4, window_bounds = array<i64: 8, 4, 128>}]} {
    %c0 = arith.constant 0 : index
    %c0_0 = arith.constant 0 : index
    %c0_1 = arith.constant 0 : index
    %c0_2 = arith.constant 0 : index
    %0 = vector.load %arg1[%c0, %c0_0, %c0_1, %c0_2] : memref<4x9x4x128xf32, #tpu.memory_space<vmem>>, vector<4x9x4x128xf32>
    %1 = vector.shape_cast %0 : vector<4x9x4x128xf32> to vector<4x9x1x4x128xf32>
    %2 = vector.shape_cast %1 : vector<4x9x1x4x128xf32> to vector<4x9x1x4x128xf32>
    %3 = vector.broadcast %2 : vector<4x9x1x4x128xf32> to vector<4x9x2x4x128xf32>
    %4 = vector.shape_cast %3 : vector<4x9x2x4x128xf32> to vector<4x18x4x128xf32>
    %c0_3 = arith.constant 0 : index
    %c0_4 = arith.constant 0 : index
    %c0_5 = arith.constant 0 : index
    %c0_6 = arith.constant 0 : index
    %c0_7 = arith.constant 0 : index
    %c0_8 = arith.constant 0 : index
    %5 = vector.load %arg2[%c0_3, %c0_4, %c0_5, %c0_6, %c0_7, %c0_8] : memref<2x2x4x18x1x128xf32, #tpu.memory_space<vmem>>, vector<1x1x4x18x1x128xf32>
    %6 = vector.shape_cast %5 : vector<1x1x4x18x1x128xf32> to vector<4x18x1x128xf32>
    %c0_9 = arith.constant 0 : index
    %c1 = arith.constant 1 : index
    %c0_10 = arith.constant 0 : index
    %c0_11 = arith.constant 0 : index
    %c0_12 = arith.constant 0 : index
    %c0_13 = arith.constant 0 : index
    %7 = vector.load %arg2[%c0_9, %c1, %c0_10, %c0_11, %c0_12, %c0_13] : memref<2x2x4x18x1x128xf32, #tpu.memory_space<vmem>>, vector<1x1x4x18x1x128xf32>
    %8 = vector.shape_cast %7 : vector<1x1x4x18x1x128xf32> to vector<4x18x1x128xf32>
    %9 = vector.shape_cast %4 : vector<4x18x4x128xf32> to vector<1x2x2x18x4x128xf32>
    %10 = vector.shape_cast %6 : vector<4x18x1x128xf32> to vector<1x2x2x18x1x128xf32>
    %11 = vector.shape_cast %8 : vector<4x18x1x128xf32> to vector<1x2x2x18x1x128xf32>
    %12 = vector.extract_strided_slice %9 {offsets = [0, 0, 0, 0, 0, 0], sizes = [1, 1, 2, 18, 4, 128], strides = [1, 1, 1, 1, 1, 1]} : vector<1x2x2x18x4x128xf32> to vector<1x1x2x18x4x128xf32>
    %13 = vector.shape_cast %12 : vector<1x1x2x18x4x128xf32> to vector<1x2x18x4x128xf32>
    %14 = vector.extract_strided_slice %9 {offsets = [0, 1, 0, 0, 0, 0], sizes = [1, 1, 2, 18, 4, 128], strides = [1, 1, 1, 1, 1, 1]} : vector<1x2x2x18x4x128xf32> to vector<1x1x2x18x4x128xf32>
    %15 = vector.shape_cast %14 : vector<1x1x2x18x4x128xf32> to vector<1x2x18x4x128xf32>
    %16 = vector.extract_strided_slice %10 {offsets = [0, 0, 0, 0, 0, 0], sizes = [1, 1, 2, 18, 1, 128], strides = [1, 1, 1, 1, 1, 1]} : vector<1x2x2x18x1x128xf32> to vector<1x1x2x18x1x128xf32>
    %17 = vector.shape_cast %16 : vector<1x1x2x18x1x128xf32> to vector<1x2x18x1x128xf32>
    %18 = vector.broadcast %17 : vector<1x2x18x1x128xf32> to vector<1x2x18x4x128xf32>
    %19 = arith.mulf %18, %13 : vector<1x2x18x4x128xf32>
    %20 = vector.extract_strided_slice %11 {offsets = [0, 0, 0, 0, 0, 0], sizes = [1, 1, 2, 18, 1, 128], strides = [1, 1, 1, 1, 1, 1]} : vector<1x2x2x18x1x128xf32> to vector<1x1x2x18x1x128xf32>
    %21 = vector.shape_cast %20 : vector<1x1x2x18x1x128xf32> to vector<1x2x18x1x128xf32>
    %22 = vector.broadcast %21 : vector<1x2x18x1x128xf32> to vector<1x2x18x4x128xf32>
    %23 = arith.mulf %22, %15 : vector<1x2x18x4x128xf32>
    %24 = arith.addf %19, %23 : vector<1x2x18x4x128xf32>
    %25 = vector.extract_strided_slice %10 {offsets = [0, 1, 0, 0, 0, 0], sizes = [1, 1, 2, 18, 1, 128], strides = [1, 1, 1, 1, 1, 1]} : vector<1x2x2x18x1x128xf32> to vector<1x1x2x18x1x128xf32>
    %26 = vector.shape_cast %25 : vector<1x1x2x18x1x128xf32> to vector<1x2x18x1x128xf32>
    %27 = vector.broadcast %26 : vector<1x2x18x1x128xf32> to vector<1x2x18x4x128xf32>
    %28 = arith.mulf %27, %15 : vector<1x2x18x4x128xf32>
    %29 = vector.extract_strided_slice %11 {offsets = [0, 1, 0, 0, 0, 0], sizes = [1, 1, 2, 18, 1, 128], strides = [1, 1, 1, 1, 1, 1]} : vector<1x2x2x18x1x128xf32> to vector<1x1x2x18x1x128xf32>
    %30 = vector.shape_cast %29 : vector<1x1x2x18x1x128xf32> to vector<1x2x18x1x128xf32>
    %31 = vector.broadcast %30 : vector<1x2x18x1x128xf32> to vector<1x2x18x4x128xf32>
    %32 = arith.mulf %31, %13 : vector<1x2x18x4x128xf32>
    %33 = arith.addf %28, %32 : vector<1x2x18x4x128xf32>
    %34 = vector.shape_cast %24 : vector<1x2x18x4x128xf32> to vector<1x1x2x18x4x128xf32>
    %35 = vector.shape_cast %33 : vector<1x2x18x4x128xf32> to vector<1x1x2x18x4x128xf32>
    %36 = tpu.concatenate %34, %35 in 1 : vector<1x1x2x18x4x128xf32>, vector<1x1x2x18x4x128xf32> -> vector<1x2x2x18x4x128xf32>
    %37 = vector.shape_cast %36 : vector<1x2x2x18x4x128xf32> to vector<4x18x4x128xf32>
    %c1_14 = arith.constant 1 : index
    %c0_15 = arith.constant 0 : index
    %c0_16 = arith.constant 0 : index
    %c0_17 = arith.constant 0 : index
    %c0_18 = arith.constant 0 : index
    %c0_19 = arith.constant 0 : index
    %38 = vector.load %arg2[%c1_14, %c0_15, %c0_16, %c0_17, %c0_18, %c0_19] : memref<2x2x4x18x1x128xf32, #tpu.memory_space<vmem>>, vector<1x1x4x18x1x128xf32>
    %39 = vector.shape_cast %38 : vector<1x1x4x18x1x128xf32> to vector<4x18x1x128xf32>
    %c1_20 = arith.constant 1 : index
    %c1_21 = arith.constant 1 : index
    %c0_22 = arith.constant 0 : index
    %c0_23 = arith.constant 0 : index
    %c0_24 = arith.constant 0 : index
    %c0_25 = arith.constant 0 : index
    %40 = vector.load %arg2[%c1_20, %c1_21, %c0_22, %c0_23, %c0_24, %c0_25] : memref<2x2x4x18x1x128xf32, #tpu.memory_space<vmem>>, vector<1x1x4x18x1x128xf32>
    %41 = vector.shape_cast %40 : vector<1x1x4x18x1x128xf32> to vector<4x18x1x128xf32>
    %42 = vector.shape_cast %37 : vector<4x18x4x128xf32> to vector<2x2x1x18x4x128xf32>
    %43 = vector.shape_cast %39 : vector<4x18x1x128xf32> to vector<2x2x1x18x1x128xf32>
    %44 = vector.shape_cast %41 : vector<4x18x1x128xf32> to vector<2x2x1x18x1x128xf32>
    %45 = vector.extract_strided_slice %42 {offsets = [0, 0, 0, 0, 0, 0], sizes = [2, 1, 1, 18, 4, 128], strides = [1, 1, 1, 1, 1, 1]} : vector<2x2x1x18x4x128xf32> to vector<2x1x1x18x4x128xf32>
    %46 = vector.shape_cast %45 : vector<2x1x1x18x4x128xf32> to vector<2x1x18x4x128xf32>
    %47 = vector.extract_strided_slice %42 {offsets = [0, 1, 0, 0, 0, 0], sizes = [2, 1, 1, 18, 4, 128], strides = [1, 1, 1, 1, 1, 1]} : vector<2x2x1x18x4x128xf32> to vector<2x1x1x18x4x128xf32>
    %48 = vector.shape_cast %47 : vector<2x1x1x18x4x128xf32> to vector<2x1x18x4x128xf32>
    %49 = vector.extract_strided_slice %43 {offsets = [0, 0, 0, 0, 0, 0], sizes = [2, 1, 1, 18, 1, 128], strides = [1, 1, 1, 1, 1, 1]} : vector<2x2x1x18x1x128xf32> to vector<2x1x1x18x1x128xf32>
    %50 = vector.shape_cast %49 : vector<2x1x1x18x1x128xf32> to vector<2x1x18x1x128xf32>
    %51 = vector.broadcast %50 : vector<2x1x18x1x128xf32> to vector<2x1x18x4x128xf32>
    %52 = arith.mulf %51, %46 : vector<2x1x18x4x128xf32>
    %53 = vector.extract_strided_slice %44 {offsets = [0, 0, 0, 0, 0, 0], sizes = [2, 1, 1, 18, 1, 128], strides = [1, 1, 1, 1, 1, 1]} : vector<2x2x1x18x1x128xf32> to vector<2x1x1x18x1x128xf32>
    %54 = vector.shape_cast %53 : vector<2x1x1x18x1x128xf32> to vector<2x1x18x1x128xf32>
    %55 = vector.broadcast %54 : vector<2x1x18x1x128xf32> to vector<2x1x18x4x128xf32>
    %56 = arith.mulf %55, %48 : vector<2x1x18x4x128xf32>
    %57 = arith.addf %52, %56 : vector<2x1x18x4x128xf32>
    %58 = vector.extract_strided_slice %43 {offsets = [0, 1, 0, 0, 0, 0], sizes = [2, 1, 1, 18, 1, 128], strides = [1, 1, 1, 1, 1, 1]} : vector<2x2x1x18x1x128xf32> to vector<2x1x1x18x1x128xf32>
    %59 = vector.shape_cast %58 : vector<2x1x1x18x1x128xf32> to vector<2x1x18x1x128xf32>
    %60 = vector.broadcast %59 : vector<2x1x18x1x128xf32> to vector<2x1x18x4x128xf32>
    %61 = arith.mulf %60, %48 : vector<2x1x18x4x128xf32>
    %62 = vector.extract_strided_slice %44 {offsets = [0, 1, 0, 0, 0, 0], sizes = [2, 1, 1, 18, 1, 128], strides = [1, 1, 1, 1, 1, 1]} : vector<2x2x1x18x1x128xf32> to vector<2x1x1x18x1x128xf32>
    %63 = vector.shape_cast %62 : vector<2x1x1x18x1x128xf32> to vector<2x1x18x1x128xf32>
    %64 = vector.broadcast %63 : vector<2x1x18x1x128xf32> to vector<2x1x18x4x128xf32>
    %65 = arith.mulf %64, %46 : vector<2x1x18x4x128xf32>
    %66 = arith.addf %61, %65 : vector<2x1x18x4x128xf32>
    %67 = vector.shape_cast %57 : vector<2x1x18x4x128xf32> to vector<2x1x1x18x4x128xf32>
    %68 = vector.shape_cast %66 : vector<2x1x18x4x128xf32> to vector<2x1x1x18x4x128xf32>
    %69 = tpu.concatenate %67, %68 in 1 : vector<2x1x1x18x4x128xf32>, vector<2x1x1x18x4x128xf32> -> vector<2x2x1x18x4x128xf32>
    %70 = vector.shape_cast %69 : vector<2x2x1x18x4x128xf32> to vector<4x18x4x128xf32>
    %71 = vector.shape_cast %70 : vector<4x18x4x128xf32> to vector<4x9x2x4x128xf32>
    %72 = vector.extract_strided_slice %71 {offsets = [0, 0, 0, 0, 0], sizes = [4, 9, 1, 4, 128], strides = [1, 1, 1, 1, 1]} : vector<4x9x2x4x128xf32> to vector<4x9x1x4x128xf32>
    %73 = vector.shape_cast %72 : vector<4x9x1x4x128xf32> to vector<4x9x4x128xf32>
    %74 = vector.extract_strided_slice %71 {offsets = [0, 0, 1, 0, 0], sizes = [4, 9, 1, 4, 128], strides = [1, 1, 1, 1, 1]} : vector<4x9x2x4x128xf32> to vector<4x9x1x4x128xf32>
    %75 = vector.shape_cast %74 : vector<4x9x1x4x128xf32> to vector<4x9x4x128xf32>
    %76 = tpu.concatenate %73, %75 in 0 : vector<4x9x4x128xf32>, vector<4x9x4x128xf32> -> vector<8x9x4x128xf32>
    %c0_26 = arith.constant 0 : index
    %c0_27 = arith.constant 0 : index
    %c0_28 = arith.constant 0 : index
    %c0_29 = arith.constant 0 : index
    %c0_30 = arith.constant 0 : index
    %c0_31 = arith.constant 0 : index
    %77 = vector.load %arg3[%c0_26, %c0_27, %c0_28, %c0_29, %c0_30, %c0_31] : memref<3x2x8x9x1x128xf32, #tpu.memory_space<vmem>>, vector<1x1x8x9x1x128xf32>
    %78 = vector.shape_cast %77 : vector<1x1x8x9x1x128xf32> to vector<8x9x1x128xf32>
    %c0_32 = arith.constant 0 : index
    %c1_33 = arith.constant 1 : index
    %c0_34 = arith.constant 0 : index
    %c0_35 = arith.constant 0 : index
    %c0_36 = arith.constant 0 : index
    %c0_37 = arith.constant 0 : index
    %79 = vector.load %arg3[%c0_32, %c1_33, %c0_34, %c0_35, %c0_36, %c0_37] : memref<3x2x8x9x1x128xf32, #tpu.memory_space<vmem>>, vector<1x1x8x9x1x128xf32>
    %80 = vector.shape_cast %79 : vector<1x1x8x9x1x128xf32> to vector<8x9x1x128xf32>
    %81 = vector.shape_cast %76 : vector<8x9x4x128xf32> to vector<4x2x1x9x4x128xf32>
    %82 = vector.shape_cast %78 : vector<8x9x1x128xf32> to vector<4x2x1x9x1x128xf32>
    %83 = vector.shape_cast %80 : vector<8x9x1x128xf32> to vector<4x2x1x9x1x128xf32>
    %84 = vector.extract_strided_slice %81 {offsets = [0, 0, 0, 0, 0, 0], sizes = [4, 1, 1, 9, 4, 128], strides = [1, 1, 1, 1, 1, 1]} : vector<4x2x1x9x4x128xf32> to vector<4x1x1x9x4x128xf32>
    %85 = vector.shape_cast %84 : vector<4x1x1x9x4x128xf32> to vector<4x1x9x4x128xf32>
    %86 = vector.extract_strided_slice %81 {offsets = [0, 1, 0, 0, 0, 0], sizes = [4, 1, 1, 9, 4, 128], strides = [1, 1, 1, 1, 1, 1]} : vector<4x2x1x9x4x128xf32> to vector<4x1x1x9x4x128xf32>
    %87 = vector.shape_cast %86 : vector<4x1x1x9x4x128xf32> to vector<4x1x9x4x128xf32>
    %88 = vector.extract_strided_slice %82 {offsets = [0, 0, 0, 0, 0, 0], sizes = [4, 1, 1, 9, 1, 128], strides = [1, 1, 1, 1, 1, 1]} : vector<4x2x1x9x1x128xf32> to vector<4x1x1x9x1x128xf32>
    %89 = vector.shape_cast %88 : vector<4x1x1x9x1x128xf32> to vector<4x1x9x1x128xf32>
    %90 = vector.broadcast %89 : vector<4x1x9x1x128xf32> to vector<4x1x9x4x128xf32>
    %91 = arith.mulf %90, %85 : vector<4x1x9x4x128xf32>
    %92 = vector.extract_strided_slice %83 {offsets = [0, 0, 0, 0, 0, 0], sizes = [4, 1, 1, 9, 1, 128], strides = [1, 1, 1, 1, 1, 1]} : vector<4x2x1x9x1x128xf32> to vector<4x1x1x9x1x128xf32>
    %93 = vector.shape_cast %92 : vector<4x1x1x9x1x128xf32> to vector<4x1x9x1x128xf32>
    %94 = vector.broadcast %93 : vector<4x1x9x1x128xf32> to vector<4x1x9x4x128xf32>
    %95 = arith.mulf %94, %87 : vector<4x1x9x4x128xf32>
    %96 = arith.addf %91, %95 : vector<4x1x9x4x128xf32>
    %97 = vector.extract_strided_slice %82 {offsets = [0, 1, 0, 0, 0, 0], sizes = [4, 1, 1, 9, 1, 128], strides = [1, 1, 1, 1, 1, 1]} : vector<4x2x1x9x1x128xf32> to vector<4x1x1x9x1x128xf32>
    %98 = vector.shape_cast %97 : vector<4x1x1x9x1x128xf32> to vector<4x1x9x1x128xf32>
    %99 = vector.broadcast %98 : vector<4x1x9x1x128xf32> to vector<4x1x9x4x128xf32>
    %100 = arith.mulf %99, %87 : vector<4x1x9x4x128xf32>
    %101 = vector.extract_strided_slice %83 {offsets = [0, 1, 0, 0, 0, 0], sizes = [4, 1, 1, 9, 1, 128], strides = [1, 1, 1, 1, 1, 1]} : vector<4x2x1x9x1x128xf32> to vector<4x1x1x9x1x128xf32>
    %102 = vector.shape_cast %101 : vector<4x1x1x9x1x128xf32> to vector<4x1x9x1x128xf32>
    %103 = vector.broadcast %102 : vector<4x1x9x1x128xf32> to vector<4x1x9x4x128xf32>
    %104 = arith.mulf %103, %85 : vector<4x1x9x4x128xf32>
    %105 = arith.addf %100, %104 : vector<4x1x9x4x128xf32>
    %106 = vector.shape_cast %96 : vector<4x1x9x4x128xf32> to vector<4x1x1x9x4x128xf32>
    %107 = vector.shape_cast %105 : vector<4x1x9x4x128xf32> to vector<4x1x1x9x4x128xf32>
    %108 = tpu.concatenate %106, %107 in 1 : vector<4x1x1x9x4x128xf32>, vector<4x1x1x9x4x128xf32> -> vector<4x2x1x9x4x128xf32>
    %109 = vector.shape_cast %108 : vector<4x2x1x9x4x128xf32> to vector<8x9x4x128xf32>
    %c1_38 = arith.constant 1 : index
    %c0_39 = arith.constant 0 : index
    %c0_40 = arith.constant 0 : index
    %c0_41 = arith.constant 0 : index
    %c0_42 = arith.constant 0 : index
    %c0_43 = arith.constant 0 : index
    %110 = vector.load %arg3[%c1_38, %c0_39, %c0_40, %c0_41, %c0_42, %c0_43] : memref<3x2x8x9x1x128xf32, #tpu.memory_space<vmem>>, vector<1x1x8x9x1x128xf32>
    %111 = vector.shape_cast %110 : vector<1x1x8x9x1x128xf32> to vector<8x9x1x128xf32>
    %c1_44 = arith.constant 1 : index
    %c1_45 = arith.constant 1 : index
    %c0_46 = arith.constant 0 : index
    %c0_47 = arith.constant 0 : index
    %c0_48 = arith.constant 0 : index
    %c0_49 = arith.constant 0 : index
    %112 = vector.load %arg3[%c1_44, %c1_45, %c0_46, %c0_47, %c0_48, %c0_49] : memref<3x2x8x9x1x128xf32, #tpu.memory_space<vmem>>, vector<1x1x8x9x1x128xf32>
    %113 = vector.shape_cast %112 : vector<1x1x8x9x1x128xf32> to vector<8x9x1x128xf32>
    %114 = vector.shape_cast %109 : vector<8x9x4x128xf32> to vector<2x2x2x9x4x128xf32>
    %115 = vector.shape_cast %111 : vector<8x9x1x128xf32> to vector<2x2x2x9x1x128xf32>
    %116 = vector.shape_cast %113 : vector<8x9x1x128xf32> to vector<2x2x2x9x1x128xf32>
    %117 = vector.extract_strided_slice %114 {offsets = [0, 0, 0, 0, 0, 0], sizes = [2, 1, 2, 9, 4, 128], strides = [1, 1, 1, 1, 1, 1]} : vector<2x2x2x9x4x128xf32> to vector<2x1x2x9x4x128xf32>
    %118 = vector.shape_cast %117 : vector<2x1x2x9x4x128xf32> to vector<2x2x9x4x128xf32>
    %119 = vector.extract_strided_slice %114 {offsets = [0, 1, 0, 0, 0, 0], sizes = [2, 1, 2, 9, 4, 128], strides = [1, 1, 1, 1, 1, 1]} : vector<2x2x2x9x4x128xf32> to vector<2x1x2x9x4x128xf32>
    %120 = vector.shape_cast %119 : vector<2x1x2x9x4x128xf32> to vector<2x2x9x4x128xf32>
    %121 = vector.extract_strided_slice %115 {offsets = [0, 0, 0, 0, 0, 0], sizes = [2, 1, 2, 9, 1, 128], strides = [1, 1, 1, 1, 1, 1]} : vector<2x2x2x9x1x128xf32> to vector<2x1x2x9x1x128xf32>
    %122 = vector.shape_cast %121 : vector<2x1x2x9x1x128xf32> to vector<2x2x9x1x128xf32>
    %123 = vector.broadcast %122 : vector<2x2x9x1x128xf32> to vector<2x2x9x4x128xf32>
    %124 = arith.mulf %123, %118 : vector<2x2x9x4x128xf32>
    %125 = vector.extract_strided_slice %116 {offsets = [0, 0, 0, 0, 0, 0], sizes = [2, 1, 2, 9, 1, 128], strides = [1, 1, 1, 1, 1, 1]} : vector<2x2x2x9x1x128xf32> to vector<2x1x2x9x1x128xf32>
    %126 = vector.shape_cast %125 : vector<2x1x2x9x1x128xf32> to vector<2x2x9x1x128xf32>
    %127 = vector.broadcast %126 : vector<2x2x9x1x128xf32> to vector<2x2x9x4x128xf32>
    %128 = arith.mulf %127, %120 : vector<2x2x9x4x128xf32>
    %129 = arith.addf %124, %128 : vector<2x2x9x4x128xf32>
    %130 = vector.extract_strided_slice %115 {offsets = [0, 1, 0, 0, 0, 0], sizes = [2, 1, 2, 9, 1, 128], strides = [1, 1, 1, 1, 1, 1]} : vector<2x2x2x9x1x128xf32> to vector<2x1x2x9x1x128xf32>
    %131 = vector.shape_cast %130 : vector<2x1x2x9x1x128xf32> to vector<2x2x9x1x128xf32>
    %132 = vector.broadcast %131 : vector<2x2x9x1x128xf32> to vector<2x2x9x4x128xf32>
    %133 = arith.mulf %132, %120 : vector<2x2x9x4x128xf32>
    %134 = vector.extract_strided_slice %116 {offsets = [0, 1, 0, 0, 0, 0], sizes = [2, 1, 2, 9, 1, 128], strides = [1, 1, 1, 1, 1, 1]} : vector<2x2x2x9x1x128xf32> to vector<2x1x2x9x1x128xf32>
    %135 = vector.shape_cast %134 : vector<2x1x2x9x1x128xf32> to vector<2x2x9x1x128xf32>
    %136 = vector.broadcast %135 : vector<2x2x9x1x128xf32> to vector<2x2x9x4x128xf32>
    %137 = arith.mulf %136, %118 : vector<2x2x9x4x128xf32>
    %138 = arith.addf %133, %137 : vector<2x2x9x4x128xf32>
    %139 = vector.shape_cast %129 : vector<2x2x9x4x128xf32> to vector<2x1x2x9x4x128xf32>
    %140 = vector.shape_cast %138 : vector<2x2x9x4x128xf32> to vector<2x1x2x9x4x128xf32>
    %141 = tpu.concatenate %139, %140 in 1 : vector<2x1x2x9x4x128xf32>, vector<2x1x2x9x4x128xf32> -> vector<2x2x2x9x4x128xf32>
    %142 = vector.shape_cast %141 : vector<2x2x2x9x4x128xf32> to vector<8x9x4x128xf32>
    %c2 = arith.constant 2 : index
    %c0_50 = arith.constant 0 : index
    %c0_51 = arith.constant 0 : index
    %c0_52 = arith.constant 0 : index
    %c0_53 = arith.constant 0 : index
    %c0_54 = arith.constant 0 : index
    %143 = vector.load %arg3[%c2, %c0_50, %c0_51, %c0_52, %c0_53, %c0_54] : memref<3x2x8x9x1x128xf32, #tpu.memory_space<vmem>>, vector<1x1x8x9x1x128xf32>
    %144 = vector.shape_cast %143 : vector<1x1x8x9x1x128xf32> to vector<8x9x1x128xf32>
    %c2_55 = arith.constant 2 : index
    %c1_56 = arith.constant 1 : index
    %c0_57 = arith.constant 0 : index
    %c0_58 = arith.constant 0 : index
    %c0_59 = arith.constant 0 : index
    %c0_60 = arith.constant 0 : index
    %145 = vector.load %arg3[%c2_55, %c1_56, %c0_57, %c0_58, %c0_59, %c0_60] : memref<3x2x8x9x1x128xf32, #tpu.memory_space<vmem>>, vector<1x1x8x9x1x128xf32>
    %146 = vector.shape_cast %145 : vector<1x1x8x9x1x128xf32> to vector<8x9x1x128xf32>
    %147 = vector.shape_cast %142 : vector<8x9x4x128xf32> to vector<1x2x4x9x4x128xf32>
    %148 = vector.shape_cast %144 : vector<8x9x1x128xf32> to vector<1x2x4x9x1x128xf32>
    %149 = vector.shape_cast %146 : vector<8x9x1x128xf32> to vector<1x2x4x9x1x128xf32>
    %150 = vector.extract_strided_slice %147 {offsets = [0, 0, 0, 0, 0, 0], sizes = [1, 1, 4, 9, 4, 128], strides = [1, 1, 1, 1, 1, 1]} : vector<1x2x4x9x4x128xf32> to vector<1x1x4x9x4x128xf32>
    %151 = vector.shape_cast %150 : vector<1x1x4x9x4x128xf32> to vector<1x4x9x4x128xf32>
    %152 = vector.extract_strided_slice %147 {offsets = [0, 1, 0, 0, 0, 0], sizes = [1, 1, 4, 9, 4, 128], strides = [1, 1, 1, 1, 1, 1]} : vector<1x2x4x9x4x128xf32> to vector<1x1x4x9x4x128xf32>
    %153 = vector.shape_cast %152 : vector<1x1x4x9x4x128xf32> to vector<1x4x9x4x128xf32>
    %154 = vector.extract_strided_slice %148 {offsets = [0, 0, 0, 0, 0, 0], sizes = [1, 1, 4, 9, 1, 128], strides = [1, 1, 1, 1, 1, 1]} : vector<1x2x4x9x1x128xf32> to vector<1x1x4x9x1x128xf32>
    %155 = vector.shape_cast %154 : vector<1x1x4x9x1x128xf32> to vector<1x4x9x1x128xf32>
    %156 = vector.broadcast %155 : vector<1x4x9x1x128xf32> to vector<1x4x9x4x128xf32>
    %157 = arith.mulf %156, %151 : vector<1x4x9x4x128xf32>
    %158 = vector.extract_strided_slice %149 {offsets = [0, 0, 0, 0, 0, 0], sizes = [1, 1, 4, 9, 1, 128], strides = [1, 1, 1, 1, 1, 1]} : vector<1x2x4x9x1x128xf32> to vector<1x1x4x9x1x128xf32>
    %159 = vector.shape_cast %158 : vector<1x1x4x9x1x128xf32> to vector<1x4x9x1x128xf32>
    %160 = vector.broadcast %159 : vector<1x4x9x1x128xf32> to vector<1x4x9x4x128xf32>
    %161 = arith.mulf %160, %153 : vector<1x4x9x4x128xf32>
    %162 = arith.addf %157, %161 : vector<1x4x9x4x128xf32>
    %163 = vector.extract_strided_slice %148 {offsets = [0, 1, 0, 0, 0, 0], sizes = [1, 1, 4, 9, 1, 128], strides = [1, 1, 1, 1, 1, 1]} : vector<1x2x4x9x1x128xf32> to vector<1x1x4x9x1x128xf32>
    %164 = vector.shape_cast %163 : vector<1x1x4x9x1x128xf32> to vector<1x4x9x1x128xf32>
    %165 = vector.broadcast %164 : vector<1x4x9x1x128xf32> to vector<1x4x9x4x128xf32>
    %166 = arith.mulf %165, %153 : vector<1x4x9x4x128xf32>
    %167 = vector.extract_strided_slice %149 {offsets = [0, 1, 0, 0, 0, 0], sizes = [1, 1, 4, 9, 1, 128], strides = [1, 1, 1, 1, 1, 1]} : vector<1x2x4x9x1x128xf32> to vector<1x1x4x9x1x128xf32>
    %168 = vector.shape_cast %167 : vector<1x1x4x9x1x128xf32> to vector<1x4x9x1x128xf32>
    %169 = vector.broadcast %168 : vector<1x4x9x1x128xf32> to vector<1x4x9x4x128xf32>
    %170 = arith.mulf %169, %151 : vector<1x4x9x4x128xf32>
    %171 = arith.addf %166, %170 : vector<1x4x9x4x128xf32>
    %172 = vector.shape_cast %162 : vector<1x4x9x4x128xf32> to vector<1x1x4x9x4x128xf32>
    %173 = vector.shape_cast %171 : vector<1x4x9x4x128xf32> to vector<1x1x4x9x4x128xf32>
    %174 = tpu.concatenate %172, %173 in 1 : vector<1x1x4x9x4x128xf32>, vector<1x1x4x9x4x128xf32> -> vector<1x2x4x9x4x128xf32>
    %175 = vector.shape_cast %174 : vector<1x2x4x9x4x128xf32> to vector<8x9x4x128xf32>
    %176 = vector.extract_strided_slice %175 {offsets = [0, 0, 0, 0], sizes = [8, 1, 4, 128], strides = [1, 1, 1, 1]} : vector<8x9x4x128xf32> to vector<8x1x4x128xf32>
    %177 = vector.shape_cast %176 : vector<8x1x4x128xf32> to vector<8x4x128xf32>
    %178 = vector.extract_strided_slice %175 {offsets = [0, 1, 0, 0], sizes = [8, 1, 4, 128], strides = [1, 1, 1, 1]} : vector<8x9x4x128xf32> to vector<8x1x4x128xf32>
    %179 = vector.shape_cast %178 : vector<8x1x4x128xf32> to vector<8x4x128xf32>
    %180 = arith.addf %177, %179 : vector<8x4x128xf32>
    %181 = vector.extract_strided_slice %175 {offsets = [0, 2, 0, 0], sizes = [8, 1, 4, 128], strides = [1, 1, 1, 1]} : vector<8x9x4x128xf32> to vector<8x1x4x128xf32>
    %182 = vector.shape_cast %181 : vector<8x1x4x128xf32> to vector<8x4x128xf32>
    %183 = arith.addf %180, %182 : vector<8x4x128xf32>
    %184 = vector.extract_strided_slice %175 {offsets = [0, 3, 0, 0], sizes = [8, 1, 4, 128], strides = [1, 1, 1, 1]} : vector<8x9x4x128xf32> to vector<8x1x4x128xf32>
    %185 = vector.shape_cast %184 : vector<8x1x4x128xf32> to vector<8x4x128xf32>
    %186 = arith.addf %183, %185 : vector<8x4x128xf32>
    %187 = vector.extract_strided_slice %175 {offsets = [0, 4, 0, 0], sizes = [8, 1, 4, 128], strides = [1, 1, 1, 1]} : vector<8x9x4x128xf32> to vector<8x1x4x128xf32>
    %188 = vector.shape_cast %187 : vector<8x1x4x128xf32> to vector<8x4x128xf32>
    %189 = arith.addf %186, %188 : vector<8x4x128xf32>
    %190 = vector.extract_strided_slice %175 {offsets = [0, 5, 0, 0], sizes = [8, 1, 4, 128], strides = [1, 1, 1, 1]} : vector<8x9x4x128xf32> to vector<8x1x4x128xf32>
    %191 = vector.shape_cast %190 : vector<8x1x4x128xf32> to vector<8x4x128xf32>
    %192 = arith.addf %189, %191 : vector<8x4x128xf32>
    %193 = vector.extract_strided_slice %175 {offsets = [0, 6, 0, 0], sizes = [8, 1, 4, 128], strides = [1, 1, 1, 1]} : vector<8x9x4x128xf32> to vector<8x1x4x128xf32>
    %194 = vector.shape_cast %193 : vector<8x1x4x128xf32> to vector<8x4x128xf32>
    %195 = arith.addf %192, %194 : vector<8x4x128xf32>
    %196 = vector.extract_strided_slice %175 {offsets = [0, 7, 0, 0], sizes = [8, 1, 4, 128], strides = [1, 1, 1, 1]} : vector<8x9x4x128xf32> to vector<8x1x4x128xf32>
    %197 = vector.shape_cast %196 : vector<8x1x4x128xf32> to vector<8x4x128xf32>
    %198 = arith.addf %195, %197 : vector<8x4x128xf32>
    %199 = vector.extract_strided_slice %175 {offsets = [0, 8, 0, 0], sizes = [8, 1, 4, 128], strides = [1, 1, 1, 1]} : vector<8x9x4x128xf32> to vector<8x1x4x128xf32>
    %200 = vector.shape_cast %199 : vector<8x1x4x128xf32> to vector<8x4x128xf32>
    %201 = arith.addf %198, %200 : vector<8x4x128xf32>
    %cst = arith.constant 0.111111112 : f32
    %202 = vector.broadcast %cst : f32 to vector<8x4x128xf32>
    %203 = arith.mulf %201, %202 : vector<8x4x128xf32>
    %c0_61 = arith.constant 0 : index
    %c0_62 = arith.constant 0 : index
    %c0_63 = arith.constant 0 : index
    %204 = vector.load %arg4[%c0_61, %c0_62, %c0_63] : memref<8x1x128xf32, #tpu.memory_space<vmem>>, vector<8x1x128xf32>
    %205 = vector.broadcast %204 : vector<8x1x128xf32> to vector<8x4x128xf32>
    %206 = arith.addf %203, %205 : vector<8x4x128xf32>
    %c0_64 = arith.constant 0 : index
    %c0_65 = arith.constant 0 : index
    %c0_66 = arith.constant 0 : index
    %207 = vector.load %arg5[%c0_64, %c0_65, %c0_66] : memref<8x4x128xf32, #tpu.memory_space<vmem>>, vector<8x4x128xf32>
    tpu.vector_store %arg5[%c0_64, %c0_65, %c0_66], %206 {strides = array<i32>} : memref<8x4x128xf32, #tpu.memory_space<vmem>>, vector<8x4x128xf32>,
    return
  }
  func.func @transform_0(%arg0: i32) -> (i32, i32, i32, i32) {
    %c0_i32 = arith.constant 0 : i32
    %c0_i32_0 = arith.constant 0 : i32
    %c0_i32_1 = arith.constant 0 : i32
    %c0_i32_2 = arith.constant 0 : i32
    return %c0_i32, %c0_i32_0, %arg0, %c0_i32_1 : i32, i32, i32, i32
  }
  func.func @transform_1(%arg0: i32) -> (i32, i32, i32, i32, i32, i32) {
    %c0_i32 = arith.constant 0 : i32
    %c0_i32_0 = arith.constant 0 : i32
    %c0_i32_1 = arith.constant 0 : i32
    %c0_i32_2 = arith.constant 0 : i32
    %c0_i32_3 = arith.constant 0 : i32
    %c0_i32_4 = arith.constant 0 : i32
    %c0_i32_5 = arith.constant 0 : i32
    return %c0_i32, %c0_i32_0, %c0_i32_1, %c0_i32_2, %c0_i32_3, %c0_i32_4 : i32, i32, i32, i32, i32, i32
  }
  func.func @transform_2(%arg0: i32) -> (i32, i32, i32, i32, i32, i32) {
    %c0_i32 = arith.constant 0 : i32
    %c0_i32_0 = arith.constant 0 : i32
    %c0_i32_1 = arith.constant 0 : i32
    %c0_i32_2 = arith.constant 0 : i32
    %c0_i32_3 = arith.constant 0 : i32
    %c0_i32_4 = arith.constant 0 : i32
    %c0_i32_5 = arith.constant 0 : i32
    return %c0_i32, %c0_i32_0, %c0_i32_1, %c0_i32_2, %c0_i32_3, %c0_i32_4 : i32, i32, i32, i32, i32, i32
  }
  func.func @transform_3(%arg0: i32) -> (i32, i32, i32) {
    %c0_i32 = arith.constant 0 : i32
    %c0_i32_0 = arith.constant 0 : i32
    %c0_i32_1 = arith.constant 0 : i32
    %c0_i32_2 = arith.constant 0 : i32
    return %c0_i32, %c0_i32_0, %c0_i32_1 : i32, i32, i32
  }
  func.func @transform_4(%arg0: i32) -> (i32, i32, i32) {
    %c0_i32 = arith.constant 0 : i32
    %c0_i32_0 = arith.constant 0 : i32
    %c0_i32_1 = arith.constant 0 : i32
    return %c0_i32, %arg0, %c0_i32_0 : i32, i32, i32
  }
}

</mosaic_0001>

<llo_original>
// kernel: _lambda_.1
$region0: #{_lambda_.1}
  #allocation0 [shape = 'u32[]', space=smem, size = 0x4, offset = 0x4, fixed_abs, tag = 'smem constant byte address 0x4 - core index']
  #allocation1 [shape = 'u32[144,128]{1,0:T(1,128)}', space=vmem, size = 0x12000, scoped, tag = 'internal scratch']
  %s0 = inlined_call_operand.vmem [shape: f32[4,9,4,128], index: 0, kind: input, shape index: {}]
  %s1 = inlined_call_operand.vmem [shape: f32[2,2,4,18,1,128], index: 1, kind: input, shape index: {}]
  %s2 = inlined_call_operand.vmem [shape: f32[3,2,8,9,1,128], index: 2, kind: input, shape index: {}]
  %s3 = inlined_call_operand.vmem [shape: f32[8,1,128], index: 3, kind: input, shape index: {}]
  %s4 = inlined_call_operand.vmem [shape: f32[8,4,128], index: 4, kind: output, shape index: {}]
  %s5 = sld [smem:[#allocation0]]
  $region26: #{_lambda_.1} parent=0
    _
  %s7 = ssub.s32 1, %s5
  %s8 = scalar_select 0, %s7, %s5
  // Predicated region
  $region2: #{_lambda_.1} parent=0 // pred_check
    _
  $region3: #{_lambda_.1} parent=0 // pred_check_branch
    %10 = sbr.rel (0) target = $region5
  $region4: #{_lambda_.1} parent=0 // pred_region
    _
  $region5: #{_lambda_.1} parent=0 // pred_fallthru
    _
  // Predicated region
  $region6: #{_lambda_.1} parent=0 // pred_check
    _
  $region7: #{_lambda_.1} parent=0 // pred_check_branch
    %12 = sbr.rel (0) target = $region9
  $region8: #{_lambda_.1} parent=0 // pred_region
    _
  $region9: #{_lambda_.1} parent=0 // pred_fallthru
    _
  // Predicated region
  $region10: #{_lambda_.1} parent=0 // pred_check
    _
  $region11: #{_lambda_.1} parent=0 // pred_check_branch
    %14 = sbr.rel (0) target = $region13
  $region12: #{_lambda_.1} parent=0 // pred_region
    _
  $region13: #{_lambda_.1} parent=0 // pred_fallthru
    _
  // Predicated region
  $region14: #{_lambda_.1} parent=0 // pred_check
    _
  $region15: #{_lambda_.1} parent=0 // pred_check_branch
    %16 = sbr.rel (0) target = $region17
  $region16: #{_lambda_.1} parent=0 // pred_region
    _
  $region17: #{_lambda_.1} parent=0 // pred_fallthru
    _
  %v17 = vld [vmem:[%s0] sm:$0xf]
  %v18 = vld [vmem:[%s0 + $0x4] sm:$0xf]
  %v19 = vld [vmem:[%s0 + $0x8] sm:$0xf]
  %v20 = vld [vmem:[%s0 + $0xc] sm:$0xf]
  %v21 = vld [vmem:[%s0 + $0x10] sm:$0xf]
  %v22 = vld [vmem:[%s0 + $0x14] sm:$0xf]
  %v23 = vld [vmem:[%s0 + $0x18] sm:$0xf]
  %v24 = vld [vmem:[%s0 + $0x1c] sm:$0xf]
  %v25 = vld [vmem:[%s0 + $0x20] sm:$0xf]
  %v26 = vld [vmem:[%s0 + $0x24] sm:$0xf]
  %v27 = vld [vmem:[%s0 + $0x28] sm:$0xf]
  %v28 = vld [vmem:[%s0 + $0x2c] sm:$0xf]
  %v29 = vld [vmem:[%s0 + $0x30] sm:$0xf]
  %v30 = vld [vmem:[%s0 + $0x34] sm:$0xf]
  %v31 = vld [vmem:[%s0 + $0x38] sm:$0xf]
  %v32 = vld [vmem:[%s0 + $0x3c] sm:$0xf]
  %v33 = vld [vmem:[%s0 + $0x40] sm:$0xf]
  %v34 = vld [vmem:[%s0 + $0x44] sm:$0xf]
  %v35 = vld [vmem:[%s0 + $0x48] sm:$0xf]
  %v36 = vld [vmem:[%s0 + $0x4c] sm:$0xf]
  %v37 = vld [vmem:[%s0 + $0x50] sm:$0xf]
  %v38 = vld [vmem:[%s0 + $0x54] sm:$0xf]
  %v39 = vld [vmem:[%s0 + $0x58] sm:$0xf]
  %v40 = vld [vmem:[%s0 + $0x5c] sm:$0xf]
  %v41 = vld [vmem:[%s0 + $0x60] sm:$0xf]
  %v42 = vld [vmem:[%s0 + $0x64] sm:$0xf]
  %v43 = vld [vmem:[%s0 + $0x68] sm:$0xf]
  %v44 = vld [vmem:[%s0 + $0x6c] sm:$0xf]
  %v45 = vld [vmem:[%s0 + $0x70] sm:$0xf]
  %v46 = vld [vmem:[%s0 + $0x74] sm:$0xf]
  %v47 = vld [vmem:[%s0 + $0x78] sm:$0xf]
  %v48 = vld [vmem:[%s0 + $0x7c] sm:$0xf]
  %v49 = vld [vmem:[%s0 + $0x80] sm:$0xf]
  %v50 = vld [vmem:[%s0 + $0x84] sm:$0xf]
  %v51 = vld [vmem:[%s0 + $0x88] sm:$0xf]
  %v52 = vld [vmem:[%s0 + $0x8c] sm:$0xf]
  %v53 = vld [vmem:[%s1] sm:$0x1]
  %v54 = vld [vmem:[%s1 + $0x1] sm:$0x1]
  %v55 = vld [vmem:[%s1 + $0x2] sm:$0x1]
  %v56 = vld [vmem:[%s1 + $0x3] sm:$0x1]
  %v57 = vld [vmem:[%s1 + $0x4] sm:$0x1]
  %v58 = vld [vmem:[%s1 + $0x5] sm:$0x1]
  %v59 = vld [vmem:[%s1 + $0x6] sm:$0x1]
  %v60 = vld [vmem:[%s1 + $0x7] sm:$0x1]
  %v61 = vld [vmem:[%s1 + $0x8] sm:$0x1]
  %v62 = vld [vmem:[%s1 + $0x9] sm:$0x1]
  %v63 = vld [vmem:[%s1 + $0xa] sm:$0x1]
  %v64 = vld [vmem:[%s1 + $0xb] sm:$0x1]
  %v65 = vld [vmem:[%s1 + $0xc] sm:$0x1]
  %v66 = vld [vmem:[%s1 + $0xd] sm:$0x1]
  %v67 = vld [vmem:[%s1 + $0xe] sm:$0x1]
  %v68 = vld [vmem:[%s1 + $0xf] sm:$0x1]
  %v69 = vld [vmem:[%s1 + $0x10] sm:$0x1]
  %v70 = vld [vmem:[%s1 + $0x11] sm:$0x1]
  %v71 = vld [vmem:[%s1 + $0x12] sm:$0x1]
  %v72 = vld [vmem:[%s1 + $0x13] sm:$0x1]
  %v73 = vld [vmem:[%s1 + $0x14] sm:$0x1]
  %v74 = vld [vmem:[%s1 + $0x15] sm:$0x1]
  %v75 = vld [vmem:[%s1 + $0x16] sm:$0x1]
  %v76 = vld [vmem:[%s1 + $0x17] sm:$0x1]
  %v77 = vld [vmem:[%s1 + $0x18] sm:$0x1]
  %v78 = vld [vmem:[%s1 + $0x19] sm:$0x1]
  %v79 = vld [vmem:[%s1 + $0x1a] sm:$0x1]
  %v80 = vld [vmem:[%s1 + $0x1b] sm:$0x1]
  %v81 = vld [vmem:[%s1 + $0x1c] sm:$0x1]
  %v82 = vld [vmem:[%s1 + $0x1d] sm:$0x1]
  %v83 = vld [vmem:[%s1 + $0x1e] sm:$0x1]
  %v84 = vld [vmem:[%s1 + $0x1f] sm:$0x1]
  %v85 = vld [vmem:[%s1 + $0x20] sm:$0x1]
  %v86 = vld [vmem:[%s1 + $0x21] sm:$0x1]
  %v87 = vld [vmem:[%s1 + $0x22] sm:$0x1]
  %v88 = vld [vmem:[%s1 + $0x23] sm:$0x1]
  %v89 = vld [vmem:[%s1 + $0x24] sm:$0x1]
  %v90 = vld [vmem:[%s1 + $0x25] sm:$0x1]
  %v91 = vld [vmem:[%s1 + $0x26] sm:$0x1]
  %v92 = vld [vmem:[%s1 + $0x27] sm:$0x1]
  %v93 = vld [vmem:[%s1 + $0x28] sm:$0x1]
  %v94 = vld [vmem:[%s1 + $0x29] sm:$0x1]
  %v95 = vld [vmem:[%s1 + $0x2a] sm:$0x1]
  %v96 = vld [vmem:[%s1 + $0x2b] sm:$0x1]
  %v97 = vld [vmem:[%s1 + $0x2c] sm:$0x1]
  %v98 = vld [vmem:[%s1 + $0x2d] sm:$0x1]
  %v99 = vld [vmem:[%s1 + $0x2e] sm:$0x1]
  %v100 = vld [vmem:[%s1 + $0x2f] sm:$0x1]
  %v101 = vld [vmem:[%s1 + $0x30] sm:$0x1]
  %v102 = vld [vmem:[%s1 + $0x31] sm:$0x1]
  %v103 = vld [vmem:[%s1 + $0x32] sm:$0x1]
  %v104 = vld [vmem:[%s1 + $0x33] sm:$0x1]
  %v105 = vld [vmem:[%s1 + $0x34] sm:$0x1]
  %v106 = vld [vmem:[%s1 + $0x35] sm:$0x1]
  %v107 = vld [vmem:[%s1 + $0x36] sm:$0x1]
  %v108 = vld [vmem:[%s1 + $0x37] sm:$0x1]
  %v109 = vld [vmem:[%s1 + $0x38] sm:$0x1]
  %v110 = vld [vmem:[%s1 + $0x39] sm:$0x1]
  %v111 = vld [vmem:[%s1 + $0x3a] sm:$0x1]
  %v112 = vld [vmem:[%s1 + $0x3b] sm:$0x1]
  %v113 = vld [vmem:[%s1 + $0x3c] sm:$0x1]
  %v114 = vld [vmem:[%s1 + $0x3d] sm:$0x1]
  %v115 = vld [vmem:[%s1 + $0x3e] sm:$0x1]
  %v116 = vld [vmem:[%s1 + $0x3f] sm:$0x1]
  %v117 = vld [vmem:[%s1 + $0x40] sm:$0x1]
  %v118 = vld [vmem:[%s1 + $0x41] sm:$0x1]
  %v119 = vld [vmem:[%s1 + $0x42] sm:$0x1]
  %v120 = vld [vmem:[%s1 + $0x43] sm:$0x1]
  %v121 = vld [vmem:[%s1 + $0x44] sm:$0x1]
  %v122 = vld [vmem:[%s1 + $0x45] sm:$0x1]
  %v123 = vld [vmem:[%s1 + $0x46] sm:$0x1]
  %v124 = vld [vmem:[%s1 + $0x47] sm:$0x1]
  %s125 = scalar_lea.vmem %s1, 72
  %v126 = vld [vmem:[%s125] sm:$0x1]
  %v127 = vld [vmem:[%s125 + $0x1] sm:$0x1]
  %v128 = vld [vmem:[%s125 + $0x2] sm:$0x1]
  %v129 = vld [vmem:[%s125 + $0x3] sm:$0x1]
  %v130 = vld [vmem:[%s125 + $0x4] sm:$0x1]
  %v131 = vld [vmem:[%s125 + $0x5] sm:$0x1]
  %v132 = vld [vmem:[%s125 + $0x6] sm:$0x1]
  %v133 = vld [vmem:[%s125 + $0x7] sm:$0x1]
  %v134 = vld [vmem:[%s125 + $0x8] sm:$0x1]
  %v135 = vld [vmem:[%s125 + $0x9] sm:$0x1]
  %v136 = vld [vmem:[%s125 + $0xa] sm:$0x1]
  %v137 = vld [vmem:[%s125 + $0xb] sm:$0x1]
  %v138 = vld [vmem:[%s125 + $0xc] sm:$0x1]
  %v139 = vld [vmem:[%s125 + $0xd] sm:$0x1]
  %v140 = vld [vmem:[%s125 + $0xe] sm:$0x1]
  %v141 = vld [vmem:[%s125 + $0xf] sm:$0x1]
  %v142 = vld [vmem:[%s125 + $0x10] sm:$0x1]
  %v143 = vld [vmem:[%s125 + $0x11] sm:$0x1]
  %v144 = vld [vmem:[%s125 + $0x12] sm:$0x1]
  %v145 = vld [vmem:[%s125 + $0x13] sm:$0x1]
  %v146 = vld [vmem:[%s125 + $0x14] sm:$0x1]
  %v147 = vld [vmem:[%s125 + $0x15] sm:$0x1]
  %v148 = vld [vmem:[%s125 + $0x16] sm:$0x1]
  %v149 = vld [vmem:[%s125 + $0x17] sm:$0x1]
  %v150 = vld [vmem:[%s125 + $0x18] sm:$0x1]
  %v151 = vld [vmem:[%s125 + $0x19] sm:$0x1]
  %v152 = vld [vmem:[%s125 + $0x1a] sm:$0x1]
  %v153 = vld [vmem:[%s125 + $0x1b] sm:$0x1]
  %v154 = vld [vmem:[%s125 + $0x1c] sm:$0x1]
  %v155 = vld [vmem:[%s125 + $0x1d] sm:$0x1]
  %v156 = vld [vmem:[%s125 + $0x1e] sm:$0x1]
  %v157 = vld [vmem:[%s125 + $0x1f] sm:$0x1]
  %v158 = vld [vmem:[%s125 + $0x20] sm:$0x1]
  %v159 = vld [vmem:[%s125 + $0x21] sm:$0x1]
  %v160 = vld [vmem:[%s125 + $0x22] sm:$0x1]
  %v161 = vld [vmem:[%s125 + $0x23] sm:$0x1]
  %v162 = vld [vmem:[%s125 + $0x24] sm:$0x1]
  %v163 = vld [vmem:[%s125 + $0x25] sm:$0x1]
  %v164 = vld [vmem:[%s125 + $0x26] sm:$0x1]
  %v165 = vld [vmem:[%s125 + $0x27] sm:$0x1]
  %v166 = vld [vmem:[%s125 + $0x28] sm:$0x1]
  %v167 = vld [vmem:[%s125 + $0x29] sm:$0x1]
  %v168 = vld [vmem:[%s125 + $0x2a] sm:$0x1]
  %v169 = vld [vmem:[%s125 + $0x2b] sm:$0x1]
  %v170 = vld [vmem:[%s125 + $0x2c] sm:$0x1]
  %v171 = vld [vmem:[%s125 + $0x2d] sm:$0x1]
  %v172 = vld [vmem:[%s125 + $0x2e] sm:$0x1]
  %v173 = vld [vmem:[%s125 + $0x2f] sm:$0x1]
  %v174 = vld [vmem:[%s125 + $0x30] sm:$0x1]
  %v175 = vld [vmem:[%s125 + $0x31] sm:$0x1]
  %v176 = vld [vmem:[%s125 + $0x32] sm:$0x1]
  %v177 = vld [vmem:[%s125 + $0x33] sm:$0x1]
  %v178 = vld [vmem:[%s125 + $0x34] sm:$0x1]
  %v179 = vld [vmem:[%s125 + $0x35] sm:$0x1]
  %v180 = vld [vmem:[%s125 + $0x36] sm:$0x1]
  %v181 = vld [vmem:[%s125 + $0x37] sm:$0x1]
  %v182 = vld [vmem:[%s125 + $0x38] sm:$0x1]
  %v183 = vld [vmem:[%s125 + $0x39] sm:$0x1]
  %v184 = vld [vmem:[%s125 + $0x3a] sm:$0x1]
  %v185 = vld [vmem:[%s125 + $0x3b] sm:$0x1]
  %v186 = vld [vmem:[%s125 + $0x3c] sm:$0x1]
  %v187 = vld [vmem:[%s125 + $0x3d] sm:$0x1]
  %v188 = vld [vmem:[%s125 + $0x3e] sm:$0x1]
  %v189 = vld [vmem:[%s125 + $0x3f] sm:$0x1]
  %v190 = vld [vmem:[%s125 + $0x40] sm:$0x1]
  %v191 = vld [vmem:[%s125 + $0x41] sm:$0x1]
  %v192 = vld [vmem:[%s125 + $0x42] sm:$0x1]
  %v193 = vld [vmem:[%s125 + $0x43] sm:$0x1]
  %v194 = vld [vmem:[%s125 + $0x44] sm:$0x1]
  %v195 = vld [vmem:[%s125 + $0x45] sm:$0x1]
  %v196 = vld [vmem:[%s125 + $0x46] sm:$0x1]
  %v197 = vld [vmem:[%s125 + $0x47] sm:$0x1]
  %v234 = vlaneseq
  %v235 = vshrl.u32 %v234, 7
  %v236 = vsub.s32 0, %v235
  %v237 = vrot.slane %v53, %v236
  %v238 = vlaneseq
  %v239 = vshrl.u32 %v238, 7
  %v240 = vsub.s32 0, %v239
  %v241 = vrot.slane %v54, %v240
  %v242 = vlaneseq
  %v243 = vshrl.u32 %v242, 7
  %v244 = vsub.s32 0, %v243
  %v245 = vrot.slane %v55, %v244
  %v246 = vlaneseq
  %v247 = vshrl.u32 %v246, 7
  %v248 = vsub.s32 0, %v247
  %v249 = vrot.slane %v56, %v248
  %v250 = vlaneseq
  %v251 = vshrl.u32 %v250, 7
  %v252 = vsub.s32 0, %v251
  %v253 = vrot.slane %v57, %v252
  %v254 = vlaneseq
  %v255 = vshrl.u32 %v254, 7
  %v256 = vsub.s32 0, %v255
  %v257 = vrot.slane %v58, %v256
  %v258 = vlaneseq
  %v259 = vshrl.u32 %v258, 7
  %v260 = vsub.s32 0, %v259
  %v261 = vrot.slane %v59, %v260
  %v262 = vlaneseq
  %v263 = vshrl.u32 %v262, 7
  %v264 = vsub.s32 0, %v263
  %v265 = vrot.slane %v60, %v264
  %v266 = vlaneseq
  %v267 = vshrl.u32 %v266, 7
  %v268 = vsub.s32 0, %v267
  %v269 = vrot.slane %v61, %v268
  %v270 = vlaneseq
  %v271 = vshrl.u32 %v270, 7
  %v272 = vsub.s32 0, %v271
  %v273 = vrot.slane %v62, %v272
  %v274 = vlaneseq
  %v275 = vshrl.u32 %v274, 7
  %v276 = vsub.s32 0, %v275
  %v277 = vrot.slane %v63, %v276
  %v278 = vlaneseq
  %v279 = vshrl.u32 %v278, 7
  %v280 = vsub.s32 0, %v279
  %v281 = vrot.slane %v64, %v280
  %v282 = vlaneseq
  %v283 = vshrl.u32 %v282, 7
  %v284 = vsub.s32 0, %v283
  %v285 = vrot.slane %v65, %v284
  %v286 = vlaneseq
  %v287 = vshrl.u32 %v286, 7
  %v288 = vsub.s32 0, %v287
  %v289 = vrot.slane %v66, %v288
  %v290 = vlaneseq
  %v291 = vshrl.u32 %v290, 7
  %v292 = vsub.s32 0, %v291
  %v293 = vrot.slane %v67, %v292
  %v294 = vlaneseq
  %v295 = vshrl.u32 %v294, 7
  %v296 = vsub.s32 0, %v295
  %v297 = vrot.slane %v68, %v296
  %v298 = vlaneseq
  %v299 = vshrl.u32 %v298, 7
  %v300 = vsub.s32 0, %v299
  %v301 = vrot.slane %v69, %v300
  %v302 = vlaneseq
  %v303 = vshrl.u32 %v302, 7
  %v304 = vsub.s32 0, %v303
  %v305 = vrot.slane %v70, %v304
  %v306 = vlaneseq
  %v307 = vshrl.u32 %v306, 7
  %v308 = vsub.s32 0, %v307
  %v309 = vrot.slane %v71, %v308
  %v310 = vlaneseq
  %v311 = vshrl.u32 %v310, 7
  %v312 = vsub.s32 0, %v311
  %v313 = vrot.slane %v72, %v312
  %v314 = vlaneseq
  %v315 = vshrl.u32 %v314, 7
  %v316 = vsub.s32 0, %v315
  %v317 = vrot.slane %v73, %v316
  %v318 = vlaneseq
  %v319 = vshrl.u32 %v318, 7
  %v320 = vsub.s32 0, %v319
  %v321 = vrot.slane %v74, %v320
  %v322 = vlaneseq
  %v323 = vshrl.u32 %v322, 7
  %v324 = vsub.s32 0, %v323
  %v325 = vrot.slane %v75, %v324
  %v326 = vlaneseq
  %v327 = vshrl.u32 %v326, 7
  %v328 = vsub.s32 0, %v327
  %v329 = vrot.slane %v76, %v328
  %v330 = vlaneseq
  %v331 = vshrl.u32 %v330, 7
  %v332 = vsub.s32 0, %v331
  %v333 = vrot.slane %v77, %v332
  %v334 = vlaneseq
  %v335 = vshrl.u32 %v334, 7
  %v336 = vsub.s32 0, %v335
  %v337 = vrot.slane %v78, %v336
  %v338 = vlaneseq
  %v339 = vshrl.u32 %v338, 7
  %v340 = vsub.s32 0, %v339
  %v341 = vrot.slane %v79, %v340
  %v342 = vlaneseq
  %v343 = vshrl.u32 %v342, 7
  %v344 = vsub.s32 0, %v343
  %v345 = vrot.slane %v80, %v344
  %v346 = vlaneseq
  %v347 = vshrl.u32 %v346, 7
  %v348 = vsub.s32 0, %v347
  %v349 = vrot.slane %v81, %v348
  %v350 = vlaneseq
  %v351 = vshrl.u32 %v350, 7
  %v352 = vsub.s32 0, %v351
  %v353 = vrot.slane %v82, %v352
  %v354 = vlaneseq
  %v355 = vshrl.u32 %v354, 7
  %v356 = vsub.s32 0, %v355
  %v357 = vrot.slane %v83, %v356
  %v358 = vlaneseq
  %v359 = vshrl.u32 %v358, 7
  %v360 = vsub.s32 0, %v359
  %v361 = vrot.slane %v84, %v360
  %v362 = vlaneseq
  %v363 = vshrl.u32 %v362, 7
  %v364 = vsub.s32 0, %v363
  %v365 = vrot.slane %v85, %v364
  %v366 = vlaneseq
  %v367 = vshrl.u32 %v366, 7
  %v368 = vsub.s32 0, %v367
  %v369 = vrot.slane %v86, %v368
  %v370 = vlaneseq
  %v371 = vshrl.u32 %v370, 7
  %v372 = vsub.s32 0, %v371
  %v373 = vrot.slane %v87, %v372
  %v374 = vlaneseq
  %v375 = vshrl.u32 %v374, 7
  %v376 = vsub.s32 0, %v375
  %v377 = vrot.slane %v88, %v376
  %v414 = vmul.f32 %v237, %v17
  %v415 = vmul.f32 %v241, %v17
  %v416 = vmul.f32 %v245, %v18
  %v417 = vmul.f32 %v249, %v18
  %v418 = vmul.f32 %v253, %v19
  %v419 = vmul.f32 %v257, %v19
  %v420 = vmul.f32 %v261, %v20
  %v421 = vmul.f32 %v265, %v20
  %v422 = vmul.f32 %v269, %v21
  %v423 = vmul.f32 %v273, %v21
  %v424 = vmul.f32 %v277, %v22
  %v425 = vmul.f32 %v281, %v22
  %v426 = vmul.f32 %v285, %v23
  %v427 = vmul.f32 %v289, %v23
  %v428 = vmul.f32 %v293, %v24
  %v429 = vmul.f32 %v297, %v24
  %v430 = vmul.f32 %v301, %v25
  %v431 = vmul.f32 %v305, %v25
  %v432 = vmul.f32 %v309, %v26
  %v433 = vmul.f32 %v313, %v26
  %v434 = vmul.f32 %v317, %v27
  %v435 = vmul.f32 %v321, %v27
  %v436 = vmul.f32 %v325, %v28
  %v437 = vmul.f32 %v329, %v28
  %v438 = vmul.f32 %v333, %v29
  %v439 = vmul.f32 %v337, %v29
  %v440 = vmul.f32 %v341, %v30
  %v441 = vmul.f32 %v345, %v30
  %v442 = vmul.f32 %v349, %v31
  %v443 = vmul.f32 %v353, %v31
  %v444 = vmul.f32 %v357, %v32
  %v445 = vmul.f32 %v361, %v32
  %v446 = vmul.f32 %v365, %v33
  %v447 = vmul.f32 %v369, %v33
  %v448 = vmul.f32 %v373, %v34
  %v449 = vmul.f32 %v377, %v34
  %v486 = vlaneseq
  %v487 = vshrl.u32 %v486, 7
  %v488 = vsub.s32 0, %v487
  %v489 = vrot.slane %v126, %v488
  %v490 = vlaneseq
  %v491 = vshrl.u32 %v490, 7
  %v492 = vsub.s32 0, %v491
  %v493 = vrot.slane %v127, %v492
  %v494 = vlaneseq
  %v495 = vshrl.u32 %v494, 7
  %v496 = vsub.s32 0, %v495
  %v497 = vrot.slane %v128, %v496
  %v498 = vlaneseq
  %v499 = vshrl.u32 %v498, 7
  %v500 = vsub.s32 0, %v499
  %v501 = vrot.slane %v129, %v500
  %v502 = vlaneseq
  %v503 = vshrl.u32 %v502, 7
  %v504 = vsub.s32 0, %v503
  %v505 = vrot.slane %v130, %v504
  %v506 = vlaneseq
  %v507 = vshrl.u32 %v506, 7
  %v508 = vsub.s32 0, %v507
  %v509 = vrot.slane %v131, %v508
  %v510 = vlaneseq
  %v511 = vshrl.u32 %v510, 7
  %v512 = vsub.s32 0, %v511
  %v513 = vrot.slane %v132, %v512
  %v514 = vlaneseq
  %v515 = vshrl.u32 %v514, 7
  %v516 = vsub.s32 0, %v515
  %v517 = vrot.slane %v133, %v516
  %v518 = vlaneseq
  %v519 = vshrl.u32 %v518, 7
  %v520 = vsub.s32 0, %v519
  %v521 = vrot.slane %v134, %v520
  %v522 = vlaneseq
  %v523 = vshrl.u32 %v522, 7
  %v524 = vsub.s32 0, %v523
  %v525 = vrot.slane %v135, %v524
  %v526 = vlaneseq
  %v527 = vshrl.u32 %v526, 7
  %v528 = vsub.s32 0, %v527
  %v529 = vrot.slane %v136, %v528
  %v530 = vlaneseq
  %v531 = vshrl.u32 %v530, 7
  %v532 = vsub.s32 0, %v531
  %v533 = vrot.slane %v137, %v532
  %v534 = vlaneseq
  %v535 = vshrl.u32 %v534, 7
  %v536 = vsub.s32 0, %v535
  %v537 = vrot.slane %v138, %v536
  %v538 = vlaneseq
  %v539 = vshrl.u32 %v538, 7
  %v540 = vsub.s32 0, %v539
  %v541 = vrot.slane %v139, %v540
  %v542 = vlaneseq
  %v543 = vshrl.u32 %v542, 7
  %v544 = vsub.s32 0, %v543
  %v545 = vrot.slane %v140, %v544
  %v546 = vlaneseq
  %v547 = vshrl.u32 %v546, 7
  %v548 = vsub.s32 0, %v547
  %v549 = vrot.slane %v141, %v548
  %v550 = vlaneseq
  %v551 = vshrl.u32 %v550, 7
  %v552 = vsub.s32 0, %v551
  %v553 = vrot.slane %v142, %v552
  %v554 = vlaneseq
  %v555 = vshrl.u32 %v554, 7
  %v556 = vsub.s32 0, %v555
  %v557 = vrot.slane %v143, %v556
  %v558 = vlaneseq
  %v559 = vshrl.u32 %v558, 7
  %v560 = vsub.s32 0, %v559
  %v561 = vrot.slane %v144, %v560
  %v562 = vlaneseq
  %v563 = vshrl.u32 %v562, 7
  %v564 = vsub.s32 0, %v563
  %v565 = vrot.slane %v145, %v564
  %v566 = vlaneseq
  %v567 = vshrl.u32 %v566, 7
  %v568 = vsub.s32 0, %v567
  %v569 = vrot.slane %v146, %v568
  %v570 = vlaneseq
  %v571 = vshrl.u32 %v570, 7
  %v572 = vsub.s32 0, %v571
  %v573 = vrot.slane %v147, %v572
  %v574 = vlaneseq
  %v575 = vshrl.u32 %v574, 7
  %v576 = vsub.s32 0, %v575
  %v577 = vrot.slane %v148, %v576
  %v578 = vlaneseq
  %v579 = vshrl.u32 %v578, 7
  %v580 = vsub.s32 0, %v579
  %v581 = vrot.slane %v149, %v580
  %v582 = vlaneseq
  %v583 = vshrl.u32 %v582, 7
  %v584 = vsub.s32 0, %v583
  %v585 = vrot.slane %v150, %v584
  %v586 = vlaneseq
  %v587 = vshrl.u32 %v586, 7
  %v588 = vsub.s32 0, %v587
  %v589 = vrot.slane %v151, %v588
  %v590 = vlaneseq
  %v591 = vshrl.u32 %v590, 7
  %v592 = vsub.s32 0, %v591
  %v593 = vrot.slane %v152, %v592
  %v594 = vlaneseq
  %v595 = vshrl.u32 %v594, 7
  %v596 = vsub.s32 0, %v595
  %v597 = vrot.slane %v153, %v596
  %v598 = vlaneseq
  %v599 = vshrl.u32 %v598, 7
  %v600 = vsub.s32 0, %v599
  %v601 = vrot.slane %v154, %v600
  %v602 = vlaneseq
  %v603 = vshrl.u32 %v602, 7
  %v604 = vsub.s32 0, %v603
  %v605 = vrot.slane %v155, %v604
  %v606 = vlaneseq
  %v607 = vshrl.u32 %v606, 7
  %v608 = vsub.s32 0, %v607
  %v609 = vrot.slane %v156, %v608
  %v610 = vlaneseq
  %v611 = vshrl.u32 %v610, 7
  %v612 = vsub.s32 0, %v611
  %v613 = vrot.slane %v157, %v612
  %v614 = vlaneseq
  %v615 = vshrl.u32 %v614, 7
  %v616 = vsub.s32 0, %v615
  %v617 = vrot.slane %v158, %v616
  %v618 = vlaneseq
  %v619 = vshrl.u32 %v618, 7
  %v620 = vsub.s32 0, %v619
  %v621 = vrot.slane %v159, %v620
  %v622 = vlaneseq
  %v623 = vshrl.u32 %v622, 7
  %v624 = vsub.s32 0, %v623
  %v625 = vrot.slane %v160, %v624
  %v626 = vlaneseq
  %v627 = vshrl.u32 %v626, 7
  %v628 = vsub.s32 0, %v627
  %v629 = vrot.slane %v161, %v628
  %v666 = vmul.f32 %v489, %v35
  %v667 = vmul.f32 %v493, %v35
  %v668 = vmul.f32 %v497, %v36
  %v669 = vmul.f32 %v501, %v36
  %v670 = vmul.f32 %v505, %v37
  %v671 = vmul.f32 %v509, %v37
  %v672 = vmul.f32 %v513, %v38
  %v673 = vmul.f32 %v517, %v38
  %v674 = vmul.f32 %v521, %v39
  %v675 = vmul.f32 %v525, %v39
  %v676 = vmul.f32 %v529, %v40
  %v677 = vmul.f32 %v533, %v40
  %v678 = vmul.f32 %v537, %v41
  %v679 = vmul.f32 %v541, %v41
  %v680 = vmul.f32 %v545, %v42
  %v681 = vmul.f32 %v549, %v42
  %v682 = vmul.f32 %v553, %v43
  %v683 = vmul.f32 %v557, %v43
  %v684 = vmul.f32 %v561, %v44
  %v685 = vmul.f32 %v565, %v44
  %v686 = vmul.f32 %v569, %v45
  %v687 = vmul.f32 %v573, %v45
  %v688 = vmul.f32 %v577, %v46
  %v689 = vmul.f32 %v581, %v46
  %v690 = vmul.f32 %v585, %v47
  %v691 = vmul.f32 %v589, %v47
  %v692 = vmul.f32 %v593, %v48
  %v693 = vmul.f32 %v597, %v48
  %v694 = vmul.f32 %v601, %v49
  %v695 = vmul.f32 %v605, %v49
  %v696 = vmul.f32 %v609, %v50
  %v697 = vmul.f32 %v613, %v50
  %v698 = vmul.f32 %v617, %v51
  %v699 = vmul.f32 %v621, %v51
  %v700 = vmul.f32 %v625, %v52
  %v701 = vmul.f32 %v629, %v52
  %v702 = vadd.f32 %v414, %v666
  %v703 = vadd.f32 %v415, %v667
  %v704 = vadd.f32 %v416, %v668
  %v705 = vadd.f32 %v417, %v669
  %v706 = vadd.f32 %v418, %v670
  %v707 = vadd.f32 %v419, %v671
  %v708 = vadd.f32 %v420, %v672
  %v709 = vadd.f32 %v421, %v673
  %v710 = vadd.f32 %v422, %v674
  %v711 = vadd.f32 %v423, %v675
  %v712 = vadd.f32 %v424, %v676
  %v713 = vadd.f32 %v425, %v677
  %v714 = vadd.f32 %v426, %v678
  %v715 = vadd.f32 %v427, %v679
  %v716 = vadd.f32 %v428, %v680
  %v717 = vadd.f32 %v429, %v681
  %v718 = vadd.f32 %v430, %v682
  %v719 = vadd.f32 %v431, %v683
  %v720 = vadd.f32 %v432, %v684
  %v721 = vadd.f32 %v433, %v685
  %v722 = vadd.f32 %v434, %v686
  %v723 = vadd.f32 %v435, %v687
  %v724 = vadd.f32 %v436, %v688
  %v725 = vadd.f32 %v437, %v689
  %v726 = vadd.f32 %v438, %v690
  %v727 = vadd.f32 %v439, %v691
  %v728 = vadd.f32 %v440, %v692
  %v729 = vadd.f32 %v441, %v693
  %v730 = vadd.f32 %v442, %v694
  %v731 = vadd.f32 %v443, %v695
  %v732 = vadd.f32 %v444, %v696
  %v733 = vadd.f32 %v445, %v697
  %v734 = vadd.f32 %v446, %v698
  %v735 = vadd.f32 %v447, %v699
  %v736 = vadd.f32 %v448, %v700
  %v737 = vadd.f32 %v449, %v701
  %v774 = vlaneseq
  %v775 = vshrl.u32 %v774, 7
  %v776 = vsub.s32 0, %v775
  %v777 = vrot.slane %v89, %v776
  %v778 = vlaneseq
  %v779 = vshrl.u32 %v778, 7
  %v780 = vsub.s32 0, %v779
  %v781 = vrot.slane %v90, %v780
  %v782 = vlaneseq
  %v783 = vshrl.u32 %v782, 7
  %v784 = vsub.s32 0, %v783
  %v785 = vrot.slane %v91, %v784
  %v786 = vlaneseq
  %v787 = vshrl.u32 %v786, 7
  %v788 = vsub.s32 0, %v787
  %v789 = vrot.slane %v92, %v788
  %v790 = vlaneseq
  %v791 = vshrl.u32 %v790, 7
  %v792 = vsub.s32 0, %v791
  %v793 = vrot.slane %v93, %v792
  %v794 = vlaneseq
  %v795 = vshrl.u32 %v794, 7
  %v796 = vsub.s32 0, %v795
  %v797 = vrot.slane %v94, %v796
  %v798 = vlaneseq
  %v799 = vshrl.u32 %v798, 7
  %v800 = vsub.s32 0, %v799
  %v801 = vrot.slane %v95, %v800
  %v802 = vlaneseq
  %v803 = vshrl.u32 %v802, 7
  %v804 = vsub.s32 0, %v803
  %v805 = vrot.slane %v96, %v804
  %v806 = vlaneseq
  %v807 = vshrl.u32 %v806, 7
  %v808 = vsub.s32 0, %v807
  %v809 = vrot.slane %v97, %v808
  %v810 = vlaneseq
  %v811 = vshrl.u32 %v810, 7
  %v812 = vsub.s32 0, %v811
  %v813 = vrot.slane %v98, %v812
  %v814 = vlaneseq
  %v815 = vshrl.u32 %v814, 7
  %v816 = vsub.s32 0, %v815
  %v817 = vrot.slane %v99, %v816
  %v818 = vlaneseq
  %v819 = vshrl.u32 %v818, 7
  %v820 = vsub.s32 0, %v819
  %v821 = vrot.slane %v100, %v820
  %v822 = vlaneseq
  %v823 = vshrl.u32 %v822, 7
  %v824 = vsub.s32 0, %v823
  %v825 = vrot.slane %v101, %v824
  %v826 = vlaneseq
  %v827 = vshrl.u32 %v826, 7
  %v828 = vsub.s32 0, %v827
  %v829 = vrot.slane %v102, %v828
  %v830 = vlaneseq
  %v831 = vshrl.u32 %v830, 7
  %v832 = vsub.s32 0, %v831
  %v833 = vrot.slane %v103, %v832
  %v834 = vlaneseq
  %v835 = vshrl.u32 %v834, 7
  %v836 = vsub.s32 0, %v835
  %v837 = vrot.slane %v104, %v836
  %v838 = vlaneseq
  %v839 = vshrl.u32 %v838, 7
  %v840 = vsub.s32 0, %v839
  %v841 = vrot.slane %v105, %v840
  %v842 = vlaneseq
  %v843 = vshrl.u32 %v842, 7
  %v844 = vsub.s32 0, %v843
  %v845 = vrot.slane %v106, %v844
  %v846 = vlaneseq
  %v847 = vshrl.u32 %v846, 7
  %v848 = vsub.s32 0, %v847
  %v849 = vrot.slane %v107, %v848
  %v850 = vlaneseq
  %v851 = vshrl.u32 %v850, 7
  %v852 = vsub.s32 0, %v851
  %v853 = vrot.slane %v108, %v852
  %v854 = vlaneseq
  %v855 = vshrl.u32 %v854, 7
  %v856 = vsub.s32 0, %v855
  %v857 = vrot.slane %v109, %v856
  %v858 = vlaneseq
  %v859 = vshrl.u32 %v858, 7
  %v860 = vsub.s32 0, %v859
  %v861 = vrot.slane %v110, %v860
  %v862 = vlaneseq
  %v863 = vshrl.u32 %v862, 7
  %v864 = vsub.s32 0, %v863
  %v865 = vrot.slane %v111, %v864
  %v866 = vlaneseq
  %v867 = vshrl.u32 %v866, 7
  %v868 = vsub.s32 0, %v867
  %v869 = vrot.slane %v112, %v868
  %v870 = vlaneseq
  %v871 = vshrl.u32 %v870, 7
  %v872 = vsub.s32 0, %v871
  %v873 = vrot.slane %v113, %v872
  %v874 = vlaneseq
  %v875 = vshrl.u32 %v874, 7
  %v876 = vsub.s32 0, %v875
  %v877 = vrot.slane %v114, %v876
  %v878 = vlaneseq
  %v879 = vshrl.u32 %v878, 7
  %v880 = vsub.s32 0, %v879
  %v881 = vrot.slane %v115, %v880
  %v882 = vlaneseq
  %v883 = vshrl.u32 %v882, 7
  %v884 = vsub.s32 0, %v883
  %v885 = vrot.slane %v116, %v884
  %v886 = vlaneseq
  %v887 = vshrl.u32 %v886, 7
  %v888 = vsub.s32 0, %v887
  %v889 = vrot.slane %v117, %v888
  %v890 = vlaneseq
  %v891 = vshrl.u32 %v890, 7
  %v892 = vsub.s32 0, %v891
  %v893 = vrot.slane %v118, %v892
  %v894 = vlaneseq
  %v895 = vshrl.u32 %v894, 7
  %v896 = vsub.s32 0, %v895
  %v897 = vrot.slane %v119, %v896
  %v898 = vlaneseq
  %v899 = vshrl.u32 %v898, 7
  %v900 = vsub.s32 0, %v899
  %v901 = vrot.slane %v120, %v900
  %v902 = vlaneseq
  %v903 = vshrl.u32 %v902, 7
  %v904 = vsub.s32 0, %v903
  %v905 = vrot.slane %v121, %v904
  %v906 = vlaneseq
  %v907 = vshrl.u32 %v906, 7
  %v908 = vsub.s32 0, %v907
  %v909 = vrot.slane %v122, %v908
  %v910 = vlaneseq
  %v911 = vshrl.u32 %v910, 7
  %v912 = vsub.s32 0, %v911
  %v913 = vrot.slane %v123, %v912
  %v914 = vlaneseq
  %v915 = vshrl.u32 %v914, 7
  %v916 = vsub.s32 0, %v915
  %v917 = vrot.slane %v124, %v916
  %v954 = vmul.f32 %v777, %v35
  %v955 = vmul.f32 %v781, %v35
  %v956 = vmul.f32 %v785, %v36
  %v957 = vmul.f32 %v789, %v36
  %v958 = vmul.f32 %v793, %v37
  %v959 = vmul.f32 %v797, %v37
  %v960 = vmul.f32 %v801, %v38
  %v961 = vmul.f32 %v805, %v38
  %v962 = vmul.f32 %v809, %v39
  %v963 = vmul.f32 %v813, %v39
  %v964 = vmul.f32 %v817, %v40
  %v965 = vmul.f32 %v821, %v40
  %v966 = vmul.f32 %v825, %v41
  %v967 = vmul.f32 %v829, %v41
  %v968 = vmul.f32 %v833, %v42
  %v969 = vmul.f32 %v837, %v42
  %v970 = vmul.f32 %v841, %v43
  %v971 = vmul.f32 %v845, %v43
  %v972 = vmul.f32 %v849, %v44
  %v973 = vmul.f32 %v853, %v44
  %v974 = vmul.f32 %v857, %v45
  %v975 = vmul.f32 %v861, %v45
  %v976 = vmul.f32 %v865, %v46
  %v977 = vmul.f32 %v869, %v46
  %v978 = vmul.f32 %v873, %v47
  %v979 = vmul.f32 %v877, %v47
  %v980 = vmul.f32 %v881, %v48
  %v981 = vmul.f32 %v885, %v48
  %v982 = vmul.f32 %v889, %v49
  %v983 = vmul.f32 %v893, %v49
  %v984 = vmul.f32 %v897, %v50
  %v985 = vmul.f32 %v901, %v50
  %v986 = vmul.f32 %v905, %v51
  %v987 = vmul.f32 %v909, %v51
  %v988 = vmul.f32 %v913, %v52
  %v989 = vmul.f32 %v917, %v52
  %v1026 = vlaneseq
  %v1027 = vshrl.u32 %v1026, 7
  %v1028 = vsub.s32 0, %v1027
  %v1029 = vrot.slane %v162, %v1028
  %v1030 = vlaneseq
  %v1031 = vshrl.u32 %v1030, 7
  %v1032 = vsub.s32 0, %v1031
  %v1033 = vrot.slane %v163, %v1032
  %v1034 = vlaneseq
  %v1035 = vshrl.u32 %v1034, 7
  %v1036 = vsub.s32 0, %v1035
  %v1037 = vrot.slane %v164, %v1036
  %v1038 = vlaneseq
  %v1039 = vshrl.u32 %v1038, 7
  %v1040 = vsub.s32 0, %v1039
  %v1041 = vrot.slane %v165, %v1040
  %v1042 = vlaneseq
  %v1043 = vshrl.u32 %v1042, 7
  %v1044 = vsub.s32 0, %v1043
  %v1045 = vrot.slane %v166, %v1044
  %v1046 = vlaneseq
  %v1047 = vshrl.u32 %v1046, 7
  %v1048 = vsub.s32 0, %v1047
  %v1049 = vrot.slane %v167, %v1048
  %v1050 = vlaneseq
  %v1051 = vshrl.u32 %v1050, 7
  %v1052 = vsub.s32 0, %v1051
  %v1053 = vrot.slane %v168, %v1052
  %v1054 = vlaneseq
  %v1055 = vshrl.u32 %v1054, 7
  %v1056 = vsub.s32 0, %v1055
  %v1057 = vrot.slane %v169, %v1056
  %v1058 = vlaneseq
  %v1059 = vshrl.u32 %v1058, 7
  %v1060 = vsub.s32 0, %v1059
  %v1061 = vrot.slane %v170, %v1060
  %v1062 = vlaneseq
  %v1063 = vshrl.u32 %v1062, 7
  %v1064 = vsub.s32 0, %v1063
  %v1065 = vrot.slane %v171, %v1064
  %v1066 = vlaneseq
  %v1067 = vshrl.u32 %v1066, 7
  %v1068 = vsub.s32 0, %v1067
  %v1069 = vrot.slane %v172, %v1068
  %v1070 = vlaneseq
  %v1071 = vshrl.u32 %v1070, 7
  %v1072 = vsub.s32 0, %v1071
  %v1073 = vrot.slane %v173, %v1072
  %v1074 = vlaneseq
  %v1075 = vshrl.u32 %v1074, 7
  %v1076 = vsub.s32 0, %v1075
  %v1077 = vrot.slane %v174, %v1076
  %v1078 = vlaneseq
  %v1079 = vshrl.u32 %v1078, 7
  %v1080 = vsub.s32 0, %v1079
  %v1081 = vrot.slane %v175, %v1080
  %v1082 = vlaneseq
  %v1083 = vshrl.u32 %v1082, 7
  %v1084 = vsub.s32 0, %v1083
  %v1085 = vrot.slane %v176, %v1084
  %v1086 = vlaneseq
  %v1087 = vshrl.u32 %v1086, 7
  %v1088 = vsub.s32 0, %v1087
  %v1089 = vrot.slane %v177, %v1088
  %v1090 = vlaneseq
  %v1091 = vshrl.u32 %v1090, 7
  %v1092 = vsub.s32 0, %v1091
  %v1093 = vrot.slane %v178, %v1092
  %v1094 = vlaneseq
  %v1095 = vshrl.u32 %v1094, 7
  %v1096 = vsub.s32 0, %v1095
  %v1097 = vrot.slane %v179, %v1096
  %v1098 = vlaneseq
  %v1099 = vshrl.u32 %v1098, 7
  %v1100 = vsub.s32 0, %v1099
  %v1101 = vrot.slane %v180, %v1100
  %v1102 = vlaneseq
  %v1103 = vshrl.u32 %v1102, 7
  %v1104 = vsub.s32 0, %v1103
  %v1105 = vrot.slane %v181, %v1104
  %v1106 = vlaneseq
  %v1107 = vshrl.u32 %v1106, 7
  %v1108 = vsub.s32 0, %v1107
  %v1109 = vrot.slane %v182, %v1108
  %v1110 = vlaneseq
  %v1111 = vshrl.u32 %v1110, 7
  %v1112 = vsub.s32 0, %v1111
  %v1113 = vrot.slane %v183, %v1112
  %v1114 = vlaneseq
  %v1115 = vshrl.u32 %v1114, 7
  %v1116 = vsub.s32 0, %v1115
  %v1117 = vrot.slane %v184, %v1116
  %v1118 = vlaneseq
  %v1119 = vshrl.u32 %v1118, 7
  %v1120 = vsub.s32 0, %v1119
  %v1121 = vrot.slane %v185, %v1120
  %v1122 = vlaneseq
  %v1123 = vshrl.u32 %v1122, 7
  %v1124 = vsub.s32 0, %v1123
  %v1125 = vrot.slane %v186, %v1124
  %v1126 = vlaneseq
  %v1127 = vshrl.u32 %v1126, 7
  %v1128 = vsub.s32 0, %v1127
  %v1129 = vrot.slane %v187, %v1128
  %v1130 = vlaneseq
  %v1131 = vshrl.u32 %v1130, 7
  %v1132 = vsub.s32 0, %v1131
  %v1133 = vrot.slane %v188, %v1132
  %v1134 = vlaneseq
  %v1135 = vshrl.u32 %v1134, 7
  %v1136 = vsub.s32 0, %v1135
  %v1137 = vrot.slane %v189, %v1136
  %v1138 = vlaneseq
  %v1139 = vshrl.u32 %v1138, 7
  %v1140 = vsub.s32 0, %v1139
  %v1141 = vrot.slane %v190, %v1140
  %v1142 = vlaneseq
  %v1143 = vshrl.u32 %v1142, 7
  %v1144 = vsub.s32 0, %v1143
  %v1145 = vrot.slane %v191, %v1144
  %v1146 = vlaneseq
  %v1147 = vshrl.u32 %v1146, 7
  %v1148 = vsub.s32 0, %v1147
  %v1149 = vrot.slane %v192, %v1148
  %v1150 = vlaneseq
  %v1151 = vshrl.u32 %v1150, 7
  %v1152 = vsub.s32 0, %v1151
  %v1153 = vrot.slane %v193, %v1152
  %v1154 = vlaneseq
  %v1155 = vshrl.u32 %v1154, 7
  %v1156 = vsub.s32 0, %v1155
  %v1157 = vrot.slane %v194, %v1156
  %v1158 = vlaneseq
  %v1159 = vshrl.u32 %v1158, 7
  %v1160 = vsub.s32 0, %v1159
  %v1161 = vrot.slane %v195, %v1160
  %v1162 = vlaneseq
  %v1163 = vshrl.u32 %v1162, 7
  %v1164 = vsub.s32 0, %v1163
  %v1165 = vrot.slane %v196, %v1164
  %v1166 = vlaneseq
  %v1167 = vshrl.u32 %v1166, 7
  %v1168 = vsub.s32 0, %v1167
  %v1169 = vrot.slane %v197, %v1168
  %v1206 = vmul.f32 %v1029, %v17
  %v1207 = vmul.f32 %v1033, %v17
  %v1208 = vmul.f32 %v1037, %v18
  %v1209 = vmul.f32 %v1041, %v18
  %v1210 = vmul.f32 %v1045, %v19
  %v1211 = vmul.f32 %v1049, %v19
  %v1212 = vmul.f32 %v1053, %v20
  %v1213 = vmul.f32 %v1057, %v20
  %v1214 = vmul.f32 %v1061, %v21
  %v1215 = vmul.f32 %v1065, %v21
  %v1216 = vmul.f32 %v1069, %v22
  %v1217 = vmul.f32 %v1073, %v22
  %v1218 = vmul.f32 %v1077, %v23
  %v1219 = vmul.f32 %v1081, %v23
  %v1220 = vmul.f32 %v1085, %v24
  %v1221 = vmul.f32 %v1089, %v24
  %v1222 = vmul.f32 %v1093, %v25
  %v1223 = vmul.f32 %v1097, %v25
  %v1224 = vmul.f32 %v1101, %v26
  %v1225 = vmul.f32 %v1105, %v26
  %v1226 = vmul.f32 %v1109, %v27
  %v1227 = vmul.f32 %v1113, %v27
  %v1228 = vmul.f32 %v1117, %v28
  %v1229 = vmul.f32 %v1121, %v28
  %v1230 = vmul.f32 %v1125, %v29
  %v1231 = vmul.f32 %v1129, %v29
  %v1232 = vmul.f32 %v1133, %v30
  %v1233 = vmul.f32 %v1137, %v30
  %v1234 = vmul.f32 %v1141, %v31
  %v1235 = vmul.f32 %v1145, %v31
  %v1236 = vmul.f32 %v1149, %v32
  %v1237 = vmul.f32 %v1153, %v32
  %v1238 = vmul.f32 %v1157, %v33
  %v1239 = vmul.f32 %v1161, %v33
  %v1240 = vmul.f32 %v1165, %v34
  %v1241 = vmul.f32 %v1169, %v34
  %v1242 = vadd.f32 %v954, %v1206
  %v1243 = vadd.f32 %v955, %v1207
  %v1244 = vadd.f32 %v956, %v1208
  %v1245 = vadd.f32 %v957, %v1209
  %v1246 = vadd.f32 %v958, %v1210
  %v1247 = vadd.f32 %v959, %v1211
  %v1248 = vadd.f32 %v960, %v1212
  %v1249 = vadd.f32 %v961, %v1213
  %v1250 = vadd.f32 %v962, %v1214
  %v1251 = vadd.f32 %v963, %v1215
  %v1252 = vadd.f32 %v964, %v1216
  %v1253 = vadd.f32 %v965, %v1217
  %v1254 = vadd.f32 %v966, %v1218
  %v1255 = vadd.f32 %v967, %v1219
  %v1256 = vadd.f32 %v968, %v1220
  %v1257 = vadd.f32 %v969, %v1221
  %v1258 = vadd.f32 %v970, %v1222
  %v1259 = vadd.f32 %v971, %v1223
  %v1260 = vadd.f32 %v972, %v1224
  %v1261 = vadd.f32 %v973, %v1225
  %v1262 = vadd.f32 %v974, %v1226
  %v1263 = vadd.f32 %v975, %v1227
  %v1264 = vadd.f32 %v976, %v1228
  %v1265 = vadd.f32 %v977, %v1229
  %v1266 = vadd.f32 %v978, %v1230
  %v1267 = vadd.f32 %v979, %v1231
  %v1268 = vadd.f32 %v980, %v1232
  %v1269 = vadd.f32 %v981, %v1233
  %v1270 = vadd.f32 %v982, %v1234
  %v1271 = vadd.f32 %v983, %v1235
  %v1272 = vadd.f32 %v984, %v1236
  %v1273 = vadd.f32 %v985, %v1237
  %v1274 = vadd.f32 %v986, %v1238
  %v1275 = vadd.f32 %v987, %v1239
  %v1276 = vadd.f32 %v988, %v1240
  %v1277 = vadd.f32 %v989, %v1241
  %s1278 = scalar_lea.vmem %s1, 144
  %v1279 = vld [vmem:[%s1278] sm:$0x1]
  %v1280 = vld [vmem:[%s1278 + $0x1] sm:$0x1]
  %v1281 = vld [vmem:[%s1278 + $0x2] sm:$0x1]
  %v1282 = vld [vmem:[%s1278 + $0x3] sm:$0x1]
  %v1283 = vld [vmem:[%s1278 + $0x4] sm:$0x1]
  %v1284 = vld [vmem:[%s1278 + $0x5] sm:$0x1]
  %v1285 = vld [vmem:[%s1278 + $0x6] sm:$0x1]
  %v1286 = vld [vmem:[%s1278 + $0x7] sm:$0x1]
  %v1287 = vld [vmem:[%s1278 + $0x8] sm:$0x1]
  %v1288 = vld [vmem:[%s1278 + $0x9] sm:$0x1]
  %v1289 = vld [vmem:[%s1278 + $0xa] sm:$0x1]
  %v1290 = vld [vmem:[%s1278 + $0xb] sm:$0x1]
  %v1291 = vld [vmem:[%s1278 + $0xc] sm:$0x1]
  %v1292 = vld [vmem:[%s1278 + $0xd] sm:$0x1]
  %v1293 = vld [vmem:[%s1278 + $0xe] sm:$0x1]
  %v1294 = vld [vmem:[%s1278 + $0xf] sm:$0x1]
  %v1295 = vld [vmem:[%s1278 + $0x10] sm:$0x1]
  %v1296 = vld [vmem:[%s1278 + $0x11] sm:$0x1]
  %v1297 = vld [vmem:[%s1278 + $0x12] sm:$0x1]
  %v1298 = vld [vmem:[%s1278 + $0x13] sm:$0x1]
  %v1299 = vld [vmem:[%s1278 + $0x14] sm:$0x1]
  %v1300 = vld [vmem:[%s1278 + $0x15] sm:$0x1]
  %v1301 = vld [vmem:[%s1278 + $0x16] sm:$0x1]
  %v1302 = vld [vmem:[%s1278 + $0x17] sm:$0x1]
  %v1303 = vld [vmem:[%s1278 + $0x18] sm:$0x1]
  %v1304 = vld [vmem:[%s1278 + $0x19] sm:$0x1]
  %v1305 = vld [vmem:[%s1278 + $0x1a] sm:$0x1]
  %v1306 = vld [vmem:[%s1278 + $0x1b] sm:$0x1]
  %v1307 = vld [vmem:[%s1278 + $0x1c] sm:$0x1]
  %v1308 = vld [vmem:[%s1278 + $0x1d] sm:$0x1]
  %v1309 = vld [vmem:[%s1278 + $0x1e] sm:$0x1]
  %v1310 = vld [vmem:[%s1278 + $0x1f] sm:$0x1]
  %v1311 = vld [vmem:[%s1278 + $0x20] sm:$0x1]
  %v1312 = vld [vmem:[%s1278 + $0x21] sm:$0x1]
  %v1313 = vld [vmem:[%s1278 + $0x22] sm:$0x1]
  %v1314 = vld [vmem:[%s1278 + $0x23] sm:$0x1]
  %v1315 = vld [vmem:[%s1278 + $0x24] sm:$0x1]
  %v1316 = vld [vmem:[%s1278 + $0x25] sm:$0x1]
  %v1317 = vld [vmem:[%s1278 + $0x26] sm:$0x1]
  %v1318 = vld [vmem:[%s1278 + $0x27] sm:$0x1]
  %v1319 = vld [vmem:[%s1278 + $0x28] sm:$0x1]
  %v1320 = vld [vmem:[%s1278 + $0x29] sm:$0x1]
  %v1321 = vld [vmem:[%s1278 + $0x2a] sm:$0x1]
  %v1322 = vld [vmem:[%s1278 + $0x2b] sm:$0x1]
  %v1323 = vld [vmem:[%s1278 + $0x2c] sm:$0x1]
  %v1324 = vld [vmem:[%s1278 + $0x2d] sm:$0x1]
  %v1325 = vld [vmem:[%s1278 + $0x2e] sm:$0x1]
  %v1326 = vld [vmem:[%s1278 + $0x2f] sm:$0x1]
  %v1327 = vld [vmem:[%s1278 + $0x30] sm:$0x1]
  %v1328 = vld [vmem:[%s1278 + $0x31] sm:$0x1]
  %v1329 = vld [vmem:[%s1278 + $0x32] sm:$0x1]
  %v1330 = vld [vmem:[%s1278 + $0x33] sm:$0x1]
  %v1331 = vld [vmem:[%s1278 + $0x34] sm:$0x1]
  %v1332 = vld [vmem:[%s1278 + $0x35] sm:$0x1]
  %v1333 = vld [vmem:[%s1278 + $0x36] sm:$0x1]
  %v1334 = vld [vmem:[%s1278 + $0x37] sm:$0x1]
  %v1335 = vld [vmem:[%s1278 + $0x38] sm:$0x1]
  %v1336 = vld [vmem:[%s1278 + $0x39] sm:$0x1]
  %v1337 = vld [vmem:[%s1278 + $0x3a] sm:$0x1]
  %v1338 = vld [vmem:[%s1278 + $0x3b] sm:$0x1]
  %v1339 = vld [vmem:[%s1278 + $0x3c] sm:$0x1]
  %v1340 = vld [vmem:[%s1278 + $0x3d] sm:$0x1]
  %v1341 = vld [vmem:[%s1278 + $0x3e] sm:$0x1]
  %v1342 = vld [vmem:[%s1278 + $0x3f] sm:$0x1]
  %v1343 = vld [vmem:[%s1278 + $0x40] sm:$0x1]
  %v1344 = vld [vmem:[%s1278 + $0x41] sm:$0x1]
  %v1345 = vld [vmem:[%s1278 + $0x42] sm:$0x1]
  %v1346 = vld [vmem:[%s1278 + $0x43] sm:$0x1]
  %v1347 = vld [vmem:[%s1278 + $0x44] sm:$0x1]
  %v1348 = vld [vmem:[%s1278 + $0x45] sm:$0x1]
  %v1349 = vld [vmem:[%s1278 + $0x46] sm:$0x1]
  %v1350 = vld [vmem:[%s1278 + $0x47] sm:$0x1]
  %s1351 = scalar_lea.vmem %s1, 216
  %v1352 = vld [vmem:[%s1351] sm:$0x1]
  %v1353 = vld [vmem:[%s1351 + $0x1] sm:$0x1]
  %v1354 = vld [vmem:[%s1351 + $0x2] sm:$0x1]
  %v1355 = vld [vmem:[%s1351 + $0x3] sm:$0x1]
  %v1356 = vld [vmem:[%s1351 + $0x4] sm:$0x1]
  %v1357 = vld [vmem:[%s1351 + $0x5] sm:$0x1]
  %v1358 = vld [vmem:[%s1351 + $0x6] sm:$0x1]
  %v1359 = vld [vmem:[%s1351 + $0x7] sm:$0x1]
  %v1360 = vld [vmem:[%s1351 + $0x8] sm:$0x1]
  %v1361 = vld [vmem:[%s1351 + $0x9] sm:$0x1]
  %v1362 = vld [vmem:[%s1351 + $0xa] sm:$0x1]
  %v1363 = vld [vmem:[%s1351 + $0xb] sm:$0x1]
  %v1364 = vld [vmem:[%s1351 + $0xc] sm:$0x1]
  %v1365 = vld [vmem:[%s1351 + $0xd] sm:$0x1]
  %v1366 = vld [vmem:[%s1351 + $0xe] sm:$0x1]
  %v1367 = vld [vmem:[%s1351 + $0xf] sm:$0x1]
  %v1368 = vld [vmem:[%s1351 + $0x10] sm:$0x1]
  %v1369 = vld [vmem:[%s1351 + $0x11] sm:$0x1]
  %v1370 = vld [vmem:[%s1351 + $0x12] sm:$0x1]
  %v1371 = vld [vmem:[%s1351 + $0x13] sm:$0x1]
  %v1372 = vld [vmem:[%s1351 + $0x14] sm:$0x1]
  %v1373 = vld [vmem:[%s1351 + $0x15] sm:$0x1]
  %v1374 = vld [vmem:[%s1351 + $0x16] sm:$0x1]
  %v1375 = vld [vmem:[%s1351 + $0x17] sm:$0x1]
  %v1376 = vld [vmem:[%s1351 + $0x18] sm:$0x1]
  %v1377 = vld [vmem:[%s1351 + $0x19] sm:$0x1]
  %v1378 = vld [vmem:[%s1351 + $0x1a] sm:$0x1]
  %v1379 = vld [vmem:[%s1351 + $0x1b] sm:$0x1]
  %v1380 = vld [vmem:[%s1351 + $0x1c] sm:$0x1]
  %v1381 = vld [vmem:[%s1351 + $0x1d] sm:$0x1]
  %v1382 = vld [vmem:[%s1351 + $0x1e] sm:$0x1]
  %v1383 = vld [vmem:[%s1351 + $0x1f] sm:$0x1]
  %v1384 = vld [vmem:[%s1351 + $0x20] sm:$0x1]
  %v1385 = vld [vmem:[%s1351 + $0x21] sm:$0x1]
  %v1386 = vld [vmem:[%s1351 + $0x22] sm:$0x1]
  %v1387 = vld [vmem:[%s1351 + $0x23] sm:$0x1]
  %v1388 = vld [vmem:[%s1351 + $0x24] sm:$0x1]
  %v1389 = vld [vmem:[%s1351 + $0x25] sm:$0x1]
  %v1390 = vld [vmem:[%s1351 + $0x26] sm:$0x1]
  %v1391 = vld [vmem:[%s1351 + $0x27] sm:$0x1]
  %v1392 = vld [vmem:[%s1351 + $0x28] sm:$0x1]
  %v1393 = vld [vmem:[%s1351 + $0x29] sm:$0x1]
  %v1394 = vld [vmem:[%s1351 + $0x2a] sm:$0x1]
  %v1395 = vld [vmem:[%s1351 + $0x2b] sm:$0x1]
  %v1396 = vld [vmem:[%s1351 + $0x2c] sm:$0x1]
  %v1397 = vld [vmem:[%s1351 + $0x2d] sm:$0x1]
  %v1398 = vld [vmem:[%s1351 + $0x2e] sm:$0x1]
  %v1399 = vld [vmem:[%s1351 + $0x2f] sm:$0x1]
  %v1400 = vld [vmem:[%s1351 + $0x30] sm:$0x1]
  %v1401 = vld [vmem:[%s1351 + $0x31] sm:$0x1]
  %v1402 = vld [vmem:[%s1351 + $0x32] sm:$0x1]
  %v1403 = vld [vmem:[%s1351 + $0x33] sm:$0x1]
  %v1404 = vld [vmem:[%s1351 + $0x34] sm:$0x1]
  %v1405 = vld [vmem:[%s1351 + $0x35] sm:$0x1]
  %v1406 = vld [vmem:[%s1351 + $0x36] sm:$0x1]
  %v1407 = vld [vmem:[%s1351 + $0x37] sm:$0x1]
  %v1408 = vld [vmem:[%s1351 + $0x38] sm:$0x1]
  %v1409 = vld [vmem:[%s1351 + $0x39] sm:$0x1]
  %v1410 = vld [vmem:[%s1351 + $0x3a] sm:$0x1]
  %v1411 = vld [vmem:[%s1351 + $0x3b] sm:$0x1]
  %v1412 = vld [vmem:[%s1351 + $0x3c] sm:$0x1]
  %v1413 = vld [vmem:[%s1351 + $0x3d] sm:$0x1]
  %v1414 = vld [vmem:[%s1351 + $0x3e] sm:$0x1]
  %v1415 = vld [vmem:[%s1351 + $0x3f] sm:$0x1]
  %v1416 = vld [vmem:[%s1351 + $0x40] sm:$0x1]
  %v1417 = vld [vmem:[%s1351 + $0x41] sm:$0x1]
  %v1418 = vld [vmem:[%s1351 + $0x42] sm:$0x1]
  %v1419 = vld [vmem:[%s1351 + $0x43] sm:$0x1]
  %v1420 = vld [vmem:[%s1351 + $0x44] sm:$0x1]
  %v1421 = vld [vmem:[%s1351 + $0x45] sm:$0x1]
  %v1422 = vld [vmem:[%s1351 + $0x46] sm:$0x1]
  %v1423 = vld [vmem:[%s1351 + $0x47] sm:$0x1]
  %v1460 = vlaneseq
  %v1461 = vshrl.u32 %v1460, 7
  %v1462 = vsub.s32 0, %v1461
  %v1463 = vrot.slane %v1279, %v1462
  %v1464 = vlaneseq
  %v1465 = vshrl.u32 %v1464, 7
  %v1466 = vsub.s32 0, %v1465
  %v1467 = vrot.slane %v1280, %v1466
  %v1468 = vlaneseq
  %v1469 = vshrl.u32 %v1468, 7
  %v1470 = vsub.s32 0, %v1469
  %v1471 = vrot.slane %v1281, %v1470
  %v1472 = vlaneseq
  %v1473 = vshrl.u32 %v1472, 7
  %v1474 = vsub.s32 0, %v1473
  %v1475 = vrot.slane %v1282, %v1474
  %v1476 = vlaneseq
  %v1477 = vshrl.u32 %v1476, 7
  %v1478 = vsub.s32 0, %v1477
  %v1479 = vrot.slane %v1283, %v1478
  %v1480 = vlaneseq
  %v1481 = vshrl.u32 %v1480, 7
  %v1482 = vsub.s32 0, %v1481
  %v1483 = vrot.slane %v1284, %v1482
  %v1484 = vlaneseq
  %v1485 = vshrl.u32 %v1484, 7
  %v1486 = vsub.s32 0, %v1485
  %v1487 = vrot.slane %v1285, %v1486
  %v1488 = vlaneseq
  %v1489 = vshrl.u32 %v1488, 7
  %v1490 = vsub.s32 0, %v1489
  %v1491 = vrot.slane %v1286, %v1490
  %v1492 = vlaneseq
  %v1493 = vshrl.u32 %v1492, 7
  %v1494 = vsub.s32 0, %v1493
  %v1495 = vrot.slane %v1287, %v1494
  %v1496 = vlaneseq
  %v1497 = vshrl.u32 %v1496, 7
  %v1498 = vsub.s32 0, %v1497
  %v1499 = vrot.slane %v1288, %v1498
  %v1500 = vlaneseq
  %v1501 = vshrl.u32 %v1500, 7
  %v1502 = vsub.s32 0, %v1501
  %v1503 = vrot.slane %v1289, %v1502
  %v1504 = vlaneseq
  %v1505 = vshrl.u32 %v1504, 7
  %v1506 = vsub.s32 0, %v1505
  %v1507 = vrot.slane %v1290, %v1506
  %v1508 = vlaneseq
  %v1509 = vshrl.u32 %v1508, 7
  %v1510 = vsub.s32 0, %v1509
  %v1511 = vrot.slane %v1291, %v1510
  %v1512 = vlaneseq
  %v1513 = vshrl.u32 %v1512, 7
  %v1514 = vsub.s32 0, %v1513
  %v1515 = vrot.slane %v1292, %v1514
  %v1516 = vlaneseq
  %v1517 = vshrl.u32 %v1516, 7
  %v1518 = vsub.s32 0, %v1517
  %v1519 = vrot.slane %v1293, %v1518
  %v1520 = vlaneseq
  %v1521 = vshrl.u32 %v1520, 7
  %v1522 = vsub.s32 0, %v1521
  %v1523 = vrot.slane %v1294, %v1522
  %v1524 = vlaneseq
  %v1525 = vshrl.u32 %v1524, 7
  %v1526 = vsub.s32 0, %v1525
  %v1527 = vrot.slane %v1295, %v1526
  %v1528 = vlaneseq
  %v1529 = vshrl.u32 %v1528, 7
  %v1530 = vsub.s32 0, %v1529
  %v1531 = vrot.slane %v1296, %v1530
  %v1532 = vlaneseq
  %v1533 = vshrl.u32 %v1532, 7
  %v1534 = vsub.s32 0, %v1533
  %v1535 = vrot.slane %v1315, %v1534
  %v1536 = vlaneseq
  %v1537 = vshrl.u32 %v1536, 7
  %v1538 = vsub.s32 0, %v1537
  %v1539 = vrot.slane %v1316, %v1538
  %v1540 = vlaneseq
  %v1541 = vshrl.u32 %v1540, 7
  %v1542 = vsub.s32 0, %v1541
  %v1543 = vrot.slane %v1317, %v1542
  %v1544 = vlaneseq
  %v1545 = vshrl.u32 %v1544, 7
  %v1546 = vsub.s32 0, %v1545
  %v1547 = vrot.slane %v1318, %v1546
  %v1548 = vlaneseq
  %v1549 = vshrl.u32 %v1548, 7
  %v1550 = vsub.s32 0, %v1549
  %v1551 = vrot.slane %v1319, %v1550
  %v1552 = vlaneseq
  %v1553 = vshrl.u32 %v1552, 7
  %v1554 = vsub.s32 0, %v1553
  %v1555 = vrot.slane %v1320, %v1554
  %v1556 = vlaneseq
  %v1557 = vshrl.u32 %v1556, 7
  %v1558 = vsub.s32 0, %v1557
  %v1559 = vrot.slane %v1321, %v1558
  %v1560 = vlaneseq
  %v1561 = vshrl.u32 %v1560, 7
  %v1562 = vsub.s32 0, %v1561
  %v1563 = vrot.slane %v1322, %v1562
  %v1564 = vlaneseq
  %v1565 = vshrl.u32 %v1564, 7
  %v1566 = vsub.s32 0, %v1565
  %v1567 = vrot.slane %v1323, %v1566
  %v1568 = vlaneseq
  %v1569 = vshrl.u32 %v1568, 7
  %v1570 = vsub.s32 0, %v1569
  %v1571 = vrot.slane %v1324, %v1570
  %v1572 = vlaneseq
  %v1573 = vshrl.u32 %v1572, 7
  %v1574 = vsub.s32 0, %v1573
  %v1575 = vrot.slane %v1325, %v1574
  %v1576 = vlaneseq
  %v1577 = vshrl.u32 %v1576, 7
  %v1578 = vsub.s32 0, %v1577
  %v1579 = vrot.slane %v1326, %v1578
  %v1580 = vlaneseq
  %v1581 = vshrl.u32 %v1580, 7
  %v1582 = vsub.s32 0, %v1581
  %v1583 = vrot.slane %v1327, %v1582
  %v1584 = vlaneseq
  %v1585 = vshrl.u32 %v1584, 7
  %v1586 = vsub.s32 0, %v1585
  %v1587 = vrot.slane %v1328, %v1586
  %v1588 = vlaneseq
  %v1589 = vshrl.u32 %v1588, 7
  %v1590 = vsub.s32 0, %v1589
  %v1591 = vrot.slane %v1329, %v1590
  %v1592 = vlaneseq
  %v1593 = vshrl.u32 %v1592, 7
  %v1594 = vsub.s32 0, %v1593
  %v1595 = vrot.slane %v1330, %v1594
  %v1596 = vlaneseq
  %v1597 = vshrl.u32 %v1596, 7
  %v1598 = vsub.s32 0, %v1597
  %v1599 = vrot.slane %v1331, %v1598
  %v1600 = vlaneseq
  %v1601 = vshrl.u32 %v1600, 7
  %v1602 = vsub.s32 0, %v1601
  %v1603 = vrot.slane %v1332, %v1602
  %v1640 = vmul.f32 %v1463, %v702
  %v1641 = vmul.f32 %v1467, %v703
  %v1642 = vmul.f32 %v1471, %v704
  %v1643 = vmul.f32 %v1475, %v705
  %v1644 = vmul.f32 %v1479, %v706
  %v1645 = vmul.f32 %v1483, %v707
  %v1646 = vmul.f32 %v1487, %v708
  %v1647 = vmul.f32 %v1491, %v709
  %v1648 = vmul.f32 %v1495, %v710
  %v1649 = vmul.f32 %v1499, %v711
  %v1650 = vmul.f32 %v1503, %v712
  %v1651 = vmul.f32 %v1507, %v713
  %v1652 = vmul.f32 %v1511, %v714
  %v1653 = vmul.f32 %v1515, %v715
  %v1654 = vmul.f32 %v1519, %v716
  %v1655 = vmul.f32 %v1523, %v717
  %v1656 = vmul.f32 %v1527, %v718
  %v1657 = vmul.f32 %v1531, %v719
  %v1658 = vmul.f32 %v1535, %v1242
  %v1659 = vmul.f32 %v1539, %v1243
  %v1660 = vmul.f32 %v1543, %v1244
  %v1661 = vmul.f32 %v1547, %v1245
  %v1662 = vmul.f32 %v1551, %v1246
  %v1663 = vmul.f32 %v1555, %v1247
  %v1664 = vmul.f32 %v1559, %v1248
  %v1665 = vmul.f32 %v1563, %v1249
  %v1666 = vmul.f32 %v1567, %v1250
  %v1667 = vmul.f32 %v1571, %v1251
  %v1668 = vmul.f32 %v1575, %v1252
  %v1669 = vmul.f32 %v1579, %v1253
  %v1670 = vmul.f32 %v1583, %v1254
  %v1671 = vmul.f32 %v1587, %v1255
  %v1672 = vmul.f32 %v1591, %v1256
  %v1673 = vmul.f32 %v1595, %v1257
  %v1674 = vmul.f32 %v1599, %v1258
  %v1675 = vmul.f32 %v1603, %v1259
  %v1712 = vlaneseq
  %v1713 = vshrl.u32 %v1712, 7
  %v1714 = vsub.s32 0, %v1713
  %v1715 = vrot.slane %v1352, %v1714
  %v1716 = vlaneseq
  %v1717 = vshrl.u32 %v1716, 7
  %v1718 = vsub.s32 0, %v1717
  %v1719 = vrot.slane %v1353, %v1718
  %v1720 = vlaneseq
  %v1721 = vshrl.u32 %v1720, 7
  %v1722 = vsub.s32 0, %v1721
  %v1723 = vrot.slane %v1354, %v1722
  %v1724 = vlaneseq
  %v1725 = vshrl.u32 %v1724, 7
  %v1726 = vsub.s32 0, %v1725
  %v1727 = vrot.slane %v1355, %v1726
  %v1728 = vlaneseq
  %v1729 = vshrl.u32 %v1728, 7
  %v1730 = vsub.s32 0, %v1729
  %v1731 = vrot.slane %v1356, %v1730
  %v1732 = vlaneseq
  %v1733 = vshrl.u32 %v1732, 7
  %v1734 = vsub.s32 0, %v1733
  %v1735 = vrot.slane %v1357, %v1734
  %v1736 = vlaneseq
  %v1737 = vshrl.u32 %v1736, 7
  %v1738 = vsub.s32 0, %v1737
  %v1739 = vrot.slane %v1358, %v1738
  %v1740 = vlaneseq
  %v1741 = vshrl.u32 %v1740, 7
  %v1742 = vsub.s32 0, %v1741
  %v1743 = vrot.slane %v1359, %v1742
  %v1744 = vlaneseq
  %v1745 = vshrl.u32 %v1744, 7
  %v1746 = vsub.s32 0, %v1745
  %v1747 = vrot.slane %v1360, %v1746
  %v1748 = vlaneseq
  %v1749 = vshrl.u32 %v1748, 7
  %v1750 = vsub.s32 0, %v1749
  %v1751 = vrot.slane %v1361, %v1750
  %v1752 = vlaneseq
  %v1753 = vshrl.u32 %v1752, 7
  %v1754 = vsub.s32 0, %v1753
  %v1755 = vrot.slane %v1362, %v1754
  %v1756 = vlaneseq
  %v1757 = vshrl.u32 %v1756, 7
  %v1758 = vsub.s32 0, %v1757
  %v1759 = vrot.slane %v1363, %v1758
  %v1760 = vlaneseq
  %v1761 = vshrl.u32 %v1760, 7
  %v1762 = vsub.s32 0, %v1761
  %v1763 = vrot.slane %v1364, %v1762
  %v1764 = vlaneseq
  %v1765 = vshrl.u32 %v1764, 7
  %v1766 = vsub.s32 0, %v1765
  %v1767 = vrot.slane %v1365, %v1766
  %v1768 = vlaneseq
  %v1769 = vshrl.u32 %v1768, 7
  %v1770 = vsub.s32 0, %v1769
  %v1771 = vrot.slane %v1366, %v1770
  %v1772 = vlaneseq
  %v1773 = vshrl.u32 %v1772, 7
  %v1774 = vsub.s32 0, %v1773
  %v1775 = vrot.slane %v1367, %v1774
  %v1776 = vlaneseq
  %v1777 = vshrl.u32 %v1776, 7
  %v1778 = vsub.s32 0, %v1777
  %v1779 = vrot.slane %v1368, %v1778
  %v1780 = vlaneseq
  %v1781 = vshrl.u32 %v1780, 7
  %v1782 = vsub.s32 0, %v1781
  %v1783 = vrot.slane %v1369, %v1782
  %v1784 = vlaneseq
  %v1785 = vshrl.u32 %v1784, 7
  %v1786 = vsub.s32 0, %v1785
  %v1787 = vrot.slane %v1388, %v1786
  %v1788 = vlaneseq
  %v1789 = vshrl.u32 %v1788, 7
  %v1790 = vsub.s32 0, %v1789
  %v1791 = vrot.slane %v1389, %v1790
  %v1792 = vlaneseq
  %v1793 = vshrl.u32 %v1792, 7
  %v1794 = vsub.s32 0, %v1793
  %v1795 = vrot.slane %v1390, %v1794
  %v1796 = vlaneseq
  %v1797 = vshrl.u32 %v1796, 7
  %v1798 = vsub.s32 0, %v1797
  %v1799 = vrot.slane %v1391, %v1798
  %v1800 = vlaneseq
  %v1801 = vshrl.u32 %v1800, 7
  %v1802 = vsub.s32 0, %v1801
  %v1803 = vrot.slane %v1392, %v1802
  %v1804 = vlaneseq
  %v1805 = vshrl.u32 %v1804, 7
  %v1806 = vsub.s32 0, %v1805
  %v1807 = vrot.slane %v1393, %v1806
  %v1808 = vlaneseq
  %v1809 = vshrl.u32 %v1808, 7
  %v1810 = vsub.s32 0, %v1809
  %v1811 = vrot.slane %v1394, %v1810
  %v1812 = vlaneseq
  %v1813 = vshrl.u32 %v1812, 7
  %v1814 = vsub.s32 0, %v1813
  %v1815 = vrot.slane %v1395, %v1814
  %v1816 = vlaneseq
  %v1817 = vshrl.u32 %v1816, 7
  %v1818 = vsub.s32 0, %v1817
  %v1819 = vrot.slane %v1396, %v1818
  %v1820 = vlaneseq
  %v1821 = vshrl.u32 %v1820, 7
  %v1822 = vsub.s32 0, %v1821
  %v1823 = vrot.slane %v1397, %v1822
  %v1824 = vlaneseq
  %v1825 = vshrl.u32 %v1824, 7
  %v1826 = vsub.s32 0, %v1825
  %v1827 = vrot.slane %v1398, %v1826
  %v1828 = vlaneseq
  %v1829 = vshrl.u32 %v1828, 7
  %v1830 = vsub.s32 0, %v1829
  %v1831 = vrot.slane %v1399, %v1830
  %v1832 = vlaneseq
  %v1833 = vshrl.u32 %v1832, 7
  %v1834 = vsub.s32 0, %v1833
  %v1835 = vrot.slane %v1400, %v1834
  %v1836 = vlaneseq
  %v1837 = vshrl.u32 %v1836, 7
  %v1838 = vsub.s32 0, %v1837
  %v1839 = vrot.slane %v1401, %v1838
  %v1840 = vlaneseq
  %v1841 = vshrl.u32 %v1840, 7
  %v1842 = vsub.s32 0, %v1841
  %v1843 = vrot.slane %v1402, %v1842
  %v1844 = vlaneseq
  %v1845 = vshrl.u32 %v1844, 7
  %v1846 = vsub.s32 0, %v1845
  %v1847 = vrot.slane %v1403, %v1846
  %v1848 = vlaneseq
  %v1849 = vshrl.u32 %v1848, 7
  %v1850 = vsub.s32 0, %v1849
  %v1851 = vrot.slane %v1404, %v1850
  %v1852 = vlaneseq
  %v1853 = vshrl.u32 %v1852, 7
  %v1854 = vsub.s32 0, %v1853
  %v1855 = vrot.slane %v1405, %v1854
  %v1892 = vmul.f32 %v1715, %v720
  %v1893 = vmul.f32 %v1719, %v721
  %v1894 = vmul.f32 %v1723, %v722
  %v1895 = vmul.f32 %v1727, %v723
  %v1896 = vmul.f32 %v1731, %v724
  %v1897 = vmul.f32 %v1735, %v725
  %v1898 = vmul.f32 %v1739, %v726
  %v1899 = vmul.f32 %v1743, %v727
  %v1900 = vmul.f32 %v1747, %v728
  %v1901 = vmul.f32 %v1751, %v729
  %v1902 = vmul.f32 %v1755, %v730
  %v1903 = vmul.f32 %v1759, %v731
  %v1904 = vmul.f32 %v1763, %v732
  %v1905 = vmul.f32 %v1767, %v733
  %v1906 = vmul.f32 %v1771, %v734
  %v1907 = vmul.f32 %v1775, %v735
  %v1908 = vmul.f32 %v1779, %v736
  %v1909 = vmul.f32 %v1783, %v737
  %v1910 = vmul.f32 %v1787, %v1260
  %v1911 = vmul.f32 %v1791, %v1261
  %v1912 = vmul.f32 %v1795, %v1262
  %v1913 = vmul.f32 %v1799, %v1263
  %v1914 = vmul.f32 %v1803, %v1264
  %v1915 = vmul.f32 %v1807, %v1265
  %v1916 = vmul.f32 %v1811, %v1266
  %v1917 = vmul.f32 %v1815, %v1267
  %v1918 = vmul.f32 %v1819, %v1268
  %v1919 = vmul.f32 %v1823, %v1269
  %v1920 = vmul.f32 %v1827, %v1270
  %v1921 = vmul.f32 %v1831, %v1271
  %v1922 = vmul.f32 %v1835, %v1272
  %v1923 = vmul.f32 %v1839, %v1273
  %v1924 = vmul.f32 %v1843, %v1274
  %v1925 = vmul.f32 %v1847, %v1275
  %v1926 = vmul.f32 %v1851, %v1276
  %v1927 = vmul.f32 %v1855, %v1277
  %v1928 = vadd.f32 %v1640, %v1892
  %v1929 = vadd.f32 %v1641, %v1893
  %v1930 = vadd.f32 %v1642, %v1894
  %v1931 = vadd.f32 %v1643, %v1895
  %v1932 = vadd.f32 %v1644, %v1896
  %v1933 = vadd.f32 %v1645, %v1897
  %v1934 = vadd.f32 %v1646, %v1898
  %v1935 = vadd.f32 %v1647, %v1899
  %v1936 = vadd.f32 %v1648, %v1900
  %v1937 = vadd.f32 %v1649, %v1901
  %v1938 = vadd.f32 %v1650, %v1902
  %v1939 = vadd.f32 %v1651, %v1903
  %v1940 = vadd.f32 %v1652, %v1904
  %v1941 = vadd.f32 %v1653, %v1905
  %v1942 = vadd.f32 %v1654, %v1906
  %v1943 = vadd.f32 %v1655, %v1907
  %v1944 = vadd.f32 %v1656, %v1908
  %v1945 = vadd.f32 %v1657, %v1909
  %v1946 = vadd.f32 %v1658, %v1910
  %v1947 = vadd.f32 %v1659, %v1911
  %v1948 = vadd.f32 %v1660, %v1912
  %v1949 = vadd.f32 %v1661, %v1913
  %v1950 = vadd.f32 %v1662, %v1914
  %v1951 = vadd.f32 %v1663, %v1915
  %v1952 = vadd.f32 %v1664, %v1916
  %v1953 = vadd.f32 %v1665, %v1917
  %v1954 = vadd.f32 %v1666, %v1918
  %v1955 = vadd.f32 %v1667, %v1919
  %v1956 = vadd.f32 %v1668, %v1920
  %v1957 = vadd.f32 %v1669, %v1921
  %v1958 = vadd.f32 %v1670, %v1922
  %v1959 = vadd.f32 %v1671, %v1923
  %v1960 = vadd.f32 %v1672, %v1924
  %v1961 = vadd.f32 %v1673, %v1925
  %v1962 = vadd.f32 %v1674, %v1926
  %v1963 = vadd.f32 %v1675, %v1927
  %v2000 = vlaneseq
  %v2001 = vshrl.u32 %v2000, 7
  %v2002 = vsub.s32 0, %v2001
  %v2003 = vrot.slane %v1297, %v2002
  %v2004 = vlaneseq
  %v2005 = vshrl.u32 %v2004, 7
  %v2006 = vsub.s32 0, %v2005
  %v2007 = vrot.slane %v1298, %v2006
  %v2008 = vlaneseq
  %v2009 = vshrl.u32 %v2008, 7
  %v2010 = vsub.s32 0, %v2009
  %v2011 = vrot.slane %v1299, %v2010
  %v2012 = vlaneseq
  %v2013 = vshrl.u32 %v2012, 7
  %v2014 = vsub.s32 0, %v2013
  %v2015 = vrot.slane %v1300, %v2014
  %v2016 = vlaneseq
  %v2017 = vshrl.u32 %v2016, 7
  %v2018 = vsub.s32 0, %v2017
  %v2019 = vrot.slane %v1301, %v2018
  %v2020 = vlaneseq
  %v2021 = vshrl.u32 %v2020, 7
  %v2022 = vsub.s32 0, %v2021
  %v2023 = vrot.slane %v1302, %v2022
  %v2024 = vlaneseq
  %v2025 = vshrl.u32 %v2024, 7
  %v2026 = vsub.s32 0, %v2025
  %v2027 = vrot.slane %v1303, %v2026
  %v2028 = vlaneseq
  %v2029 = vshrl.u32 %v2028, 7
  %v2030 = vsub.s32 0, %v2029
  %v2031 = vrot.slane %v1304, %v2030
  %v2032 = vlaneseq
  %v2033 = vshrl.u32 %v2032, 7
  %v2034 = vsub.s32 0, %v2033
  %v2035 = vrot.slane %v1305, %v2034
  %v2036 = vlaneseq
  %v2037 = vshrl.u32 %v2036, 7
  %v2038 = vsub.s32 0, %v2037
  %v2039 = vrot.slane %v1306, %v2038
  %v2040 = vlaneseq
  %v2041 = vshrl.u32 %v2040, 7
  %v2042 = vsub.s32 0, %v2041
  %v2043 = vrot.slane %v1307, %v2042
  %v2044 = vlaneseq
  %v2045 = vshrl.u32 %v2044, 7
  %v2046 = vsub.s32 0, %v2045
  %v2047 = vrot.slane %v1308, %v2046
  %v2048 = vlaneseq
  %v2049 = vshrl.u32 %v2048, 7
  %v2050 = vsub.s32 0, %v2049
  %v2051 = vrot.slane %v1309, %v2050
  %v2052 = vlaneseq
  %v2053 = vshrl.u32 %v2052, 7
  %v2054 = vsub.s32 0, %v2053
  %v2055 = vrot.slane %v1310, %v2054
  %v2056 = vlaneseq
  %v2057 = vshrl.u32 %v2056, 7
  %v2058 = vsub.s32 0, %v2057
  %v2059 = vrot.slane %v1311, %v2058
  %v2060 = vlaneseq
  %v2061 = vshrl.u32 %v2060, 7
  %v2062 = vsub.s32 0, %v2061
  %v2063 = vrot.slane %v1312, %v2062
  %v2064 = vlaneseq
  %v2065 = vshrl.u32 %v2064, 7
  %v2066 = vsub.s32 0, %v2065
  %v2067 = vrot.slane %v1313, %v2066
  %v2068 = vlaneseq
  %v2069 = vshrl.u32 %v2068, 7
  %v2070 = vsub.s32 0, %v2069
  %v2071 = vrot.slane %v1314, %v2070
  %v2072 = vlaneseq
  %v2073 = vshrl.u32 %v2072, 7
  %v2074 = vsub.s32 0, %v2073
  %v2075 = vrot.slane %v1333, %v2074
  %v2076 = vlaneseq
  %v2077 = vshrl.u32 %v2076, 7
  %v2078 = vsub.s32 0, %v2077
  %v2079 = vrot.slane %v1334, %v2078
  %v2080 = vlaneseq
  %v2081 = vshrl.u32 %v2080, 7
  %v2082 = vsub.s32 0, %v2081
  %v2083 = vrot.slane %v1335, %v2082
  %v2084 = vlaneseq
  %v2085 = vshrl.u32 %v2084, 7
  %v2086 = vsub.s32 0, %v2085
  %v2087 = vrot.slane %v1336, %v2086
  %v2088 = vlaneseq
  %v2089 = vshrl.u32 %v2088, 7
  %v2090 = vsub.s32 0, %v2089
  %v2091 = vrot.slane %v1337, %v2090
  %v2092 = vlaneseq
  %v2093 = vshrl.u32 %v2092, 7
  %v2094 = vsub.s32 0, %v2093
  %v2095 = vrot.slane %v1338, %v2094
  %v2096 = vlaneseq
  %v2097 = vshrl.u32 %v2096, 7
  %v2098 = vsub.s32 0, %v2097
  %v2099 = vrot.slane %v1339, %v2098
  %v2100 = vlaneseq
  %v2101 = vshrl.u32 %v2100, 7
  %v2102 = vsub.s32 0, %v2101
  %v2103 = vrot.slane %v1340, %v2102
  %v2104 = vlaneseq
  %v2105 = vshrl.u32 %v2104, 7
  %v2106 = vsub.s32 0, %v2105
  %v2107 = vrot.slane %v1341, %v2106
  %v2108 = vlaneseq
  %v2109 = vshrl.u32 %v2108, 7
  %v2110 = vsub.s32 0, %v2109
  %v2111 = vrot.slane %v1342, %v2110
  %v2112 = vlaneseq
  %v2113 = vshrl.u32 %v2112, 7
  %v2114 = vsub.s32 0, %v2113
  %v2115 = vrot.slane %v1343, %v2114
  %v2116 = vlaneseq
  %v2117 = vshrl.u32 %v2116, 7
  %v2118 = vsub.s32 0, %v2117
  %v2119 = vrot.slane %v1344, %v2118
  %v2120 = vlaneseq
  %v2121 = vshrl.u32 %v2120, 7
  %v2122 = vsub.s32 0, %v2121
  %v2123 = vrot.slane %v1345, %v2122
  %v2124 = vlaneseq
  %v2125 = vshrl.u32 %v2124, 7
  %v2126 = vsub.s32 0, %v2125
  %v2127 = vrot.slane %v1346, %v2126
  %v2128 = vlaneseq
  %v2129 = vshrl.u32 %v2128, 7
  %v2130 = vsub.s32 0, %v2129
  %v2131 = vrot.slane %v1347, %v2130
  %v2132 = vlaneseq
  %v2133 = vshrl.u32 %v2132, 7
  %v2134 = vsub.s32 0, %v2133
  %v2135 = vrot.slane %v1348, %v2134
  %v2136 = vlaneseq
  %v2137 = vshrl.u32 %v2136, 7
  %v2138 = vsub.s32 0, %v2137
  %v2139 = vrot.slane %v1349, %v2138
  %v2140 = vlaneseq
  %v2141 = vshrl.u32 %v2140, 7
  %v2142 = vsub.s32 0, %v2141
  %v2143 = vrot.slane %v1350, %v2142
  %v2180 = vmul.f32 %v2003, %v720
  %v2181 = vmul.f32 %v2007, %v721
  %v2182 = vmul.f32 %v2011, %v722
  %v2183 = vmul.f32 %v2015, %v723
  %v2184 = vmul.f32 %v2019, %v724
  %v2185 = vmul.f32 %v2023, %v725
  %v2186 = vmul.f32 %v2027, %v726
  %v2187 = vmul.f32 %v2031, %v727
  %v2188 = vmul.f32 %v2035, %v728
  %v2189 = vmul.f32 %v2039, %v729
  %v2190 = vmul.f32 %v2043, %v730
  %v2191 = vmul.f32 %v2047, %v731
  %v2192 = vmul.f32 %v2051, %v732
  %v2193 = vmul.f32 %v2055, %v733
  %v2194 = vmul.f32 %v2059, %v734
  %v2195 = vmul.f32 %v2063, %v735
  %v2196 = vmul.f32 %v2067, %v736
  %v2197 = vmul.f32 %v2071, %v737
  %v2198 = vmul.f32 %v2075, %v1260
  %v2199 = vmul.f32 %v2079, %v1261
  %v2200 = vmul.f32 %v2083, %v1262
  %v2201 = vmul.f32 %v2087, %v1263
  %v2202 = vmul.f32 %v2091, %v1264
  %v2203 = vmul.f32 %v2095, %v1265
  %v2204 = vmul.f32 %v2099, %v1266
  %v2205 = vmul.f32 %v2103, %v1267
  %v2206 = vmul.f32 %v2107, %v1268
  %v2207 = vmul.f32 %v2111, %v1269
  %v2208 = vmul.f32 %v2115, %v1270
  %v2209 = vmul.f32 %v2119, %v1271
  %v2210 = vmul.f32 %v2123, %v1272
  %v2211 = vmul.f32 %v2127, %v1273
  %v2212 = vmul.f32 %v2131, %v1274
  %v2213 = vmul.f32 %v2135, %v1275
  %v2214 = vmul.f32 %v2139, %v1276
  %v2215 = vmul.f32 %v2143, %v1277
  %v2252 = vlaneseq
  %v2253 = vshrl.u32 %v2252, 7
  %v2254 = vsub.s32 0, %v2253
  %v2255 = vrot.slane %v1370, %v2254
  %v2256 = vlaneseq
  %v2257 = vshrl.u32 %v2256, 7
  %v2258 = vsub.s32 0, %v2257
  %v2259 = vrot.slane %v1371, %v2258
  %v2260 = vlaneseq
  %v2261 = vshrl.u32 %v2260, 7
  %v2262 = vsub.s32 0, %v2261
  %v2263 = vrot.slane %v1372, %v2262
  %v2264 = vlaneseq
  %v2265 = vshrl.u32 %v2264, 7
  %v2266 = vsub.s32 0, %v2265
  %v2267 = vrot.slane %v1373, %v2266
  %v2268 = vlaneseq
  %v2269 = vshrl.u32 %v2268, 7
  %v2270 = vsub.s32 0, %v2269
  %v2271 = vrot.slane %v1374, %v2270
  %v2272 = vlaneseq
  %v2273 = vshrl.u32 %v2272, 7
  %v2274 = vsub.s32 0, %v2273
  %v2275 = vrot.slane %v1375, %v2274
  %v2276 = vlaneseq
  %v2277 = vshrl.u32 %v2276, 7
  %v2278 = vsub.s32 0, %v2277
  %v2279 = vrot.slane %v1376, %v2278
  %v2280 = vlaneseq
  %v2281 = vshrl.u32 %v2280, 7
  %v2282 = vsub.s32 0, %v2281
  %v2283 = vrot.slane %v1377, %v2282
  %v2284 = vlaneseq
  %v2285 = vshrl.u32 %v2284, 7
  %v2286 = vsub.s32 0, %v2285
  %v2287 = vrot.slane %v1378, %v2286
  %v2288 = vlaneseq
  %v2289 = vshrl.u32 %v2288, 7
  %v2290 = vsub.s32 0, %v2289
  %v2291 = vrot.slane %v1379, %v2290
  %v2292 = vlaneseq
  %v2293 = vshrl.u32 %v2292, 7
  %v2294 = vsub.s32 0, %v2293
  %v2295 = vrot.slane %v1380, %v2294
  %v2296 = vlaneseq
  %v2297 = vshrl.u32 %v2296, 7
  %v2298 = vsub.s32 0, %v2297
  %v2299 = vrot.slane %v1381, %v2298
  %v2300 = vlaneseq
  %v2301 = vshrl.u32 %v2300, 7
  %v2302 = vsub.s32 0, %v2301
  %v2303 = vrot.slane %v1382, %v2302
  %v2304 = vlaneseq
  %v2305 = vshrl.u32 %v2304, 7
  %v2306 = vsub.s32 0, %v2305
  %v2307 = vrot.slane %v1383, %v2306
  %v2308 = vlaneseq
  %v2309 = vshrl.u32 %v2308, 7
  %v2310 = vsub.s32 0, %v2309
  %v2311 = vrot.slane %v1384, %v2310
  %v2312 = vlaneseq
  %v2313 = vshrl.u32 %v2312, 7
  %v2314 = vsub.s32 0, %v2313
  %v2315 = vrot.slane %v1385, %v2314
  %v2316 = vlaneseq
  %v2317 = vshrl.u32 %v2316, 7
  %v2318 = vsub.s32 0, %v2317
  %v2319 = vrot.slane %v1386, %v2318
  %v2320 = vlaneseq
  %v2321 = vshrl.u32 %v2320, 7
  %v2322 = vsub.s32 0, %v2321
  %v2323 = vrot.slane %v1387, %v2322
  %v2324 = vlaneseq
  %v2325 = vshrl.u32 %v2324, 7
  %v2326 = vsub.s32 0, %v2325
  %v2327 = vrot.slane %v1406, %v2326
  %v2328 = vlaneseq
  %v2329 = vshrl.u32 %v2328, 7
  %v2330 = vsub.s32 0, %v2329
  %v2331 = vrot.slane %v1407, %v2330
  %v2332 = vlaneseq
  %v2333 = vshrl.u32 %v2332, 7
  %v2334 = vsub.s32 0, %v2333
  %v2335 = vrot.slane %v1408, %v2334
  %v2336 = vlaneseq
  %v2337 = vshrl.u32 %v2336, 7
  %v2338 = vsub.s32 0, %v2337
  %v2339 = vrot.slane %v1409, %v2338
  %v2340 = vlaneseq
  %v2341 = vshrl.u32 %v2340, 7
  %v2342 = vsub.s32 0, %v2341
  %v2343 = vrot.slane %v1410, %v2342
  %v2344 = vlaneseq
  %v2345 = vshrl.u32 %v2344, 7
  %v2346 = vsub.s32 0, %v2345
  %v2347 = vrot.slane %v1411, %v2346
  %v2348 = vlaneseq
  %v2349 = vshrl.u32 %v2348, 7
  %v2350 = vsub.s32 0, %v2349
  %v2351 = vrot.slane %v1412, %v2350
  %v2352 = vlaneseq
  %v2353 = vshrl.u32 %v2352, 7
  %v2354 = vsub.s32 0, %v2353
  %v2355 = vrot.slane %v1413, %v2354
  %v2356 = vlaneseq
  %v2357 = vshrl.u32 %v2356, 7
  %v2358 = vsub.s32 0, %v2357
  %v2359 = vrot.slane %v1414, %v2358
  %v2360 = vlaneseq
  %v2361 = vshrl.u32 %v2360, 7
  %v2362 = vsub.s32 0, %v2361
  %v2363 = vrot.slane %v1415, %v2362
  %v2364 = vlaneseq
  %v2365 = vshrl.u32 %v2364, 7
  %v2366 = vsub.s32 0, %v2365
  %v2367 = vrot.slane %v1416, %v2366
  %v2368 = vlaneseq
  %v2369 = vshrl.u32 %v2368, 7
  %v2370 = vsub.s32 0, %v2369
  %v2371 = vrot.slane %v1417, %v2370
  %v2372 = vlaneseq
  %v2373 = vshrl.u32 %v2372, 7
  %v2374 = vsub.s32 0, %v2373
  %v2375 = vrot.slane %v1418, %v2374
  %v2376 = vlaneseq
  %v2377 = vshrl.u32 %v2376, 7
  %v2378 = vsub.s32 0, %v2377
  %v2379 = vrot.slane %v1419, %v2378
  %v2380 = vlaneseq
  %v2381 = vshrl.u32 %v2380, 7
  %v2382 = vsub.s32 0, %v2381
  %v2383 = vrot.slane %v1420, %v2382
  %v2384 = vlaneseq
  %v2385 = vshrl.u32 %v2384, 7
  %v2386 = vsub.s32 0, %v2385
  %v2387 = vrot.slane %v1421, %v2386
  %v2388 = vlaneseq
  %v2389 = vshrl.u32 %v2388, 7
  %v2390 = vsub.s32 0, %v2389
  %v2391 = vrot.slane %v1422, %v2390
  %v2392 = vlaneseq
  %v2393 = vshrl.u32 %v2392, 7
  %v2394 = vsub.s32 0, %v2393
  %v2395 = vrot.slane %v1423, %v2394
  %v2432 = vmul.f32 %v2255, %v702
  %v2433 = vmul.f32 %v2259, %v703
  %v2434 = vmul.f32 %v2263, %v704
  %v2435 = vmul.f32 %v2267, %v705
  %v2436 = vmul.f32 %v2271, %v706
  %v2437 = vmul.f32 %v2275, %v707
  %v2438 = vmul.f32 %v2279, %v708
  %v2439 = vmul.f32 %v2283, %v709
  %v2440 = vmul.f32 %v2287, %v710
  %v2441 = vmul.f32 %v2291, %v711
  %v2442 = vmul.f32 %v2295, %v712
  %v2443 = vmul.f32 %v2299, %v713
  %v2444 = vmul.f32 %v2303, %v714
  %v2445 = vmul.f32 %v2307, %v715
  %v2446 = vmul.f32 %v2311, %v716
  %v2447 = vmul.f32 %v2315, %v717
  %v2448 = vmul.f32 %v2319, %v718
  %v2449 = vmul.f32 %v2323, %v719
  %v2450 = vmul.f32 %v2327, %v1242
  %v2451 = vmul.f32 %v2331, %v1243
  %v2452 = vmul.f32 %v2335, %v1244
  %v2453 = vmul.f32 %v2339, %v1245
  %v2454 = vmul.f32 %v2343, %v1246
  %v2455 = vmul.f32 %v2347, %v1247
  %v2456 = vmul.f32 %v2351, %v1248
  %v2457 = vmul.f32 %v2355, %v1249
  %v2458 = vmul.f32 %v2359, %v1250
  %v2459 = vmul.f32 %v2363, %v1251
  %v2460 = vmul.f32 %v2367, %v1252
  %v2461 = vmul.f32 %v2371, %v1253
  %v2462 = vmul.f32 %v2375, %v1254
  %v2463 = vmul.f32 %v2379, %v1255
  %v2464 = vmul.f32 %v2383, %v1256
  %v2465 = vmul.f32 %v2387, %v1257
  %v2466 = vmul.f32 %v2391, %v1258
  %v2467 = vmul.f32 %v2395, %v1259
  %v2468 = vadd.f32 %v2180, %v2432
  %v2469 = vadd.f32 %v2181, %v2433
  %v2470 = vadd.f32 %v2182, %v2434
  %v2471 = vadd.f32 %v2183, %v2435
  %v2472 = vadd.f32 %v2184, %v2436
  %v2473 = vadd.f32 %v2185, %v2437
  %v2474 = vadd.f32 %v2186, %v2438
  %v2475 = vadd.f32 %v2187, %v2439
  %v2476 = vadd.f32 %v2188, %v2440
  %v2477 = vadd.f32 %v2189, %v2441
  %v2478 = vadd.f32 %v2190, %v2442
  %v2479 = vadd.f32 %v2191, %v2443
  %v2480 = vadd.f32 %v2192, %v2444
  %v2481 = vadd.f32 %v2193, %v2445
  %v2482 = vadd.f32 %v2194, %v2446
  %v2483 = vadd.f32 %v2195, %v2447
  %v2484 = vadd.f32 %v2196, %v2448
  %v2485 = vadd.f32 %v2197, %v2449
  %v2486 = vadd.f32 %v2198, %v2450
  %v2487 = vadd.f32 %v2199, %v2451
  %v2488 = vadd.f32 %v2200, %v2452
  %v2489 = vadd.f32 %v2201, %v2453
  %v2490 = vadd.f32 %v2202, %v2454
  %v2491 = vadd.f32 %v2203, %v2455
  %v2492 = vadd.f32 %v2204, %v2456
  %v2493 = vadd.f32 %v2205, %v2457
  %v2494 = vadd.f32 %v2206, %v2458
  %v2495 = vadd.f32 %v2207, %v2459
  %v2496 = vadd.f32 %v2208, %v2460
  %v2497 = vadd.f32 %v2209, %v2461
  %v2498 = vadd.f32 %v2210, %v2462
  %v2499 = vadd.f32 %v2211, %v2463
  %v2500 = vadd.f32 %v2212, %v2464
  %v2501 = vadd.f32 %v2213, %v2465
  %v2502 = vadd.f32 %v2214, %v2466
  %v2503 = vadd.f32 %v2215, %v2467
  %v2504 = vld [vmem:[%s2] sm:$0x1]
  %v2505 = vld [vmem:[%s2 + $0x1] sm:$0x1]
  %v2506 = vld [vmem:[%s2 + $0x2] sm:$0x1]
  %v2507 = vld [vmem:[%s2 + $0x3] sm:$0x1]
  %v2508 = vld [vmem:[%s2 + $0x4] sm:$0x1]
  %v2509 = vld [vmem:[%s2 + $0x5] sm:$0x1]
  %v2510 = vld [vmem:[%s2 + $0x6] sm:$0x1]
  %v2511 = vld [vmem:[%s2 + $0x7] sm:$0x1]
  %v2512 = vld [vmem:[%s2 + $0x8] sm:$0x1]
  %v2513 = vld [vmem:[%s2 + $0x9] sm:$0x1]
  %v2514 = vld [vmem:[%s2 + $0xa] sm:$0x1]
  %v2515 = vld [vmem:[%s2 + $0xb] sm:$0x1]
  %v2516 = vld [vmem:[%s2 + $0xc] sm:$0x1]
  %v2517 = vld [vmem:[%s2 + $0xd] sm:$0x1]
  %v2518 = vld [vmem:[%s2 + $0xe] sm:$0x1]
  %v2519 = vld [vmem:[%s2 + $0xf] sm:$0x1]
  %v2520 = vld [vmem:[%s2 + $0x10] sm:$0x1]
  %v2521 = vld [vmem:[%s2 + $0x11] sm:$0x1]
  %v2522 = vld [vmem:[%s2 + $0x12] sm:$0x1]
  %v2523 = vld [vmem:[%s2 + $0x13] sm:$0x1]
  %v2524 = vld [vmem:[%s2 + $0x14] sm:$0x1]
  %v2525 = vld [vmem:[%s2 + $0x15] sm:$0x1]
  %v2526 = vld [vmem:[%s2 + $0x16] sm:$0x1]
  %v2527 = vld [vmem:[%s2 + $0x17] sm:$0x1]
  %v2528 = vld [vmem:[%s2 + $0x18] sm:$0x1]
  %v2529 = vld [vmem:[%s2 + $0x19] sm:$0x1]
  %v2530 = vld [vmem:[%s2 + $0x1a] sm:$0x1]
  %v2531 = vld [vmem:[%s2 + $0x1b] sm:$0x1]
  %v2532 = vld [vmem:[%s2 + $0x1c] sm:$0x1]
  %v2533 = vld [vmem:[%s2 + $0x1d] sm:$0x1]
  %v2534 = vld [vmem:[%s2 + $0x1e] sm:$0x1]
  %v2535 = vld [vmem:[%s2 + $0x1f] sm:$0x1]
  %v2536 = vld [vmem:[%s2 + $0x20] sm:$0x1]
  %v2537 = vld [vmem:[%s2 + $0x21] sm:$0x1]
  %v2538 = vld [vmem:[%s2 + $0x22] sm:$0x1]
  %v2539 = vld [vmem:[%s2 + $0x23] sm:$0x1]
  %v2540 = vld [vmem:[%s2 + $0x24] sm:$0x1]
  %v2541 = vld [vmem:[%s2 + $0x25] sm:$0x1]
  %v2542 = vld [vmem:[%s2 + $0x26] sm:$0x1]
  %v2543 = vld [vmem:[%s2 + $0x27] sm:$0x1]
  %v2544 = vld [vmem:[%s2 + $0x28] sm:$0x1]
  %v2545 = vld [vmem:[%s2 + $0x29] sm:$0x1]
  %v2546 = vld [vmem:[%s2 + $0x2a] sm:$0x1]
  %v2547 = vld [vmem:[%s2 + $0x2b] sm:$0x1]
  %v2548 = vld [vmem:[%s2 + $0x2c] sm:$0x1]
  %v2549 = vld [vmem:[%s2 + $0x2d] sm:$0x1]
  %v2550 = vld [vmem:[%s2 + $0x2e] sm:$0x1]
  %v2551 = vld [vmem:[%s2 + $0x2f] sm:$0x1]
  %v2552 = vld [vmem:[%s2 + $0x30] sm:$0x1]
  %v2553 = vld [vmem:[%s2 + $0x31] sm:$0x1]
  %v2554 = vld [vmem:[%s2 + $0x32] sm:$0x1]
  %v2555 = vld [vmem:[%s2 + $0x33] sm:$0x1]
  %v2556 = vld [vmem:[%s2 + $0x34] sm:$0x1]
  %v2557 = vld [vmem:[%s2 + $0x35] sm:$0x1]
  %v2558 = vld [vmem:[%s2 + $0x36] sm:$0x1]
  %v2559 = vld [vmem:[%s2 + $0x37] sm:$0x1]
  %v2560 = vld [vmem:[%s2 + $0x38] sm:$0x1]
  %v2561 = vld [vmem:[%s2 + $0x39] sm:$0x1]
  %v2562 = vld [vmem:[%s2 + $0x3a] sm:$0x1]
  %v2563 = vld [vmem:[%s2 + $0x3b] sm:$0x1]
  %v2564 = vld [vmem:[%s2 + $0x3c] sm:$0x1]
  %v2565 = vld [vmem:[%s2 + $0x3d] sm:$0x1]
  %v2566 = vld [vmem:[%s2 + $0x3e] sm:$0x1]
  %v2567 = vld [vmem:[%s2 + $0x3f] sm:$0x1]
  %v2568 = vld [vmem:[%s2 + $0x40] sm:$0x1]
  %v2569 = vld [vmem:[%s2 + $0x41] sm:$0x1]
  %v2570 = vld [vmem:[%s2 + $0x42] sm:$0x1]
  %v2571 = vld [vmem:[%s2 + $0x43] sm:$0x1]
  %v2572 = vld [vmem:[%s2 + $0x44] sm:$0x1]
  %v2573 = vld [vmem:[%s2 + $0x45] sm:$0x1]
  %v2574 = vld [vmem:[%s2 + $0x46] sm:$0x1]
  %v2575 = vld [vmem:[%s2 + $0x47] sm:$0x1]
  %s2576 = scalar_lea.vmem %s2, 72
  %v2577 = vld [vmem:[%s2576] sm:$0x1]
  %v2578 = vld [vmem:[%s2576 + $0x1] sm:$0x1]
  %v2579 = vld [vmem:[%s2576 + $0x2] sm:$0x1]
  %v2580 = vld [vmem:[%s2576 + $0x3] sm:$0x1]
  %v2581 = vld [vmem:[%s2576 + $0x4] sm:$0x1]
  %v2582 = vld [vmem:[%s2576 + $0x5] sm:$0x1]
  %v2583 = vld [vmem:[%s2576 + $0x6] sm:$0x1]
  %v2584 = vld [vmem:[%s2576 + $0x7] sm:$0x1]
  %v2585 = vld [vmem:[%s2576 + $0x8] sm:$0x1]
  %v2586 = vld [vmem:[%s2576 + $0x9] sm:$0x1]
  %v2587 = vld [vmem:[%s2576 + $0xa] sm:$0x1]
  %v2588 = vld [vmem:[%s2576 + $0xb] sm:$0x1]
  %v2589 = vld [vmem:[%s2576 + $0xc] sm:$0x1]
  %v2590 = vld [vmem:[%s2576 + $0xd] sm:$0x1]
  %v2591 = vld [vmem:[%s2576 + $0xe] sm:$0x1]
  %v2592 = vld [vmem:[%s2576 + $0xf] sm:$0x1]
  %v2593 = vld [vmem:[%s2576 + $0x10] sm:$0x1]
  %v2594 = vld [vmem:[%s2576 + $0x11] sm:$0x1]
  %v2595 = vld [vmem:[%s2576 + $0x12] sm:$0x1]
  %v2596 = vld [vmem:[%s2576 + $0x13] sm:$0x1]
  %v2597 = vld [vmem:[%s2576 + $0x14] sm:$0x1]
  %v2598 = vld [vmem:[%s2576 + $0x15] sm:$0x1]
  %v2599 = vld [vmem:[%s2576 + $0x16] sm:$0x1]
  %v2600 = vld [vmem:[%s2576 + $0x17] sm:$0x1]
  %v2601 = vld [vmem:[%s2576 + $0x18] sm:$0x1]
  %v2602 = vld [vmem:[%s2576 + $0x19] sm:$0x1]
  %v2603 = vld [vmem:[%s2576 + $0x1a] sm:$0x1]
  %v2604 = vld [vmem:[%s2576 + $0x1b] sm:$0x1]
  %v2605 = vld [vmem:[%s2576 + $0x1c] sm:$0x1]
  %v2606 = vld [vmem:[%s2576 + $0x1d] sm:$0x1]
  %v2607 = vld [vmem:[%s2576 + $0x1e] sm:$0x1]
  %v2608 = vld [vmem:[%s2576 + $0x1f] sm:$0x1]
  %v2609 = vld [vmem:[%s2576 + $0x20] sm:$0x1]
  %v2610 = vld [vmem:[%s2576 + $0x21] sm:$0x1]
  %v2611 = vld [vmem:[%s2576 + $0x22] sm:$0x1]
  %v2612 = vld [vmem:[%s2576 + $0x23] sm:$0x1]
  %v2613 = vld [vmem:[%s2576 + $0x24] sm:$0x1]
  %v2614 = vld [vmem:[%s2576 + $0x25] sm:$0x1]
  %v2615 = vld [vmem:[%s2576 + $0x26] sm:$0x1]
  %v2616 = vld [vmem:[%s2576 + $0x27] sm:$0x1]
  %v2617 = vld [vmem:[%s2576 + $0x28] sm:$0x1]
  %v2618 = vld [vmem:[%s2576 + $0x29] sm:$0x1]
  %v2619 = vld [vmem:[%s2576 + $0x2a] sm:$0x1]
  %v2620 = vld [vmem:[%s2576 + $0x2b] sm:$0x1]
  %v2621 = vld [vmem:[%s2576 + $0x2c] sm:$0x1]
  %v2622 = vld [vmem:[%s2576 + $0x2d] sm:$0x1]
  %v2623 = vld [vmem:[%s2576 + $0x2e] sm:$0x1]
  %v2624 = vld [vmem:[%s2576 + $0x2f] sm:$0x1]
  %v2625 = vld [vmem:[%s2576 + $0x30] sm:$0x1]
  %v2626 = vld [vmem:[%s2576 + $0x31] sm:$0x1]
  %v2627 = vld [vmem:[%s2576 + $0x32] sm:$0x1]
  %v2628 = vld [vmem:[%s2576 + $0x33] sm:$0x1]
  %v2629 = vld [vmem:[%s2576 + $0x34] sm:$0x1]
  %v2630 = vld [vmem:[%s2576 + $0x35] sm:$0x1]
  %v2631 = vld [vmem:[%s2576 + $0x36] sm:$0x1]
  %v2632 = vld [vmem:[%s2576 + $0x37] sm:$0x1]
  %v2633 = vld [vmem:[%s2576 + $0x38] sm:$0x1]
  %v2634 = vld [vmem:[%s2576 + $0x39] sm:$0x1]
  %v2635 = vld [vmem:[%s2576 + $0x3a] sm:$0x1]
  %v2636 = vld [vmem:[%s2576 + $0x3b] sm:$0x1]
  %v2637 = vld [vmem:[%s2576 + $0x3c] sm:$0x1]
  %v2638 = vld [vmem:[%s2576 + $0x3d] sm:$0x1]
  %v2639 = vld [vmem:[%s2576 + $0x3e] sm:$0x1]
  %v2640 = vld [vmem:[%s2576 + $0x3f] sm:$0x1]
  %v2641 = vld [vmem:[%s2576 + $0x40] sm:$0x1]
  %v2642 = vld [vmem:[%s2576 + $0x41] sm:$0x1]
  %v2643 = vld [vmem:[%s2576 + $0x42] sm:$0x1]
  %v2644 = vld [vmem:[%s2576 + $0x43] sm:$0x1]
  %v2645 = vld [vmem:[%s2576 + $0x44] sm:$0x1]
  %v2646 = vld [vmem:[%s2576 + $0x45] sm:$0x1]
  %v2647 = vld [vmem:[%s2576 + $0x46] sm:$0x1]
  %v2648 = vld [vmem:[%s2576 + $0x47] sm:$0x1]
  %v2685 = vlaneseq
  %v2686 = vshrl.u32 %v2685, 7
  %v2687 = vsub.s32 0, %v2686
  %v2688 = vrot.slane %v2504, %v2687
  %v2689 = vlaneseq
  %v2690 = vshrl.u32 %v2689, 7
  %v2691 = vsub.s32 0, %v2690
  %v2692 = vrot.slane %v2505, %v2691
  %v2693 = vlaneseq
  %v2694 = vshrl.u32 %v2693, 7
  %v2695 = vsub.s32 0, %v2694
  %v2696 = vrot.slane %v2506, %v2695
  %v2697 = vlaneseq
  %v2698 = vshrl.u32 %v2697, 7
  %v2699 = vsub.s32 0, %v2698
  %v2700 = vrot.slane %v2507, %v2699
  %v2701 = vlaneseq
  %v2702 = vshrl.u32 %v2701, 7
  %v2703 = vsub.s32 0, %v2702
  %v2704 = vrot.slane %v2508, %v2703
  %v2705 = vlaneseq
  %v2706 = vshrl.u32 %v2705, 7
  %v2707 = vsub.s32 0, %v2706
  %v2708 = vrot.slane %v2509, %v2707
  %v2709 = vlaneseq
  %v2710 = vshrl.u32 %v2709, 7
  %v2711 = vsub.s32 0, %v2710
  %v2712 = vrot.slane %v2510, %v2711
  %v2713 = vlaneseq
  %v2714 = vshrl.u32 %v2713, 7
  %v2715 = vsub.s32 0, %v2714
  %v2716 = vrot.slane %v2511, %v2715
  %v2717 = vlaneseq
  %v2718 = vshrl.u32 %v2717, 7
  %v2719 = vsub.s32 0, %v2718
  %v2720 = vrot.slane %v2512, %v2719
  %v2721 = vlaneseq
  %v2722 = vshrl.u32 %v2721, 7
  %v2723 = vsub.s32 0, %v2722
  %v2724 = vrot.slane %v2522, %v2723
  %v2725 = vlaneseq
  %v2726 = vshrl.u32 %v2725, 7
  %v2727 = vsub.s32 0, %v2726
  %v2728 = vrot.slane %v2523, %v2727
  %v2729 = vlaneseq
  %v2730 = vshrl.u32 %v2729, 7
  %v2731 = vsub.s32 0, %v2730
  %v2732 = vrot.slane %v2524, %v2731
  %v2733 = vlaneseq
  %v2734 = vshrl.u32 %v2733, 7
  %v2735 = vsub.s32 0, %v2734
  %v2736 = vrot.slane %v2525, %v2735
  %v2737 = vlaneseq
  %v2738 = vshrl.u32 %v2737, 7
  %v2739 = vsub.s32 0, %v2738
  %v2740 = vrot.slane %v2526, %v2739
  %v2741 = vlaneseq
  %v2742 = vshrl.u32 %v2741, 7
  %v2743 = vsub.s32 0, %v2742
  %v2744 = vrot.slane %v2527, %v2743
  %v2745 = vlaneseq
  %v2746 = vshrl.u32 %v2745, 7
  %v2747 = vsub.s32 0, %v2746
  %v2748 = vrot.slane %v2528, %v2747
  %v2749 = vlaneseq
  %v2750 = vshrl.u32 %v2749, 7
  %v2751 = vsub.s32 0, %v2750
  %v2752 = vrot.slane %v2529, %v2751
  %v2753 = vlaneseq
  %v2754 = vshrl.u32 %v2753, 7
  %v2755 = vsub.s32 0, %v2754
  %v2756 = vrot.slane %v2530, %v2755
  %v2757 = vlaneseq
  %v2758 = vshrl.u32 %v2757, 7
  %v2759 = vsub.s32 0, %v2758
  %v2760 = vrot.slane %v2540, %v2759
  %v2761 = vlaneseq
  %v2762 = vshrl.u32 %v2761, 7
  %v2763 = vsub.s32 0, %v2762
  %v2764 = vrot.slane %v2541, %v2763
  %v2765 = vlaneseq
  %v2766 = vshrl.u32 %v2765, 7
  %v2767 = vsub.s32 0, %v2766
  %v2768 = vrot.slane %v2542, %v2767
  %v2769 = vlaneseq
  %v2770 = vshrl.u32 %v2769, 7
  %v2771 = vsub.s32 0, %v2770
  %v2772 = vrot.slane %v2543, %v2771
  %v2773 = vlaneseq
  %v2774 = vshrl.u32 %v2773, 7
  %v2775 = vsub.s32 0, %v2774
  %v2776 = vrot.slane %v2544, %v2775
  %v2777 = vlaneseq
  %v2778 = vshrl.u32 %v2777, 7
  %v2779 = vsub.s32 0, %v2778
  %v2780 = vrot.slane %v2545, %v2779
  %v2781 = vlaneseq
  %v2782 = vshrl.u32 %v2781, 7
  %v2783 = vsub.s32 0, %v2782
  %v2784 = vrot.slane %v2546, %v2783
  %v2785 = vlaneseq
  %v2786 = vshrl.u32 %v2785, 7
  %v2787 = vsub.s32 0, %v2786
  %v2788 = vrot.slane %v2547, %v2787
  %v2789 = vlaneseq
  %v2790 = vshrl.u32 %v2789, 7
  %v2791 = vsub.s32 0, %v2790
  %v2792 = vrot.slane %v2548, %v2791
  %v2793 = vlaneseq
  %v2794 = vshrl.u32 %v2793, 7
  %v2795 = vsub.s32 0, %v2794
  %v2796 = vrot.slane %v2558, %v2795
  %v2797 = vlaneseq
  %v2798 = vshrl.u32 %v2797, 7
  %v2799 = vsub.s32 0, %v2798
  %v2800 = vrot.slane %v2559, %v2799
  %v2801 = vlaneseq
  %v2802 = vshrl.u32 %v2801, 7
  %v2803 = vsub.s32 0, %v2802
  %v2804 = vrot.slane %v2560, %v2803
  %v2805 = vlaneseq
  %v2806 = vshrl.u32 %v2805, 7
  %v2807 = vsub.s32 0, %v2806
  %v2808 = vrot.slane %v2561, %v2807
  %v2809 = vlaneseq
  %v2810 = vshrl.u32 %v2809, 7
  %v2811 = vsub.s32 0, %v2810
  %v2812 = vrot.slane %v2562, %v2811
  %v2813 = vlaneseq
  %v2814 = vshrl.u32 %v2813, 7
  %v2815 = vsub.s32 0, %v2814
  %v2816 = vrot.slane %v2563, %v2815
  %v2817 = vlaneseq
  %v2818 = vshrl.u32 %v2817, 7
  %v2819 = vsub.s32 0, %v2818
  %v2820 = vrot.slane %v2564, %v2819
  %v2821 = vlaneseq
  %v2822 = vshrl.u32 %v2821, 7
  %v2823 = vsub.s32 0, %v2822
  %v2824 = vrot.slane %v2565, %v2823
  %v2825 = vlaneseq
  %v2826 = vshrl.u32 %v2825, 7
  %v2827 = vsub.s32 0, %v2826
  %v2828 = vrot.slane %v2566, %v2827
  %v2865 = vmul.f32 %v2688, %v1928
  %v2866 = vmul.f32 %v2692, %v1930
  %v2867 = vmul.f32 %v2696, %v1932
  %v2868 = vmul.f32 %v2700, %v1934
  %v2869 = vmul.f32 %v2704, %v1936
  %v2870 = vmul.f32 %v2708, %v1938
  %v2871 = vmul.f32 %v2712, %v1940
  %v2872 = vmul.f32 %v2716, %v1942
  %v2873 = vmul.f32 %v2720, %v1944
  %v2874 = vmul.f32 %v2724, %v1946
  %v2875 = vmul.f32 %v2728, %v1948
  %v2876 = vmul.f32 %v2732, %v1950
  %v2877 = vmul.f32 %v2736, %v1952
  %v2878 = vmul.f32 %v2740, %v1954
  %v2879 = vmul.f32 %v2744, %v1956
  %v2880 = vmul.f32 %v2748, %v1958
  %v2881 = vmul.f32 %v2752, %v1960
  %v2882 = vmul.f32 %v2756, %v1962
  %v2883 = vmul.f32 %v2760, %v1929
  %v2884 = vmul.f32 %v2764, %v1931
  %v2885 = vmul.f32 %v2768, %v1933
  %v2886 = vmul.f32 %v2772, %v1935
  %v2887 = vmul.f32 %v2776, %v1937
  %v2888 = vmul.f32 %v2780, %v1939
  %v2889 = vmul.f32 %v2784, %v1941
  %v2890 = vmul.f32 %v2788, %v1943
  %v2891 = vmul.f32 %v2792, %v1945
  %v2892 = vmul.f32 %v2796, %v1947
  %v2893 = vmul.f32 %v2800, %v1949
  %v2894 = vmul.f32 %v2804, %v1951
  %v2895 = vmul.f32 %v2808, %v1953
  %v2896 = vmul.f32 %v2812, %v1955
  %v2897 = vmul.f32 %v2816, %v1957
  %v2898 = vmul.f32 %v2820, %v1959
  %v2899 = vmul.f32 %v2824, %v1961
  %v2900 = vmul.f32 %v2828, %v1963
  %v2937 = vlaneseq
  %v2938 = vshrl.u32 %v2937, 7
  %v2939 = vsub.s32 0, %v2938
  %v2940 = vrot.slane %v2577, %v2939
  %v2941 = vlaneseq
  %v2942 = vshrl.u32 %v2941, 7
  %v2943 = vsub.s32 0, %v2942
  %v2944 = vrot.slane %v2578, %v2943
  %v2945 = vlaneseq
  %v2946 = vshrl.u32 %v2945, 7
  %v2947 = vsub.s32 0, %v2946
  %v2948 = vrot.slane %v2579, %v2947
  %v2949 = vlaneseq
  %v2950 = vshrl.u32 %v2949, 7
  %v2951 = vsub.s32 0, %v2950
  %v2952 = vrot.slane %v2580, %v2951
  %v2953 = vlaneseq
  %v2954 = vshrl.u32 %v2953, 7
  %v2955 = vsub.s32 0, %v2954
  %v2956 = vrot.slane %v2581, %v2955
  %v2957 = vlaneseq
  %v2958 = vshrl.u32 %v2957, 7
  %v2959 = vsub.s32 0, %v2958
  %v2960 = vrot.slane %v2582, %v2959
  %v2961 = vlaneseq
  %v2962 = vshrl.u32 %v2961, 7
  %v2963 = vsub.s32 0, %v2962
  %v2964 = vrot.slane %v2583, %v2963
  %v2965 = vlaneseq
  %v2966 = vshrl.u32 %v2965, 7
  %v2967 = vsub.s32 0, %v2966
  %v2968 = vrot.slane %v2584, %v2967
  %v2969 = vlaneseq
  %v2970 = vshrl.u32 %v2969, 7
  %v2971 = vsub.s32 0, %v2970
  %v2972 = vrot.slane %v2585, %v2971
  %v2973 = vlaneseq
  %v2974 = vshrl.u32 %v2973, 7
  %v2975 = vsub.s32 0, %v2974
  %v2976 = vrot.slane %v2595, %v2975
  %v2977 = vlaneseq
  %v2978 = vshrl.u32 %v2977, 7
  %v2979 = vsub.s32 0, %v2978
  %v2980 = vrot.slane %v2596, %v2979
  %v2981 = vlaneseq
  %v2982 = vshrl.u32 %v2981, 7
  %v2983 = vsub.s32 0, %v2982
  %v2984 = vrot.slane %v2597, %v2983
  %v2985 = vlaneseq
  %v2986 = vshrl.u32 %v2985, 7
  %v2987 = vsub.s32 0, %v2986
  %v2988 = vrot.slane %v2598, %v2987
  %v2989 = vlaneseq
  %v2990 = vshrl.u32 %v2989, 7
  %v2991 = vsub.s32 0, %v2990
  %v2992 = vrot.slane %v2599, %v2991
  %v2993 = vlaneseq
  %v2994 = vshrl.u32 %v2993, 7
  %v2995 = vsub.s32 0, %v2994
  %v2996 = vrot.slane %v2600, %v2995
  %v2997 = vlaneseq
  %v2998 = vshrl.u32 %v2997, 7
  %v2999 = vsub.s32 0, %v2998
  %v3000 = vrot.slane %v2601, %v2999
  %v3001 = vlaneseq
  %v3002 = vshrl.u32 %v3001, 7
  %v3003 = vsub.s32 0, %v3002
  %v3004 = vrot.slane %v2602, %v3003
  %v3005 = vlaneseq
  %v3006 = vshrl.u32 %v3005, 7
  %v3007 = vsub.s32 0, %v3006
  %v3008 = vrot.slane %v2603, %v3007
  %v3009 = vlaneseq
  %v3010 = vshrl.u32 %v3009, 7
  %v3011 = vsub.s32 0, %v3010
  %v3012 = vrot.slane %v2613, %v3011
  %v3013 = vlaneseq
  %v3014 = vshrl.u32 %v3013, 7
  %v3015 = vsub.s32 0, %v3014
  %v3016 = vrot.slane %v2614, %v3015
  %v3017 = vlaneseq
  %v3018 = vshrl.u32 %v3017, 7
  %v3019 = vsub.s32 0, %v3018
  %v3020 = vrot.slane %v2615, %v3019
  %v3021 = vlaneseq
  %v3022 = vshrl.u32 %v3021, 7
  %v3023 = vsub.s32 0, %v3022
  %v3024 = vrot.slane %v2616, %v3023
  %v3025 = vlaneseq
  %v3026 = vshrl.u32 %v3025, 7
  %v3027 = vsub.s32 0, %v3026
  %v3028 = vrot.slane %v2617, %v3027
  %v3029 = vlaneseq
  %v3030 = vshrl.u32 %v3029, 7
  %v3031 = vsub.s32 0, %v3030
  %v3032 = vrot.slane %v2618, %v3031
  %v3033 = vlaneseq
  %v3034 = vshrl.u32 %v3033, 7
  %v3035 = vsub.s32 0, %v3034
  %v3036 = vrot.slane %v2619, %v3035
  %v3037 = vlaneseq
  %v3038 = vshrl.u32 %v3037, 7
  %v3039 = vsub.s32 0, %v3038
  %v3040 = vrot.slane %v2620, %v3039
  %v3041 = vlaneseq
  %v3042 = vshrl.u32 %v3041, 7
  %v3043 = vsub.s32 0, %v3042
  %v3044 = vrot.slane %v2621, %v3043
  %v3045 = vlaneseq
  %v3046 = vshrl.u32 %v3045, 7
  %v3047 = vsub.s32 0, %v3046
  %v3048 = vrot.slane %v2631, %v3047
  %v3049 = vlaneseq
  %v3050 = vshrl.u32 %v3049, 7
  %v3051 = vsub.s32 0, %v3050
  %v3052 = vrot.slane %v2632, %v3051
  %v3053 = vlaneseq
  %v3054 = vshrl.u32 %v3053, 7
  %v3055 = vsub.s32 0, %v3054
  %v3056 = vrot.slane %v2633, %v3055
  %v3057 = vlaneseq
  %v3058 = vshrl.u32 %v3057, 7
  %v3059 = vsub.s32 0, %v3058
  %v3060 = vrot.slane %v2634, %v3059
  %v3061 = vlaneseq
  %v3062 = vshrl.u32 %v3061, 7
  %v3063 = vsub.s32 0, %v3062
  %v3064 = vrot.slane %v2635, %v3063
  %v3065 = vlaneseq
  %v3066 = vshrl.u32 %v3065, 7
  %v3067 = vsub.s32 0, %v3066
  %v3068 = vrot.slane %v2636, %v3067
  %v3069 = vlaneseq
  %v3070 = vshrl.u32 %v3069, 7
  %v3071 = vsub.s32 0, %v3070
  %v3072 = vrot.slane %v2637, %v3071
  %v3073 = vlaneseq
  %v3074 = vshrl.u32 %v3073, 7
  %v3075 = vsub.s32 0, %v3074
  %v3076 = vrot.slane %v2638, %v3075
  %v3077 = vlaneseq
  %v3078 = vshrl.u32 %v3077, 7
  %v3079 = vsub.s32 0, %v3078
  %v3080 = vrot.slane %v2639, %v3079
  %v3117 = vmul.f32 %v2940, %v2468
  %v3118 = vmul.f32 %v2944, %v2470
  %v3119 = vmul.f32 %v2948, %v2472
  %v3120 = vmul.f32 %v2952, %v2474
  %v3121 = vmul.f32 %v2956, %v2476
  %v3122 = vmul.f32 %v2960, %v2478
  %v3123 = vmul.f32 %v2964, %v2480
  %v3124 = vmul.f32 %v2968, %v2482
  %v3125 = vmul.f32 %v2972, %v2484
  %v3126 = vmul.f32 %v2976, %v2486
  %v3127 = vmul.f32 %v2980, %v2488
  %v3128 = vmul.f32 %v2984, %v2490
  %v3129 = vmul.f32 %v2988, %v2492
  %v3130 = vmul.f32 %v2992, %v2494
  %v3131 = vmul.f32 %v2996, %v2496
  %v3132 = vmul.f32 %v3000, %v2498
  %v3133 = vmul.f32 %v3004, %v2500
  %v3134 = vmul.f32 %v3008, %v2502
  %v3135 = vmul.f32 %v3012, %v2469
  %v3136 = vmul.f32 %v3016, %v2471
  %v3137 = vmul.f32 %v3020, %v2473
  %v3138 = vmul.f32 %v3024, %v2475
  %v3139 = vmul.f32 %v3028, %v2477
  %v3140 = vmul.f32 %v3032, %v2479
  %v3141 = vmul.f32 %v3036, %v2481
  %v3142 = vmul.f32 %v3040, %v2483
  %v3143 = vmul.f32 %v3044, %v2485
  %v3144 = vmul.f32 %v3048, %v2487
  %v3145 = vmul.f32 %v3052, %v2489
  %v3146 = vmul.f32 %v3056, %v2491
  %v3147 = vmul.f32 %v3060, %v2493
  %v3148 = vmul.f32 %v3064, %v2495
  %v3149 = vmul.f32 %v3068, %v2497
  %v3150 = vmul.f32 %v3072, %v2499
  %v3151 = vmul.f32 %v3076, %v2501
  %v3152 = vmul.f32 %v3080, %v2503
  %v3153 = vadd.f32 %v2865, %v3117
  %v3154 = vadd.f32 %v2866, %v3118
  %v3155 = vadd.f32 %v2867, %v3119
  %v3156 = vadd.f32 %v2868, %v3120
  %v3157 = vadd.f32 %v2869, %v3121
  %v3158 = vadd.f32 %v2870, %v3122
  %v3159 = vadd.f32 %v2871, %v3123
  %v3160 = vadd.f32 %v2872, %v3124
  %v3161 = vadd.f32 %v2873, %v3125
  %v3162 = vadd.f32 %v2874, %v3126
  %v3163 = vadd.f32 %v2875, %v3127
  %v3164 = vadd.f32 %v2876, %v3128
  %v3165 = vadd.f32 %v2877, %v3129
  %v3166 = vadd.f32 %v2878, %v3130
  %v3167 = vadd.f32 %v2879, %v3131
  %v3168 = vadd.f32 %v2880, %v3132
  %v3169 = vadd.f32 %v2881, %v3133
  %v3170 = vadd.f32 %v2882, %v3134
  %v3171 = vadd.f32 %v2883, %v3135
  %v3172 = vadd.f32 %v2884, %v3136
  %v3173 = vadd.f32 %v2885, %v3137
  %v3174 = vadd.f32 %v2886, %v3138
  %v3175 = vadd.f32 %v2887, %v3139
  %v3176 = vadd.f32 %v2888, %v3140
  %v3177 = vadd.f32 %v2889, %v3141
  %v3178 = vadd.f32 %v2890, %v3142
  %v3179 = vadd.f32 %v2891, %v3143
  %v3180 = vadd.f32 %v2892, %v3144
  %v3181 = vadd.f32 %v2893, %v3145
  %v3182 = vadd.f32 %v2894, %v3146
  %v3183 = vadd.f32 %v2895, %v3147
  %v3184 = vadd.f32 %v2896, %v3148
  %v3185 = vadd.f32 %v2897, %v3149
  %v3186 = vadd.f32 %v2898, %v3150
  %v3187 = vadd.f32 %v2899, %v3151
  %v3188 = vadd.f32 %v2900, %v3152
  %v3225 = vlaneseq
  %v3226 = vshrl.u32 %v3225, 7
  %v3227 = vsub.s32 0, %v3226
  %v3228 = vrot.slane %v2513, %v3227
  %v3229 = vlaneseq
  %v3230 = vshrl.u32 %v3229, 7
  %v3231 = vsub.s32 0, %v3230
  %v3232 = vrot.slane %v2514, %v3231
  %v3233 = vlaneseq
  %v3234 = vshrl.u32 %v3233, 7
  %v3235 = vsub.s32 0, %v3234
  %v3236 = vrot.slane %v2515, %v3235
  %v3237 = vlaneseq
  %v3238 = vshrl.u32 %v3237, 7
  %v3239 = vsub.s32 0, %v3238
  %v3240 = vrot.slane %v2516, %v3239
  %v3241 = vlaneseq
  %v3242 = vshrl.u32 %v3241, 7
  %v3243 = vsub.s32 0, %v3242
  %v3244 = vrot.slane %v2517, %v3243
  %v3245 = vlaneseq
  %v3246 = vshrl.u32 %v3245, 7
  %v3247 = vsub.s32 0, %v3246
  %v3248 = vrot.slane %v2518, %v3247
  %v3249 = vlaneseq
  %v3250 = vshrl.u32 %v3249, 7
  %v3251 = vsub.s32 0, %v3250
  %v3252 = vrot.slane %v2519, %v3251
  %v3253 = vlaneseq
  %v3254 = vshrl.u32 %v3253, 7
  %v3255 = vsub.s32 0, %v3254
  %v3256 = vrot.slane %v2520, %v3255
  %v3257 = vlaneseq
  %v3258 = vshrl.u32 %v3257, 7
  %v3259 = vsub.s32 0, %v3258
  %v3260 = vrot.slane %v2521, %v3259
  %v3261 = vlaneseq
  %v3262 = vshrl.u32 %v3261, 7
  %v3263 = vsub.s32 0, %v3262
  %v3264 = vrot.slane %v2531, %v3263
  %v3265 = vlaneseq
  %v3266 = vshrl.u32 %v3265, 7
  %v3267 = vsub.s32 0, %v3266
  %v3268 = vrot.slane %v2532, %v3267
  %v3269 = vlaneseq
  %v3270 = vshrl.u32 %v3269, 7
  %v3271 = vsub.s32 0, %v3270
  %v3272 = vrot.slane %v2533, %v3271
  %v3273 = vlaneseq
  %v3274 = vshrl.u32 %v3273, 7
  %v3275 = vsub.s32 0, %v3274
  %v3276 = vrot.slane %v2534, %v3275
  %v3277 = vlaneseq
  %v3278 = vshrl.u32 %v3277, 7
  %v3279 = vsub.s32 0, %v3278
  %v3280 = vrot.slane %v2535, %v3279
  %v3281 = vlaneseq
  %v3282 = vshrl.u32 %v3281, 7
  %v3283 = vsub.s32 0, %v3282
  %v3284 = vrot.slane %v2536, %v3283
  %v3285 = vlaneseq
  %v3286 = vshrl.u32 %v3285, 7
  %v3287 = vsub.s32 0, %v3286
  %v3288 = vrot.slane %v2537, %v3287
  %v3289 = vlaneseq
  %v3290 = vshrl.u32 %v3289, 7
  %v3291 = vsub.s32 0, %v3290
  %v3292 = vrot.slane %v2538, %v3291
  %v3293 = vlaneseq
  %v3294 = vshrl.u32 %v3293, 7
  %v3295 = vsub.s32 0, %v3294
  %v3296 = vrot.slane %v2539, %v3295
  %v3297 = vlaneseq
  %v3298 = vshrl.u32 %v3297, 7
  %v3299 = vsub.s32 0, %v3298
  %v3300 = vrot.slane %v2549, %v3299
  %v3301 = vlaneseq
  %v3302 = vshrl.u32 %v3301, 7
  %v3303 = vsub.s32 0, %v3302
  %v3304 = vrot.slane %v2550, %v3303
  %v3305 = vlaneseq
  %v3306 = vshrl.u32 %v3305, 7
  %v3307 = vsub.s32 0, %v3306
  %v3308 = vrot.slane %v2551, %v3307
  %v3309 = vlaneseq
  %v3310 = vshrl.u32 %v3309, 7
  %v3311 = vsub.s32 0, %v3310
  %v3312 = vrot.slane %v2552, %v3311
  %v3313 = vlaneseq
  %v3314 = vshrl.u32 %v3313, 7
  %v3315 = vsub.s32 0, %v3314
  %v3316 = vrot.slane %v2553, %v3315
  %v3317 = vlaneseq
  %v3318 = vshrl.u32 %v3317, 7
  %v3319 = vsub.s32 0, %v3318
  %v3320 = vrot.slane %v2554, %v3319
  %v3321 = vlaneseq
  %v3322 = vshrl.u32 %v3321, 7
  %v3323 = vsub.s32 0, %v3322
  %v3324 = vrot.slane %v2555, %v3323
  %v3325 = vlaneseq
  %v3326 = vshrl.u32 %v3325, 7
  %v3327 = vsub.s32 0, %v3326
  %v3328 = vrot.slane %v2556, %v3327
  %v3329 = vlaneseq
  %v3330 = vshrl.u32 %v3329, 7
  %v3331 = vsub.s32 0, %v3330
  %v3332 = vrot.slane %v2557, %v3331
  %v3333 = vlaneseq
  %v3334 = vshrl.u32 %v3333, 7
  %v3335 = vsub.s32 0, %v3334
  %v3336 = vrot.slane %v2567, %v3335
  %v3337 = vlaneseq
  %v3338 = vshrl.u32 %v3337, 7
  %v3339 = vsub.s32 0, %v3338
  %v3340 = vrot.slane %v2568, %v3339
  %v3341 = vlaneseq
  %v3342 = vshrl.u32 %v3341, 7
  %v3343 = vsub.s32 0, %v3342
  %v3344 = vrot.slane %v2569, %v3343
  %v3345 = vlaneseq
  %v3346 = vshrl.u32 %v3345, 7
  %v3347 = vsub.s32 0, %v3346
  %v3348 = vrot.slane %v2570, %v3347
  %v3349 = vlaneseq
  %v3350 = vshrl.u32 %v3349, 7
  %v3351 = vsub.s32 0, %v3350
  %v3352 = vrot.slane %v2571, %v3351
  %v3353 = vlaneseq
  %v3354 = vshrl.u32 %v3353, 7
  %v3355 = vsub.s32 0, %v3354
  %v3356 = vrot.slane %v2572, %v3355
  %v3357 = vlaneseq
  %v3358 = vshrl.u32 %v3357, 7
  %v3359 = vsub.s32 0, %v3358
  %v3360 = vrot.slane %v2573, %v3359
  %v3361 = vlaneseq
  %v3362 = vshrl.u32 %v3361, 7
  %v3363 = vsub.s32 0, %v3362
  %v3364 = vrot.slane %v2574, %v3363
  %v3365 = vlaneseq
  %v3366 = vshrl.u32 %v3365, 7
  %v3367 = vsub.s32 0, %v3366
  %v3368 = vrot.slane %v2575, %v3367
  %v3405 = vmul.f32 %v3228, %v2468
  %v3406 = vmul.f32 %v3232, %v2470
  %v3407 = vmul.f32 %v3236, %v2472
  %v3408 = vmul.f32 %v3240, %v2474
  %v3409 = vmul.f32 %v3244, %v2476
  %v3410 = vmul.f32 %v3248, %v2478
  %v3411 = vmul.f32 %v3252, %v2480
  %v3412 = vmul.f32 %v3256, %v2482
  %v3413 = vmul.f32 %v3260, %v2484
  %v3414 = vmul.f32 %v3264, %v2486
  %v3415 = vmul.f32 %v3268, %v2488
  %v3416 = vmul.f32 %v3272, %v2490
  %v3417 = vmul.f32 %v3276, %v2492
  %v3418 = vmul.f32 %v3280, %v2494
  %v3419 = vmul.f32 %v3284, %v2496
  %v3420 = vmul.f32 %v3288, %v2498
  %v3421 = vmul.f32 %v3292, %v2500
  %v3422 = vmul.f32 %v3296, %v2502
  %v3423 = vmul.f32 %v3300, %v2469
  %v3424 = vmul.f32 %v3304, %v2471
  %v3425 = vmul.f32 %v3308, %v2473
  %v3426 = vmul.f32 %v3312, %v2475
  %v3427 = vmul.f32 %v3316, %v2477
  %v3428 = vmul.f32 %v3320, %v2479
  %v3429 = vmul.f32 %v3324, %v2481
  %v3430 = vmul.f32 %v3328, %v2483
  %v3431 = vmul.f32 %v3332, %v2485
  %v3432 = vmul.f32 %v3336, %v2487
  %v3433 = vmul.f32 %v3340, %v2489
  %v3434 = vmul.f32 %v3344, %v2491
  %v3435 = vmul.f32 %v3348, %v2493
  %v3436 = vmul.f32 %v3352, %v2495
  %v3437 = vmul.f32 %v3356, %v2497
  %v3438 = vmul.f32 %v3360, %v2499
  %v3439 = vmul.f32 %v3364, %v2501
  %v3440 = vmul.f32 %v3368, %v2503
  %v3477 = vlaneseq
  %v3478 = vshrl.u32 %v3477, 7
  %v3479 = vsub.s32 0, %v3478
  %v3480 = vrot.slane %v2586, %v3479
  %v3481 = vlaneseq
  %v3482 = vshrl.u32 %v3481, 7
  %v3483 = vsub.s32 0, %v3482
  %v3484 = vrot.slane %v2587, %v3483
  %v3485 = vlaneseq
  %v3486 = vshrl.u32 %v3485, 7
  %v3487 = vsub.s32 0, %v3486
  %v3488 = vrot.slane %v2588, %v3487
  %v3489 = vlaneseq
  %v3490 = vshrl.u32 %v3489, 7
  %v3491 = vsub.s32 0, %v3490
  %v3492 = vrot.slane %v2589, %v3491
  %v3493 = vlaneseq
  %v3494 = vshrl.u32 %v3493, 7
  %v3495 = vsub.s32 0, %v3494
  %v3496 = vrot.slane %v2590, %v3495
  %v3497 = vlaneseq
  %v3498 = vshrl.u32 %v3497, 7
  %v3499 = vsub.s32 0, %v3498
  %v3500 = vrot.slane %v2591, %v3499
  %v3501 = vlaneseq
  %v3502 = vshrl.u32 %v3501, 7
  %v3503 = vsub.s32 0, %v3502
  %v3504 = vrot.slane %v2592, %v3503
  %v3505 = vlaneseq
  %v3506 = vshrl.u32 %v3505, 7
  %v3507 = vsub.s32 0, %v3506
  %v3508 = vrot.slane %v2593, %v3507
  %v3509 = vlaneseq
  %v3510 = vshrl.u32 %v3509, 7
  %v3511 = vsub.s32 0, %v3510
  %v3512 = vrot.slane %v2594, %v3511
  %v3513 = vlaneseq
  %v3514 = vshrl.u32 %v3513, 7
  %v3515 = vsub.s32 0, %v3514
  %v3516 = vrot.slane %v2604, %v3515
  %v3517 = vlaneseq
  %v3518 = vshrl.u32 %v3517, 7
  %v3519 = vsub.s32 0, %v3518
  %v3520 = vrot.slane %v2605, %v3519
  %v3521 = vlaneseq
  %v3522 = vshrl.u32 %v3521, 7
  %v3523 = vsub.s32 0, %v3522
  %v3524 = vrot.slane %v2606, %v3523
  %v3525 = vlaneseq
  %v3526 = vshrl.u32 %v3525, 7
  %v3527 = vsub.s32 0, %v3526
  %v3528 = vrot.slane %v2607, %v3527
  %v3529 = vlaneseq
  %v3530 = vshrl.u32 %v3529, 7
  %v3531 = vsub.s32 0, %v3530
  %v3532 = vrot.slane %v2608, %v3531
  %v3533 = vlaneseq
  %v3534 = vshrl.u32 %v3533, 7
  %v3535 = vsub.s32 0, %v3534
  %v3536 = vrot.slane %v2609, %v3535
  %v3537 = vlaneseq
  %v3538 = vshrl.u32 %v3537, 7
  %v3539 = vsub.s32 0, %v3538
  %v3540 = vrot.slane %v2610, %v3539
  %v3541 = vlaneseq
  %v3542 = vshrl.u32 %v3541, 7
  %v3543 = vsub.s32 0, %v3542
  %v3544 = vrot.slane %v2611, %v3543
  %v3545 = vlaneseq
  %v3546 = vshrl.u32 %v3545, 7
  %v3547 = vsub.s32 0, %v3546
  %v3548 = vrot.slane %v2612, %v3547
  %v3549 = vlaneseq
  %v3550 = vshrl.u32 %v3549, 7
  %v3551 = vsub.s32 0, %v3550
  %v3552 = vrot.slane %v2622, %v3551
  %v3553 = vlaneseq
  %v3554 = vshrl.u32 %v3553, 7
  %v3555 = vsub.s32 0, %v3554
  %v3556 = vrot.slane %v2623, %v3555
  %v3557 = vlaneseq
  %v3558 = vshrl.u32 %v3557, 7
  %v3559 = vsub.s32 0, %v3558
  %v3560 = vrot.slane %v2624, %v3559
  %v3561 = vlaneseq
  %v3562 = vshrl.u32 %v3561, 7
  %v3563 = vsub.s32 0, %v3562
  %v3564 = vrot.slane %v2625, %v3563
  %v3565 = vlaneseq
  %v3566 = vshrl.u32 %v3565, 7
  %v3567 = vsub.s32 0, %v3566
  %v3568 = vrot.slane %v2626, %v3567
  %v3569 = vlaneseq
  %v3570 = vshrl.u32 %v3569, 7
  %v3571 = vsub.s32 0, %v3570
  %v3572 = vrot.slane %v2627, %v3571
  %v3573 = vlaneseq
  %v3574 = vshrl.u32 %v3573, 7
  %v3575 = vsub.s32 0, %v3574
  %v3576 = vrot.slane %v2628, %v3575
  %v3577 = vlaneseq
  %v3578 = vshrl.u32 %v3577, 7
  %v3579 = vsub.s32 0, %v3578
  %v3580 = vrot.slane %v2629, %v3579
  %v3581 = vlaneseq
  %v3582 = vshrl.u32 %v3581, 7
  %v3583 = vsub.s32 0, %v3582
  %v3584 = vrot.slane %v2630, %v3583
  %v3585 = vlaneseq
  %v3586 = vshrl.u32 %v3585, 7
  %v3587 = vsub.s32 0, %v3586
  %v3588 = vrot.slane %v2640, %v3587
  %v3589 = vlaneseq
  %v3590 = vshrl.u32 %v3589, 7
  %v3591 = vsub.s32 0, %v3590
  %v3592 = vrot.slane %v2641, %v3591
  %v3593 = vlaneseq
  %v3594 = vshrl.u32 %v3593, 7
  %v3595 = vsub.s32 0, %v3594
  %v3596 = vrot.slane %v2642, %v3595
  %v3597 = vlaneseq
  %v3598 = vshrl.u32 %v3597, 7
  %v3599 = vsub.s32 0, %v3598
  %v3600 = vrot.slane %v2643, %v3599
  %v3601 = vlaneseq
  %v3602 = vshrl.u32 %v3601, 7
  %v3603 = vsub.s32 0, %v3602
  %v3604 = vrot.slane %v2644, %v3603
  %v3605 = vlaneseq
  %v3606 = vshrl.u32 %v3605, 7
  %v3607 = vsub.s32 0, %v3606
  %v3608 = vrot.slane %v2645, %v3607
  %v3609 = vlaneseq
  %v3610 = vshrl.u32 %v3609, 7
  %v3611 = vsub.s32 0, %v3610
  %v3612 = vrot.slane %v2646, %v3611
  %v3613 = vlaneseq
  %v3614 = vshrl.u32 %v3613, 7
  %v3615 = vsub.s32 0, %v3614
  %v3616 = vrot.slane %v2647, %v3615
  %v3617 = vlaneseq
  %v3618 = vshrl.u32 %v3617, 7
  %v3619 = vsub.s32 0, %v3618
  %v3620 = vrot.slane %v2648, %v3619
  %v3657 = vmul.f32 %v3480, %v1928
  %v3658 = vmul.f32 %v3484, %v1930
  %v3659 = vmul.f32 %v3488, %v1932
  %v3660 = vmul.f32 %v3492, %v1934
  %v3661 = vmul.f32 %v3496, %v1936
  %v3662 = vmul.f32 %v3500, %v1938
  %v3663 = vmul.f32 %v3504, %v1940
  %v3664 = vmul.f32 %v3508, %v1942
  %v3665 = vmul.f32 %v3512, %v1944
  %v3666 = vmul.f32 %v3516, %v1946
  %v3667 = vmul.f32 %v3520, %v1948
  %v3668 = vmul.f32 %v3524, %v1950
  %v3669 = vmul.f32 %v3528, %v1952
  %v3670 = vmul.f32 %v3532, %v1954
  %v3671 = vmul.f32 %v3536, %v1956
  %v3672 = vmul.f32 %v3540, %v1958
  %v3673 = vmul.f32 %v3544, %v1960
  %v3674 = vmul.f32 %v3548, %v1962
  %v3675 = vmul.f32 %v3552, %v1929
  %v3676 = vmul.f32 %v3556, %v1931
  %v3677 = vmul.f32 %v3560, %v1933
  %v3678 = vmul.f32 %v3564, %v1935
  %v3679 = vmul.f32 %v3568, %v1937
  %v3680 = vmul.f32 %v3572, %v1939
  %v3681 = vmul.f32 %v3576, %v1941
  %v3682 = vmul.f32 %v3580, %v1943
  %v3683 = vmul.f32 %v3584, %v1945
  %v3684 = vmul.f32 %v3588, %v1947
  %v3685 = vmul.f32 %v3592, %v1949
  %v3686 = vmul.f32 %v3596, %v1951
  %v3687 = vmul.f32 %v3600, %v1953
  %v3688 = vmul.f32 %v3604, %v1955
  %v3689 = vmul.f32 %v3608, %v1957
  %v3690 = vmul.f32 %v3612, %v1959
  %v3691 = vmul.f32 %v3616, %v1961
  %v3692 = vmul.f32 %v3620, %v1963
  %v3693 = vadd.f32 %v3405, %v3657
  %v3694 = vadd.f32 %v3406, %v3658
  %v3695 = vadd.f32 %v3407, %v3659
  %v3696 = vadd.f32 %v3408, %v3660
  %v3697 = vadd.f32 %v3409, %v3661
  %v3698 = vadd.f32 %v3410, %v3662
  %v3699 = vadd.f32 %v3411, %v3663
  %v3700 = vadd.f32 %v3412, %v3664
  %v3701 = vadd.f32 %v3413, %v3665
  %v3702 = vadd.f32 %v3414, %v3666
  %v3703 = vadd.f32 %v3415, %v3667
  %v3704 = vadd.f32 %v3416, %v3668
  %v3705 = vadd.f32 %v3417, %v3669
  %v3706 = vadd.f32 %v3418, %v3670
  %v3707 = vadd.f32 %v3419, %v3671
  %v3708 = vadd.f32 %v3420, %v3672
  %v3709 = vadd.f32 %v3421, %v3673
  %v3710 = vadd.f32 %v3422, %v3674
  %v3711 = vadd.f32 %v3423, %v3675
  %v3712 = vadd.f32 %v3424, %v3676
  %v3713 = vadd.f32 %v3425, %v3677
  %v3714 = vadd.f32 %v3426, %v3678
  %v3715 = vadd.f32 %v3427, %v3679
  %v3716 = vadd.f32 %v3428, %v3680
  %v3717 = vadd.f32 %v3429, %v3681
  %v3718 = vadd.f32 %v3430, %v3682
  %v3719 = vadd.f32 %v3431, %v3683
  %v3720 = vadd.f32 %v3432, %v3684
  %v3721 = vadd.f32 %v3433, %v3685
  %v3722 = vadd.f32 %v3434, %v3686
  %v3723 = vadd.f32 %v3435, %v3687
  %v3724 = vadd.f32 %v3436, %v3688
  %v3725 = vadd.f32 %v3437, %v3689
  %v3726 = vadd.f32 %v3438, %v3690
  %v3727 = vadd.f32 %v3439, %v3691
  %v3728 = vadd.f32 %v3440, %v3692
  %s3729 = scalar_lea.vmem %s2, 144
  %v3730 = vld [vmem:[%s3729] sm:$0x1]
  %v3731 = vld [vmem:[%s3729 + $0x1] sm:$0x1]
  %v3732 = vld [vmem:[%s3729 + $0x2] sm:$0x1]
  %v3733 = vld [vmem:[%s3729 + $0x3] sm:$0x1]
  %v3734 = vld [vmem:[%s3729 + $0x4] sm:$0x1]
  %v3735 = vld [vmem:[%s3729 + $0x5] sm:$0x1]
  %v3736 = vld [vmem:[%s3729 + $0x6] sm:$0x1]
  %v3737 = vld [vmem:[%s3729 + $0x7] sm:$0x1]
  %v3738 = vld [vmem:[%s3729 + $0x8] sm:$0x1]
  %v3739 = vld [vmem:[%s3729 + $0x9] sm:$0x1]
  %v3740 = vld [vmem:[%s3729 + $0xa] sm:$0x1]
  %v3741 = vld [vmem:[%s3729 + $0xb] sm:$0x1]
  %v3742 = vld [vmem:[%s3729 + $0xc] sm:$0x1]
  %v3743 = vld [vmem:[%s3729 + $0xd] sm:$0x1]
  %v3744 = vld [vmem:[%s3729 + $0xe] sm:$0x1]
  %v3745 = vld [vmem:[%s3729 + $0xf] sm:$0x1]
  %v3746 = vld [vmem:[%s3729 + $0x10] sm:$0x1]
  %v3747 = vld [vmem:[%s3729 + $0x11] sm:$0x1]
  %v3748 = vld [vmem:[%s3729 + $0x12] sm:$0x1]
  %v3749 = vld [vmem:[%s3729 + $0x13] sm:$0x1]
  %v3750 = vld [vmem:[%s3729 + $0x14] sm:$0x1]
  %v3751 = vld [vmem:[%s3729 + $0x15] sm:$0x1]
  %v3752 = vld [vmem:[%s3729 + $0x16] sm:$0x1]
  %v3753 = vld [vmem:[%s3729 + $0x17] sm:$0x1]
  %v3754 = vld [vmem:[%s3729 + $0x18] sm:$0x1]
  %v3755 = vld [vmem:[%s3729 + $0x19] sm:$0x1]
  %v3756 = vld [vmem:[%s3729 + $0x1a] sm:$0x1]
  %v3757 = vld [vmem:[%s3729 + $0x1b] sm:$0x1]
  %v3758 = vld [vmem:[%s3729 + $0x1c] sm:$0x1]
  %v3759 = vld [vmem:[%s3729 + $0x1d] sm:$0x1]
  %v3760 = vld [vmem:[%s3729 + $0x1e] sm:$0x1]
  %v3761 = vld [vmem:[%s3729 + $0x1f] sm:$0x1]
  %v3762 = vld [vmem:[%s3729 + $0x20] sm:$0x1]
  %v3763 = vld [vmem:[%s3729 + $0x21] sm:$0x1]
  %v3764 = vld [vmem:[%s3729 + $0x22] sm:$0x1]
  %v3765 = vld [vmem:[%s3729 + $0x23] sm:$0x1]
  %v3766 = vld [vmem:[%s3729 + $0x24] sm:$0x1]
  %v3767 = vld [vmem:[%s3729 + $0x25] sm:$0x1]
  %v3768 = vld [vmem:[%s3729 + $0x26] sm:$0x1]
  %v3769 = vld [vmem:[%s3729 + $0x27] sm:$0x1]
  %v3770 = vld [vmem:[%s3729 + $0x28] sm:$0x1]
  %v3771 = vld [vmem:[%s3729 + $0x29] sm:$0x1]
  %v3772 = vld [vmem:[%s3729 + $0x2a] sm:$0x1]
  %v3773 = vld [vmem:[%s3729 + $0x2b] sm:$0x1]
  %v3774 = vld [vmem:[%s3729 + $0x2c] sm:$0x1]
  %v3775 = vld [vmem:[%s3729 + $0x2d] sm:$0x1]
  %v3776 = vld [vmem:[%s3729 + $0x2e] sm:$0x1]
  %v3777 = vld [vmem:[%s3729 + $0x2f] sm:$0x1]
  %v3778 = vld [vmem:[%s3729 + $0x30] sm:$0x1]
  %v3779 = vld [vmem:[%s3729 + $0x31] sm:$0x1]
  %v3780 = vld [vmem:[%s3729 + $0x32] sm:$0x1]
  %v3781 = vld [vmem:[%s3729 + $0x33] sm:$0x1]
  %v3782 = vld [vmem:[%s3729 + $0x34] sm:$0x1]
  %v3783 = vld [vmem:[%s3729 + $0x35] sm:$0x1]
  %v3784 = vld [vmem:[%s3729 + $0x36] sm:$0x1]
  %v3785 = vld [vmem:[%s3729 + $0x37] sm:$0x1]
  %v3786 = vld [vmem:[%s3729 + $0x38] sm:$0x1]
  %v3787 = vld [vmem:[%s3729 + $0x39] sm:$0x1]
  %v3788 = vld [vmem:[%s3729 + $0x3a] sm:$0x1]
  %v3789 = vld [vmem:[%s3729 + $0x3b] sm:$0x1]
  %v3790 = vld [vmem:[%s3729 + $0x3c] sm:$0x1]
  %v3791 = vld [vmem:[%s3729 + $0x3d] sm:$0x1]
  %v3792 = vld [vmem:[%s3729 + $0x3e] sm:$0x1]
  %v3793 = vld [vmem:[%s3729 + $0x3f] sm:$0x1]
  %v3794 = vld [vmem:[%s3729 + $0x40] sm:$0x1]
  %v3795 = vld [vmem:[%s3729 + $0x41] sm:$0x1]
  %v3796 = vld [vmem:[%s3729 + $0x42] sm:$0x1]
  %v3797 = vld [vmem:[%s3729 + $0x43] sm:$0x1]
  %v3798 = vld [vmem:[%s3729 + $0x44] sm:$0x1]
  %v3799 = vld [vmem:[%s3729 + $0x45] sm:$0x1]
  %v3800 = vld [vmem:[%s3729 + $0x46] sm:$0x1]
  %v3801 = vld [vmem:[%s3729 + $0x47] sm:$0x1]
  %s3802 = scalar_lea.vmem %s2, 216
  %v3803 = vld [vmem:[%s3802] sm:$0x1]
  %v3804 = vld [vmem:[%s3802 + $0x1] sm:$0x1]
  %v3805 = vld [vmem:[%s3802 + $0x2] sm:$0x1]
  %v3806 = vld [vmem:[%s3802 + $0x3] sm:$0x1]
  %v3807 = vld [vmem:[%s3802 + $0x4] sm:$0x1]
  %v3808 = vld [vmem:[%s3802 + $0x5] sm:$0x1]
  %v3809 = vld [vmem:[%s3802 + $0x6] sm:$0x1]
  %v3810 = vld [vmem:[%s3802 + $0x7] sm:$0x1]
  %v3811 = vld [vmem:[%s3802 + $0x8] sm:$0x1]
  %v3812 = vld [vmem:[%s3802 + $0x9] sm:$0x1]
  %v3813 = vld [vmem:[%s3802 + $0xa] sm:$0x1]
  %v3814 = vld [vmem:[%s3802 + $0xb] sm:$0x1]
  %v3815 = vld [vmem:[%s3802 + $0xc] sm:$0x1]
  %v3816 = vld [vmem:[%s3802 + $0xd] sm:$0x1]
  %v3817 = vld [vmem:[%s3802 + $0xe] sm:$0x1]
  %v3818 = vld [vmem:[%s3802 + $0xf] sm:$0x1]
  %v3819 = vld [vmem:[%s3802 + $0x10] sm:$0x1]
  %v3820 = vld [vmem:[%s3802 + $0x11] sm:$0x1]
  %v3821 = vld [vmem:[%s3802 + $0x12] sm:$0x1]
  %v3822 = vld [vmem:[%s3802 + $0x13] sm:$0x1]
  %v3823 = vld [vmem:[%s3802 + $0x14] sm:$0x1]
  %v3824 = vld [vmem:[%s3802 + $0x15] sm:$0x1]
  %v3825 = vld [vmem:[%s3802 + $0x16] sm:$0x1]
  %v3826 = vld [vmem:[%s3802 + $0x17] sm:$0x1]
  %v3827 = vld [vmem:[%s3802 + $0x18] sm:$0x1]
  %v3828 = vld [vmem:[%s3802 + $0x19] sm:$0x1]
  %v3829 = vld [vmem:[%s3802 + $0x1a] sm:$0x1]
  %v3830 = vld [vmem:[%s3802 + $0x1b] sm:$0x1]
  %v3831 = vld [vmem:[%s3802 + $0x1c] sm:$0x1]
  %v3832 = vld [vmem:[%s3802 + $0x1d] sm:$0x1]
  %v3833 = vld [vmem:[%s3802 + $0x1e] sm:$0x1]
  %v3834 = vld [vmem:[%s3802 + $0x1f] sm:$0x1]
  %v3835 = vld [vmem:[%s3802 + $0x20] sm:$0x1]
  %v3836 = vld [vmem:[%s3802 + $0x21] sm:$0x1]
  %v3837 = vld [vmem:[%s3802 + $0x22] sm:$0x1]
  %v3838 = vld [vmem:[%s3802 + $0x23] sm:$0x1]
  %v3839 = vld [vmem:[%s3802 + $0x24] sm:$0x1]
  %v3840 = vld [vmem:[%s3802 + $0x25] sm:$0x1]
  %v3841 = vld [vmem:[%s3802 + $0x26] sm:$0x1]
  %v3842 = vld [vmem:[%s3802 + $0x27] sm:$0x1]
  %v3843 = vld [vmem:[%s3802 + $0x28] sm:$0x1]
  %v3844 = vld [vmem:[%s3802 + $0x29] sm:$0x1]
  %v3845 = vld [vmem:[%s3802 + $0x2a] sm:$0x1]
  %v3846 = vld [vmem:[%s3802 + $0x2b] sm:$0x1]
  %v3847 = vld [vmem:[%s3802 + $0x2c] sm:$0x1]
  %v3848 = vld [vmem:[%s3802 + $0x2d] sm:$0x1]
  %v3849 = vld [vmem:[%s3802 + $0x2e] sm:$0x1]
  %v3850 = vld [vmem:[%s3802 + $0x2f] sm:$0x1]
  %v3851 = vld [vmem:[%s3802 + $0x30] sm:$0x1]
  %v3852 = vld [vmem:[%s3802 + $0x31] sm:$0x1]
  %v3853 = vld [vmem:[%s3802 + $0x32] sm:$0x1]
  %v3854 = vld [vmem:[%s3802 + $0x33] sm:$0x1]
  %v3855 = vld [vmem:[%s3802 + $0x34] sm:$0x1]
  %v3856 = vld [vmem:[%s3802 + $0x35] sm:$0x1]
  %v3857 = vld [vmem:[%s3802 + $0x36] sm:$0x1]
  %v3858 = vld [vmem:[%s3802 + $0x37] sm:$0x1]
  %v3859 = vld [vmem:[%s3802 + $0x38] sm:$0x1]
  %v3860 = vld [vmem:[%s3802 + $0x39] sm:$0x1]
  %v3861 = vld [vmem:[%s3802 + $0x3a] sm:$0x1]
  %v3862 = vld [vmem:[%s3802 + $0x3b] sm:$0x1]
  %v3863 = vld [vmem:[%s3802 + $0x3c] sm:$0x1]
  %v3864 = vld [vmem:[%s3802 + $0x3d] sm:$0x1]
  %v3865 = vld [vmem:[%s3802 + $0x3e] sm:$0x1]
  %v3866 = vld [vmem:[%s3802 + $0x3f] sm:$0x1]
  %v3867 = vld [vmem:[%s3802 + $0x40] sm:$0x1]
  %v3868 = vld [vmem:[%s3802 + $0x41] sm:$0x1]
  %v3869 = vld [vmem:[%s3802 + $0x42] sm:$0x1]
  %v3870 = vld [vmem:[%s3802 + $0x43] sm:$0x1]
  %v3871 = vld [vmem:[%s3802 + $0x44] sm:$0x1]
  %v3872 = vld [vmem:[%s3802 + $0x45] sm:$0x1]
  %v3873 = vld [vmem:[%s3802 + $0x46] sm:$0x1]
  %v3874 = vld [vmem:[%s3802 + $0x47] sm:$0x1]
  %v3911 = vlaneseq
  %v3912 = vshrl.u32 %v3911, 7
  %v3913 = vsub.s32 0, %v3912
  %v3914 = vrot.slane %v3730, %v3913
  %v3915 = vlaneseq
  %v3916 = vshrl.u32 %v3915, 7
  %v3917 = vsub.s32 0, %v3916
  %v3918 = vrot.slane %v3731, %v3917
  %v3919 = vlaneseq
  %v3920 = vshrl.u32 %v3919, 7
  %v3921 = vsub.s32 0, %v3920
  %v3922 = vrot.slane %v3732, %v3921
  %v3923 = vlaneseq
  %v3924 = vshrl.u32 %v3923, 7
  %v3925 = vsub.s32 0, %v3924
  %v3926 = vrot.slane %v3733, %v3925
  %v3927 = vlaneseq
  %v3928 = vshrl.u32 %v3927, 7
  %v3929 = vsub.s32 0, %v3928
  %v3930 = vrot.slane %v3734, %v3929
  %v3931 = vlaneseq
  %v3932 = vshrl.u32 %v3931, 7
  %v3933 = vsub.s32 0, %v3932
  %v3934 = vrot.slane %v3735, %v3933
  %v3935 = vlaneseq
  %v3936 = vshrl.u32 %v3935, 7
  %v3937 = vsub.s32 0, %v3936
  %v3938 = vrot.slane %v3736, %v3937
  %v3939 = vlaneseq
  %v3940 = vshrl.u32 %v3939, 7
  %v3941 = vsub.s32 0, %v3940
  %v3942 = vrot.slane %v3737, %v3941
  %v3943 = vlaneseq
  %v3944 = vshrl.u32 %v3943, 7
  %v3945 = vsub.s32 0, %v3944
  %v3946 = vrot.slane %v3738, %v3945
  %v3947 = vlaneseq
  %v3948 = vshrl.u32 %v3947, 7
  %v3949 = vsub.s32 0, %v3948
  %v3950 = vrot.slane %v3739, %v3949
  %v3951 = vlaneseq
  %v3952 = vshrl.u32 %v3951, 7
  %v3953 = vsub.s32 0, %v3952
  %v3954 = vrot.slane %v3740, %v3953
  %v3955 = vlaneseq
  %v3956 = vshrl.u32 %v3955, 7
  %v3957 = vsub.s32 0, %v3956
  %v3958 = vrot.slane %v3741, %v3957
  %v3959 = vlaneseq
  %v3960 = vshrl.u32 %v3959, 7
  %v3961 = vsub.s32 0, %v3960
  %v3962 = vrot.slane %v3742, %v3961
  %v3963 = vlaneseq
  %v3964 = vshrl.u32 %v3963, 7
  %v3965 = vsub.s32 0, %v3964
  %v3966 = vrot.slane %v3743, %v3965
  %v3967 = vlaneseq
  %v3968 = vshrl.u32 %v3967, 7
  %v3969 = vsub.s32 0, %v3968
  %v3970 = vrot.slane %v3744, %v3969
  %v3971 = vlaneseq
  %v3972 = vshrl.u32 %v3971, 7
  %v3973 = vsub.s32 0, %v3972
  %v3974 = vrot.slane %v3745, %v3973
  %v3975 = vlaneseq
  %v3976 = vshrl.u32 %v3975, 7
  %v3977 = vsub.s32 0, %v3976
  %v3978 = vrot.slane %v3746, %v3977
  %v3979 = vlaneseq
  %v3980 = vshrl.u32 %v3979, 7
  %v3981 = vsub.s32 0, %v3980
  %v3982 = vrot.slane %v3747, %v3981
  %v3983 = vlaneseq
  %v3984 = vshrl.u32 %v3983, 7
  %v3985 = vsub.s32 0, %v3984
  %v3986 = vrot.slane %v3766, %v3985
  %v3987 = vlaneseq
  %v3988 = vshrl.u32 %v3987, 7
  %v3989 = vsub.s32 0, %v3988
  %v3990 = vrot.slane %v3767, %v3989
  %v3991 = vlaneseq
  %v3992 = vshrl.u32 %v3991, 7
  %v3993 = vsub.s32 0, %v3992
  %v3994 = vrot.slane %v3768, %v3993
  %v3995 = vlaneseq
  %v3996 = vshrl.u32 %v3995, 7
  %v3997 = vsub.s32 0, %v3996
  %v3998 = vrot.slane %v3769, %v3997
  %v3999 = vlaneseq
  %v4000 = vshrl.u32 %v3999, 7
  %v4001 = vsub.s32 0, %v4000
  %v4002 = vrot.slane %v3770, %v4001
  %v4003 = vlaneseq
  %v4004 = vshrl.u32 %v4003, 7
  %v4005 = vsub.s32 0, %v4004
  %v4006 = vrot.slane %v3771, %v4005
  %v4007 = vlaneseq
  %v4008 = vshrl.u32 %v4007, 7
  %v4009 = vsub.s32 0, %v4008
  %v4010 = vrot.slane %v3772, %v4009
  %v4011 = vlaneseq
  %v4012 = vshrl.u32 %v4011, 7
  %v4013 = vsub.s32 0, %v4012
  %v4014 = vrot.slane %v3773, %v4013
  %v4015 = vlaneseq
  %v4016 = vshrl.u32 %v4015, 7
  %v4017 = vsub.s32 0, %v4016
  %v4018 = vrot.slane %v3774, %v4017
  %v4019 = vlaneseq
  %v4020 = vshrl.u32 %v4019, 7
  %v4021 = vsub.s32 0, %v4020
  %v4022 = vrot.slane %v3775, %v4021
  %v4023 = vlaneseq
  %v4024 = vshrl.u32 %v4023, 7
  %v4025 = vsub.s32 0, %v4024
  %v4026 = vrot.slane %v3776, %v4025
  %v4027 = vlaneseq
  %v4028 = vshrl.u32 %v4027, 7
  %v4029 = vsub.s32 0, %v4028
  %v4030 = vrot.slane %v3777, %v4029
  %v4031 = vlaneseq
  %v4032 = vshrl.u32 %v4031, 7
  %v4033 = vsub.s32 0, %v4032
  %v4034 = vrot.slane %v3778, %v4033
  %v4035 = vlaneseq
  %v4036 = vshrl.u32 %v4035, 7
  %v4037 = vsub.s32 0, %v4036
  %v4038 = vrot.slane %v3779, %v4037
  %v4039 = vlaneseq
  %v4040 = vshrl.u32 %v4039, 7
  %v4041 = vsub.s32 0, %v4040
  %v4042 = vrot.slane %v3780, %v4041
  %v4043 = vlaneseq
  %v4044 = vshrl.u32 %v4043, 7
  %v4045 = vsub.s32 0, %v4044
  %v4046 = vrot.slane %v3781, %v4045
  %v4047 = vlaneseq
  %v4048 = vshrl.u32 %v4047, 7
  %v4049 = vsub.s32 0, %v4048
  %v4050 = vrot.slane %v3782, %v4049
  %v4051 = vlaneseq
  %v4052 = vshrl.u32 %v4051, 7
  %v4053 = vsub.s32 0, %v4052
  %v4054 = vrot.slane %v3783, %v4053
  %v4091 = vmul.f32 %v3914, %v3153
  %v4092 = vmul.f32 %v3918, %v3154
  %v4093 = vmul.f32 %v3922, %v3155
  %v4094 = vmul.f32 %v3926, %v3156
  %v4095 = vmul.f32 %v3930, %v3157
  %v4096 = vmul.f32 %v3934, %v3158
  %v4097 = vmul.f32 %v3938, %v3159
  %v4098 = vmul.f32 %v3942, %v3160
  %v4099 = vmul.f32 %v3946, %v3161
  %v4100 = vmul.f32 %v3950, %v3693
  %v4101 = vmul.f32 %v3954, %v3694
  %v4102 = vmul.f32 %v3958, %v3695
  %v4103 = vmul.f32 %v3962, %v3696
  %v4104 = vmul.f32 %v3966, %v3697
  %v4105 = vmul.f32 %v3970, %v3698
  %v4106 = vmul.f32 %v3974, %v3699
  %v4107 = vmul.f32 %v3978, %v3700
  %v4108 = vmul.f32 %v3982, %v3701
  %v4109 = vmul.f32 %v3986, %v3171
  %v4110 = vmul.f32 %v3990, %v3172
  %v4111 = vmul.f32 %v3994, %v3173
  %v4112 = vmul.f32 %v3998, %v3174
  %v4113 = vmul.f32 %v4002, %v3175
  %v4114 = vmul.f32 %v4006, %v3176
  %v4115 = vmul.f32 %v4010, %v3177
  %v4116 = vmul.f32 %v4014, %v3178
  %v4117 = vmul.f32 %v4018, %v3179
  %v4118 = vmul.f32 %v4022, %v3711
  %v4119 = vmul.f32 %v4026, %v3712
  %v4120 = vmul.f32 %v4030, %v3713
  %v4121 = vmul.f32 %v4034, %v3714
  %v4122 = vmul.f32 %v4038, %v3715
  %v4123 = vmul.f32 %v4042, %v3716
  %v4124 = vmul.f32 %v4046, %v3717
  %v4125 = vmul.f32 %v4050, %v3718
  %v4126 = vmul.f32 %v4054, %v3719
  %v4163 = vlaneseq
  %v4164 = vshrl.u32 %v4163, 7
  %v4165 = vsub.s32 0, %v4164
  %v4166 = vrot.slane %v3803, %v4165
  %v4167 = vlaneseq
  %v4168 = vshrl.u32 %v4167, 7
  %v4169 = vsub.s32 0, %v4168
  %v4170 = vrot.slane %v3804, %v4169
  %v4171 = vlaneseq
  %v4172 = vshrl.u32 %v4171, 7
  %v4173 = vsub.s32 0, %v4172
  %v4174 = vrot.slane %v3805, %v4173
  %v4175 = vlaneseq
  %v4176 = vshrl.u32 %v4175, 7
  %v4177 = vsub.s32 0, %v4176
  %v4178 = vrot.slane %v3806, %v4177
  %v4179 = vlaneseq
  %v4180 = vshrl.u32 %v4179, 7
  %v4181 = vsub.s32 0, %v4180
  %v4182 = vrot.slane %v3807, %v4181
  %v4183 = vlaneseq
  %v4184 = vshrl.u32 %v4183, 7
  %v4185 = vsub.s32 0, %v4184
  %v4186 = vrot.slane %v3808, %v4185
  %v4187 = vlaneseq
  %v4188 = vshrl.u32 %v4187, 7
  %v4189 = vsub.s32 0, %v4188
  %v4190 = vrot.slane %v3809, %v4189
  %v4191 = vlaneseq
  %v4192 = vshrl.u32 %v4191, 7
  %v4193 = vsub.s32 0, %v4192
  %v4194 = vrot.slane %v3810, %v4193
  %v4195 = vlaneseq
  %v4196 = vshrl.u32 %v4195, 7
  %v4197 = vsub.s32 0, %v4196
  %v4198 = vrot.slane %v3811, %v4197
  %v4199 = vlaneseq
  %v4200 = vshrl.u32 %v4199, 7
  %v4201 = vsub.s32 0, %v4200
  %v4202 = vrot.slane %v3812, %v4201
  %v4203 = vlaneseq
  %v4204 = vshrl.u32 %v4203, 7
  %v4205 = vsub.s32 0, %v4204
  %v4206 = vrot.slane %v3813, %v4205
  %v4207 = vlaneseq
  %v4208 = vshrl.u32 %v4207, 7
  %v4209 = vsub.s32 0, %v4208
  %v4210 = vrot.slane %v3814, %v4209
  %v4211 = vlaneseq
  %v4212 = vshrl.u32 %v4211, 7
  %v4213 = vsub.s32 0, %v4212
  %v4214 = vrot.slane %v3815, %v4213
  %v4215 = vlaneseq
  %v4216 = vshrl.u32 %v4215, 7
  %v4217 = vsub.s32 0, %v4216
  %v4218 = vrot.slane %v3816, %v4217
  %v4219 = vlaneseq
  %v4220 = vshrl.u32 %v4219, 7
  %v4221 = vsub.s32 0, %v4220
  %v4222 = vrot.slane %v3817, %v4221
  %v4223 = vlaneseq
  %v4224 = vshrl.u32 %v4223, 7
  %v4225 = vsub.s32 0, %v4224
  %v4226 = vrot.slane %v3818, %v4225
  %v4227 = vlaneseq
  %v4228 = vshrl.u32 %v4227, 7
  %v4229 = vsub.s32 0, %v4228
  %v4230 = vrot.slane %v3819, %v4229
  %v4231 = vlaneseq
  %v4232 = vshrl.u32 %v4231, 7
  %v4233 = vsub.s32 0, %v4232
  %v4234 = vrot.slane %v3820, %v4233
  %v4235 = vlaneseq
  %v4236 = vshrl.u32 %v4235, 7
  %v4237 = vsub.s32 0, %v4236
  %v4238 = vrot.slane %v3839, %v4237
  %v4239 = vlaneseq
  %v4240 = vshrl.u32 %v4239, 7
  %v4241 = vsub.s32 0, %v4240
  %v4242 = vrot.slane %v3840, %v4241
  %v4243 = vlaneseq
  %v4244 = vshrl.u32 %v4243, 7
  %v4245 = vsub.s32 0, %v4244
  %v4246 = vrot.slane %v3841, %v4245
  %v4247 = vlaneseq
  %v4248 = vshrl.u32 %v4247, 7
  %v4249 = vsub.s32 0, %v4248
  %v4250 = vrot.slane %v3842, %v4249
  %v4251 = vlaneseq
  %v4252 = vshrl.u32 %v4251, 7
  %v4253 = vsub.s32 0, %v4252
  %v4254 = vrot.slane %v3843, %v4253
  %v4255 = vlaneseq
  %v4256 = vshrl.u32 %v4255, 7
  %v4257 = vsub.s32 0, %v4256
  %v4258 = vrot.slane %v3844, %v4257
  %v4259 = vlaneseq
  %v4260 = vshrl.u32 %v4259, 7
  %v4261 = vsub.s32 0, %v4260
  %v4262 = vrot.slane %v3845, %v4261
  %v4263 = vlaneseq
  %v4264 = vshrl.u32 %v4263, 7
  %v4265 = vsub.s32 0, %v4264
  %v4266 = vrot.slane %v3846, %v4265
  %v4267 = vlaneseq
  %v4268 = vshrl.u32 %v4267, 7
  %v4269 = vsub.s32 0, %v4268
  %v4270 = vrot.slane %v3847, %v4269
  %v4271 = vlaneseq
  %v4272 = vshrl.u32 %v4271, 7
  %v4273 = vsub.s32 0, %v4272
  %v4274 = vrot.slane %v3848, %v4273
  %v4275 = vlaneseq
  %v4276 = vshrl.u32 %v4275, 7
  %v4277 = vsub.s32 0, %v4276
  %v4278 = vrot.slane %v3849, %v4277
  %v4279 = vlaneseq
  %v4280 = vshrl.u32 %v4279, 7
  %v4281 = vsub.s32 0, %v4280
  %v4282 = vrot.slane %v3850, %v4281
  %v4283 = vlaneseq
  %v4284 = vshrl.u32 %v4283, 7
  %v4285 = vsub.s32 0, %v4284
  %v4286 = vrot.slane %v3851, %v4285
  %v4287 = vlaneseq
  %v4288 = vshrl.u32 %v4287, 7
  %v4289 = vsub.s32 0, %v4288
  %v4290 = vrot.slane %v3852, %v4289
  %v4291 = vlaneseq
  %v4292 = vshrl.u32 %v4291, 7
  %v4293 = vsub.s32 0, %v4292
  %v4294 = vrot.slane %v3853, %v4293
  %v4295 = vlaneseq
  %v4296 = vshrl.u32 %v4295, 7
  %v4297 = vsub.s32 0, %v4296
  %v4298 = vrot.slane %v3854, %v4297
  %v4299 = vlaneseq
  %v4300 = vshrl.u32 %v4299, 7
  %v4301 = vsub.s32 0, %v4300
  %v4302 = vrot.slane %v3855, %v4301
  %v4303 = vlaneseq
  %v4304 = vshrl.u32 %v4303, 7
  %v4305 = vsub.s32 0, %v4304
  %v4306 = vrot.slane %v3856, %v4305
  %v4343 = vmul.f32 %v4166, %v3162
  %v4344 = vmul.f32 %v4170, %v3163
  %v4345 = vmul.f32 %v4174, %v3164
  %v4346 = vmul.f32 %v4178, %v3165
  %v4347 = vmul.f32 %v4182, %v3166
  %v4348 = vmul.f32 %v4186, %v3167
  %v4349 = vmul.f32 %v4190, %v3168
  %v4350 = vmul.f32 %v4194, %v3169
  %v4351 = vmul.f32 %v4198, %v3170
  %v4352 = vmul.f32 %v4202, %v3702
  %v4353 = vmul.f32 %v4206, %v3703
  %v4354 = vmul.f32 %v4210, %v3704
  %v4355 = vmul.f32 %v4214, %v3705
  %v4356 = vmul.f32 %v4218, %v3706
  %v4357 = vmul.f32 %v4222, %v3707
  %v4358 = vmul.f32 %v4226, %v3708
  %v4359 = vmul.f32 %v4230, %v3709
  %v4360 = vmul.f32 %v4234, %v3710
  %v4361 = vmul.f32 %v4238, %v3180
  %v4362 = vmul.f32 %v4242, %v3181
  %v4363 = vmul.f32 %v4246, %v3182
  %v4364 = vmul.f32 %v4250, %v3183
  %v4365 = vmul.f32 %v4254, %v3184
  %v4366 = vmul.f32 %v4258, %v3185
  %v4367 = vmul.f32 %v4262, %v3186
  %v4368 = vmul.f32 %v4266, %v3187
  %v4369 = vmul.f32 %v4270, %v3188
  %v4370 = vmul.f32 %v4274, %v3720
  %v4371 = vmul.f32 %v4278, %v3721
  %v4372 = vmul.f32 %v4282, %v3722
  %v4373 = vmul.f32 %v4286, %v3723
  %v4374 = vmul.f32 %v4290, %v3724
  %v4375 = vmul.f32 %v4294, %v3725
  %v4376 = vmul.f32 %v4298, %v3726
  %v4377 = vmul.f32 %v4302, %v3727
  %v4378 = vmul.f32 %v4306, %v3728
  %v4379 = vadd.f32 %v4091, %v4343
  %v4380 = vadd.f32 %v4092, %v4344
  %v4381 = vadd.f32 %v4093, %v4345
  %v4382 = vadd.f32 %v4094, %v4346
  %v4383 = vadd.f32 %v4095, %v4347
  %v4384 = vadd.f32 %v4096, %v4348
  %v4385 = vadd.f32 %v4097, %v4349
  %v4386 = vadd.f32 %v4098, %v4350
  %v4387 = vadd.f32 %v4099, %v4351
  %v4388 = vadd.f32 %v4100, %v4352
  %v4389 = vadd.f32 %v4101, %v4353
  %v4390 = vadd.f32 %v4102, %v4354
  %v4391 = vadd.f32 %v4103, %v4355
  %v4392 = vadd.f32 %v4104, %v4356
  %v4393 = vadd.f32 %v4105, %v4357
  %v4394 = vadd.f32 %v4106, %v4358
  %v4395 = vadd.f32 %v4107, %v4359
  %v4396 = vadd.f32 %v4108, %v4360
  %v4397 = vadd.f32 %v4109, %v4361
  %v4398 = vadd.f32 %v4110, %v4362
  %v4399 = vadd.f32 %v4111, %v4363
  %v4400 = vadd.f32 %v4112, %v4364
  %v4401 = vadd.f32 %v4113, %v4365
  %v4402 = vadd.f32 %v4114, %v4366
  %v4403 = vadd.f32 %v4115, %v4367
  %v4404 = vadd.f32 %v4116, %v4368
  %v4405 = vadd.f32 %v4117, %v4369
  %v4406 = vadd.f32 %v4118, %v4370
  %v4407 = vadd.f32 %v4119, %v4371
  %v4408 = vadd.f32 %v4120, %v4372
  %v4409 = vadd.f32 %v4121, %v4373
  %v4410 = vadd.f32 %v4122, %v4374
  %v4411 = vadd.f32 %v4123, %v4375
  %v4412 = vadd.f32 %v4124, %v4376
  %v4413 = vadd.f32 %v4125, %v4377
  %v4414 = vadd.f32 %v4126, %v4378
  %v4451 = vlaneseq
  %v4452 = vshrl.u32 %v4451, 7
  %v4453 = vsub.s32 0, %v4452
  %v4454 = vrot.slane %v3748, %v4453
  %v4455 = vlaneseq
  %v4456 = vshrl.u32 %v4455, 7
  %v4457 = vsub.s32 0, %v4456
  %v4458 = vrot.slane %v3749, %v4457
  %v4459 = vlaneseq
  %v4460 = vshrl.u32 %v4459, 7
  %v4461 = vsub.s32 0, %v4460
  %v4462 = vrot.slane %v3750, %v4461
  %v4463 = vlaneseq
  %v4464 = vshrl.u32 %v4463, 7
  %v4465 = vsub.s32 0, %v4464
  %v4466 = vrot.slane %v3751, %v4465
  %v4467 = vlaneseq
  %v4468 = vshrl.u32 %v4467, 7
  %v4469 = vsub.s32 0, %v4468
  %v4470 = vrot.slane %v3752, %v4469
  %v4471 = vlaneseq
  %v4472 = vshrl.u32 %v4471, 7
  %v4473 = vsub.s32 0, %v4472
  %v4474 = vrot.slane %v3753, %v4473
  %v4475 = vlaneseq
  %v4476 = vshrl.u32 %v4475, 7
  %v4477 = vsub.s32 0, %v4476
  %v4478 = vrot.slane %v3754, %v4477
  %v4479 = vlaneseq
  %v4480 = vshrl.u32 %v4479, 7
  %v4481 = vsub.s32 0, %v4480
  %v4482 = vrot.slane %v3755, %v4481
  %v4483 = vlaneseq
  %v4484 = vshrl.u32 %v4483, 7
  %v4485 = vsub.s32 0, %v4484
  %v4486 = vrot.slane %v3756, %v4485
  %v4487 = vlaneseq
  %v4488 = vshrl.u32 %v4487, 7
  %v4489 = vsub.s32 0, %v4488
  %v4490 = vrot.slane %v3757, %v4489
  %v4491 = vlaneseq
  %v4492 = vshrl.u32 %v4491, 7
  %v4493 = vsub.s32 0, %v4492
  %v4494 = vrot.slane %v3758, %v4493
  %v4495 = vlaneseq
  %v4496 = vshrl.u32 %v4495, 7
  %v4497 = vsub.s32 0, %v4496
  %v4498 = vrot.slane %v3759, %v4497
  %v4499 = vlaneseq
  %v4500 = vshrl.u32 %v4499, 7
  %v4501 = vsub.s32 0, %v4500
  %v4502 = vrot.slane %v3760, %v4501
  %v4503 = vlaneseq
  %v4504 = vshrl.u32 %v4503, 7
  %v4505 = vsub.s32 0, %v4504
  %v4506 = vrot.slane %v3761, %v4505
  %v4507 = vlaneseq
  %v4508 = vshrl.u32 %v4507, 7
  %v4509 = vsub.s32 0, %v4508
  %v4510 = vrot.slane %v3762, %v4509
  %v4511 = vlaneseq
  %v4512 = vshrl.u32 %v4511, 7
  %v4513 = vsub.s32 0, %v4512
  %v4514 = vrot.slane %v3763, %v4513
  %v4515 = vlaneseq
  %v4516 = vshrl.u32 %v4515, 7
  %v4517 = vsub.s32 0, %v4516
  %v4518 = vrot.slane %v3764, %v4517
  %v4519 = vlaneseq
  %v4520 = vshrl.u32 %v4519, 7
  %v4521 = vsub.s32 0, %v4520
  %v4522 = vrot.slane %v3765, %v4521
  %v4523 = vlaneseq
  %v4524 = vshrl.u32 %v4523, 7
  %v4525 = vsub.s32 0, %v4524
  %v4526 = vrot.slane %v3784, %v4525
  %v4527 = vlaneseq
  %v4528 = vshrl.u32 %v4527, 7
  %v4529 = vsub.s32 0, %v4528
  %v4530 = vrot.slane %v3785, %v4529
  %v4531 = vlaneseq
  %v4532 = vshrl.u32 %v4531, 7
  %v4533 = vsub.s32 0, %v4532
  %v4534 = vrot.slane %v3786, %v4533
  %v4535 = vlaneseq
  %v4536 = vshrl.u32 %v4535, 7
  %v4537 = vsub.s32 0, %v4536
  %v4538 = vrot.slane %v3787, %v4537
  %v4539 = vlaneseq
  %v4540 = vshrl.u32 %v4539, 7
  %v4541 = vsub.s32 0, %v4540
  %v4542 = vrot.slane %v3788, %v4541
  %v4543 = vlaneseq
  %v4544 = vshrl.u32 %v4543, 7
  %v4545 = vsub.s32 0, %v4544
  %v4546 = vrot.slane %v3789, %v4545
  %v4547 = vlaneseq
  %v4548 = vshrl.u32 %v4547, 7
  %v4549 = vsub.s32 0, %v4548
  %v4550 = vrot.slane %v3790, %v4549
  %v4551 = vlaneseq
  %v4552 = vshrl.u32 %v4551, 7
  %v4553 = vsub.s32 0, %v4552
  %v4554 = vrot.slane %v3791, %v4553
  %v4555 = vlaneseq
  %v4556 = vshrl.u32 %v4555, 7
  %v4557 = vsub.s32 0, %v4556
  %v4558 = vrot.slane %v3792, %v4557
  %v4559 = vlaneseq
  %v4560 = vshrl.u32 %v4559, 7
  %v4561 = vsub.s32 0, %v4560
  %v4562 = vrot.slane %v3793, %v4561
  %v4563 = vlaneseq
  %v4564 = vshrl.u32 %v4563, 7
  %v4565 = vsub.s32 0, %v4564
  %v4566 = vrot.slane %v3794, %v4565
  %v4567 = vlaneseq
  %v4568 = vshrl.u32 %v4567, 7
  %v4569 = vsub.s32 0, %v4568
  %v4570 = vrot.slane %v3795, %v4569
  %v4571 = vlaneseq
  %v4572 = vshrl.u32 %v4571, 7
  %v4573 = vsub.s32 0, %v4572
  %v4574 = vrot.slane %v3796, %v4573
  %v4575 = vlaneseq
  %v4576 = vshrl.u32 %v4575, 7
  %v4577 = vsub.s32 0, %v4576
  %v4578 = vrot.slane %v3797, %v4577
  %v4579 = vlaneseq
  %v4580 = vshrl.u32 %v4579, 7
  %v4581 = vsub.s32 0, %v4580
  %v4582 = vrot.slane %v3798, %v4581
  %v4583 = vlaneseq
  %v4584 = vshrl.u32 %v4583, 7
  %v4585 = vsub.s32 0, %v4584
  %v4586 = vrot.slane %v3799, %v4585
  %v4587 = vlaneseq
  %v4588 = vshrl.u32 %v4587, 7
  %v4589 = vsub.s32 0, %v4588
  %v4590 = vrot.slane %v3800, %v4589
  %v4591 = vlaneseq
  %v4592 = vshrl.u32 %v4591, 7
  %v4593 = vsub.s32 0, %v4592
  %v4594 = vrot.slane %v3801, %v4593
  %v4631 = vmul.f32 %v4454, %v3162
  %v4632 = vmul.f32 %v4458, %v3163
  %v4633 = vmul.f32 %v4462, %v3164
  %v4634 = vmul.f32 %v4466, %v3165
  %v4635 = vmul.f32 %v4470, %v3166
  %v4636 = vmul.f32 %v4474, %v3167
  %v4637 = vmul.f32 %v4478, %v3168
  %v4638 = vmul.f32 %v4482, %v3169
  %v4639 = vmul.f32 %v4486, %v3170
  %v4640 = vmul.f32 %v4490, %v3702
  %v4641 = vmul.f32 %v4494, %v3703
  %v4642 = vmul.f32 %v4498, %v3704
  %v4643 = vmul.f32 %v4502, %v3705
  %v4644 = vmul.f32 %v4506, %v3706
  %v4645 = vmul.f32 %v4510, %v3707
  %v4646 = vmul.f32 %v4514, %v3708
  %v4647 = vmul.f32 %v4518, %v3709
  %v4648 = vmul.f32 %v4522, %v3710
  %v4649 = vmul.f32 %v4526, %v3180
  %v4650 = vmul.f32 %v4530, %v3181
  %v4651 = vmul.f32 %v4534, %v3182
  %v4652 = vmul.f32 %v4538, %v3183
  %v4653 = vmul.f32 %v4542, %v3184
  %v4654 = vmul.f32 %v4546, %v3185
  %v4655 = vmul.f32 %v4550, %v3186
  %v4656 = vmul.f32 %v4554, %v3187
  %v4657 = vmul.f32 %v4558, %v3188
  %v4658 = vmul.f32 %v4562, %v3720
  %v4659 = vmul.f32 %v4566, %v3721
  %v4660 = vmul.f32 %v4570, %v3722
  %v4661 = vmul.f32 %v4574, %v3723
  %v4662 = vmul.f32 %v4578, %v3724
  %v4663 = vmul.f32 %v4582, %v3725
  %v4664 = vmul.f32 %v4586, %v3726
  %v4665 = vmul.f32 %v4590, %v3727
  %v4666 = vmul.f32 %v4594, %v3728
  %v4703 = vlaneseq
  %v4704 = vshrl.u32 %v4703, 7
  %v4705 = vsub.s32 0, %v4704
  %v4706 = vrot.slane %v3821, %v4705
  %v4707 = vlaneseq
  %v4708 = vshrl.u32 %v4707, 7
  %v4709 = vsub.s32 0, %v4708
  %v4710 = vrot.slane %v3822, %v4709
  %v4711 = vlaneseq
  %v4712 = vshrl.u32 %v4711, 7
  %v4713 = vsub.s32 0, %v4712
  %v4714 = vrot.slane %v3823, %v4713
  %v4715 = vlaneseq
  %v4716 = vshrl.u32 %v4715, 7
  %v4717 = vsub.s32 0, %v4716
  %v4718 = vrot.slane %v3824, %v4717
  %v4719 = vlaneseq
  %v4720 = vshrl.u32 %v4719, 7
  %v4721 = vsub.s32 0, %v4720
  %v4722 = vrot.slane %v3825, %v4721
  %v4723 = vlaneseq
  %v4724 = vshrl.u32 %v4723, 7
  %v4725 = vsub.s32 0, %v4724
  %v4726 = vrot.slane %v3826, %v4725
  %v4727 = vlaneseq
  %v4728 = vshrl.u32 %v4727, 7
  %v4729 = vsub.s32 0, %v4728
  %v4730 = vrot.slane %v3827, %v4729
  %v4731 = vlaneseq
  %v4732 = vshrl.u32 %v4731, 7
  %v4733 = vsub.s32 0, %v4732
  %v4734 = vrot.slane %v3828, %v4733
  %v4735 = vlaneseq
  %v4736 = vshrl.u32 %v4735, 7
  %v4737 = vsub.s32 0, %v4736
  %v4738 = vrot.slane %v3829, %v4737
  %v4739 = vlaneseq
  %v4740 = vshrl.u32 %v4739, 7
  %v4741 = vsub.s32 0, %v4740
  %v4742 = vrot.slane %v3830, %v4741
  %v4743 = vlaneseq
  %v4744 = vshrl.u32 %v4743, 7
  %v4745 = vsub.s32 0, %v4744
  %v4746 = vrot.slane %v3831, %v4745
  %v4747 = vlaneseq
  %v4748 = vshrl.u32 %v4747, 7
  %v4749 = vsub.s32 0, %v4748
  %v4750 = vrot.slane %v3832, %v4749
  %v4751 = vlaneseq
  %v4752 = vshrl.u32 %v4751, 7
  %v4753 = vsub.s32 0, %v4752
  %v4754 = vrot.slane %v3833, %v4753
  %v4755 = vlaneseq
  %v4756 = vshrl.u32 %v4755, 7
  %v4757 = vsub.s32 0, %v4756
  %v4758 = vrot.slane %v3834, %v4757
  %v4759 = vlaneseq
  %v4760 = vshrl.u32 %v4759, 7
  %v4761 = vsub.s32 0, %v4760
  %v4762 = vrot.slane %v3835, %v4761
  %v4763 = vlaneseq
  %v4764 = vshrl.u32 %v4763, 7
  %v4765 = vsub.s32 0, %v4764
  %v4766 = vrot.slane %v3836, %v4765
  %v4767 = vlaneseq
  %v4768 = vshrl.u32 %v4767, 7
  %v4769 = vsub.s32 0, %v4768
  %v4770 = vrot.slane %v3837, %v4769
  %v4771 = vlaneseq
  %v4772 = vshrl.u32 %v4771, 7
  %v4773 = vsub.s32 0, %v4772
  %v4774 = vrot.slane %v3838, %v4773
  %v4775 = vlaneseq
  %v4776 = vshrl.u32 %v4775, 7
  %v4777 = vsub.s32 0, %v4776
  %v4778 = vrot.slane %v3857, %v4777
  %v4779 = vlaneseq
  %v4780 = vshrl.u32 %v4779, 7
  %v4781 = vsub.s32 0, %v4780
  %v4782 = vrot.slane %v3858, %v4781
  %v4783 = vlaneseq
  %v4784 = vshrl.u32 %v4783, 7
  %v4785 = vsub.s32 0, %v4784
  %v4786 = vrot.slane %v3859, %v4785
  %v4787 = vlaneseq
  %v4788 = vshrl.u32 %v4787, 7
  %v4789 = vsub.s32 0, %v4788
  %v4790 = vrot.slane %v3860, %v4789
  %v4791 = vlaneseq
  %v4792 = vshrl.u32 %v4791, 7
  %v4793 = vsub.s32 0, %v4792
  %v4794 = vrot.slane %v3861, %v4793
  %v4795 = vlaneseq
  %v4796 = vshrl.u32 %v4795, 7
  %v4797 = vsub.s32 0, %v4796
  %v4798 = vrot.slane %v3862, %v4797
  %v4799 = vlaneseq
  %v4800 = vshrl.u32 %v4799, 7
  %v4801 = vsub.s32 0, %v4800
  %v4802 = vrot.slane %v3863, %v4801
  %v4803 = vlaneseq
  %v4804 = vshrl.u32 %v4803, 7
  %v4805 = vsub.s32 0, %v4804
  %v4806 = vrot.slane %v3864, %v4805
  %v4807 = vlaneseq
  %v4808 = vshrl.u32 %v4807, 7
  %v4809 = vsub.s32 0, %v4808
  %v4810 = vrot.slane %v3865, %v4809
  %v4811 = vlaneseq
  %v4812 = vshrl.u32 %v4811, 7
  %v4813 = vsub.s32 0, %v4812
  %v4814 = vrot.slane %v3866, %v4813
  %v4815 = vlaneseq
  %v4816 = vshrl.u32 %v4815, 7
  %v4817 = vsub.s32 0, %v4816
  %v4818 = vrot.slane %v3867, %v4817
  %v4819 = vlaneseq
  %v4820 = vshrl.u32 %v4819, 7
  %v4821 = vsub.s32 0, %v4820
  %v4822 = vrot.slane %v3868, %v4821
  %v4823 = vlaneseq
  %v4824 = vshrl.u32 %v4823, 7
  %v4825 = vsub.s32 0, %v4824
  %v4826 = vrot.slane %v3869, %v4825
  %v4827 = vlaneseq
  %v4828 = vshrl.u32 %v4827, 7
  %v4829 = vsub.s32 0, %v4828
  %v4830 = vrot.slane %v3870, %v4829
  %v4831 = vlaneseq
  %v4832 = vshrl.u32 %v4831, 7
  %v4833 = vsub.s32 0, %v4832
  %v4834 = vrot.slane %v3871, %v4833
  %v4835 = vlaneseq
  %v4836 = vshrl.u32 %v4835, 7
  %v4837 = vsub.s32 0, %v4836
  %v4838 = vrot.slane %v3872, %v4837
  %v4839 = vlaneseq
  %v4840 = vshrl.u32 %v4839, 7
  %v4841 = vsub.s32 0, %v4840
  %v4842 = vrot.slane %v3873, %v4841
  %v4843 = vlaneseq
  %v4844 = vshrl.u32 %v4843, 7
  %v4845 = vsub.s32 0, %v4844
  %v4846 = vrot.slane %v3874, %v4845
  %v4883 = vmul.f32 %v4706, %v3153
  %v4884 = vmul.f32 %v4710, %v3154
  %v4885 = vmul.f32 %v4714, %v3155
  %v4886 = vmul.f32 %v4718, %v3156
  %v4887 = vmul.f32 %v4722, %v3157
  %v4888 = vmul.f32 %v4726, %v3158
  %v4889 = vmul.f32 %v4730, %v3159
  %v4890 = vmul.f32 %v4734, %v3160
  %v4891 = vmul.f32 %v4738, %v3161
  %v4892 = vmul.f32 %v4742, %v3693
  %v4893 = vmul.f32 %v4746, %v3694
  %v4894 = vmul.f32 %v4750, %v3695
  %v4895 = vmul.f32 %v4754, %v3696
  %v4896 = vmul.f32 %v4758, %v3697
  %v4897 = vmul.f32 %v4762, %v3698
  %v4898 = vmul.f32 %v4766, %v3699
  %v4899 = vmul.f32 %v4770, %v3700
  %v4900 = vmul.f32 %v4774, %v3701
  %v4901 = vmul.f32 %v4778, %v3171
  %v4902 = vmul.f32 %v4782, %v3172
  %v4903 = vmul.f32 %v4786, %v3173
  %v4904 = vmul.f32 %v4790, %v3174
  %v4905 = vmul.f32 %v4794, %v3175
  %v4906 = vmul.f32 %v4798, %v3176
  %v4907 = vmul.f32 %v4802, %v3177
  %v4908 = vmul.f32 %v4806, %v3178
  %v4909 = vmul.f32 %v4810, %v3179
  %v4910 = vmul.f32 %v4814, %v3711
  %v4911 = vmul.f32 %v4818, %v3712
  %v4912 = vmul.f32 %v4822, %v3713
  %v4913 = vmul.f32 %v4826, %v3714
  %v4914 = vmul.f32 %v4830, %v3715
  %v4915 = vmul.f32 %v4834, %v3716
  %v4916 = vmul.f32 %v4838, %v3717
  %v4917 = vmul.f32 %v4842, %v3718
  %v4918 = vmul.f32 %v4846, %v3719
  %v4919 = vadd.f32 %v4631, %v4883
  %v4920 = vadd.f32 %v4632, %v4884
  %v4921 = vadd.f32 %v4633, %v4885
  %v4922 = vadd.f32 %v4634, %v4886
  %v4923 = vadd.f32 %v4635, %v4887
  %v4924 = vadd.f32 %v4636, %v4888
  %v4925 = vadd.f32 %v4637, %v4889
  %v4926 = vadd.f32 %v4638, %v4890
  %v4927 = vadd.f32 %v4639, %v4891
  %v4928 = vadd.f32 %v4640, %v4892
  %v4929 = vadd.f32 %v4641, %v4893
  %v4930 = vadd.f32 %v4642, %v4894
  %v4931 = vadd.f32 %v4643, %v4895
  %v4932 = vadd.f32 %v4644, %v4896
  %v4933 = vadd.f32 %v4645, %v4897
  %v4934 = vadd.f32 %v4646, %v4898
  %v4935 = vadd.f32 %v4647, %v4899
  %v4936 = vadd.f32 %v4648, %v4900
  %v4937 = vadd.f32 %v4649, %v4901
  %v4938 = vadd.f32 %v4650, %v4902
  %v4939 = vadd.f32 %v4651, %v4903
  %v4940 = vadd.f32 %v4652, %v4904
  %v4941 = vadd.f32 %v4653, %v4905
  %v4942 = vadd.f32 %v4654, %v4906
  %v4943 = vadd.f32 %v4655, %v4907
  %v4944 = vadd.f32 %v4656, %v4908
  %v4945 = vadd.f32 %v4657, %v4909
  %v4946 = vadd.f32 %v4658, %v4910
  %v4947 = vadd.f32 %v4659, %v4911
  %v4948 = vadd.f32 %v4660, %v4912
  %v4949 = vadd.f32 %v4661, %v4913
  %v4950 = vadd.f32 %v4662, %v4914
  %v4951 = vadd.f32 %v4663, %v4915
  %v4952 = vadd.f32 %v4664, %v4916
  %v4953 = vadd.f32 %v4665, %v4917
  %v4954 = vadd.f32 %v4666, %v4918
  %s4955 = scalar_lea.vmem %s2, 288
  %v4956 = vld [vmem:[%s4955] sm:$0x1]
  %v4957 = vld [vmem:[%s4955 + $0x1] sm:$0x1]
  %v4958 = vld [vmem:[%s4955 + $0x2] sm:$0x1]
  %v4959 = vld [vmem:[%s4955 + $0x3] sm:$0x1]
  %v4960 = vld [vmem:[%s4955 + $0x4] sm:$0x1]
  %v4961 = vld [vmem:[%s4955 + $0x5] sm:$0x1]
  %v4962 = vld [vmem:[%s4955 + $0x6] sm:$0x1]
  %v4963 = vld [vmem:[%s4955 + $0x7] sm:$0x1]
  %v4964 = vld [vmem:[%s4955 + $0x8] sm:$0x1]
  %v4965 = vld [vmem:[%s4955 + $0x9] sm:$0x1]
  %v4966 = vld [vmem:[%s4955 + $0xa] sm:$0x1]
  %v4967 = vld [vmem:[%s4955 + $0xb] sm:$0x1]
  %v4968 = vld [vmem:[%s4955 + $0xc] sm:$0x1]
  %v4969 = vld [vmem:[%s4955 + $0xd] sm:$0x1]
  %v4970 = vld [vmem:[%s4955 + $0xe] sm:$0x1]
  %v4971 = vld [vmem:[%s4955 + $0xf] sm:$0x1]
  %v4972 = vld [vmem:[%s4955 + $0x10] sm:$0x1]
  %v4973 = vld [vmem:[%s4955 + $0x11] sm:$0x1]
  %v4974 = vld [vmem:[%s4955 + $0x12] sm:$0x1]
  %v4975 = vld [vmem:[%s4955 + $0x13] sm:$0x1]
  %v4976 = vld [vmem:[%s4955 + $0x14] sm:$0x1]
  %v4977 = vld [vmem:[%s4955 + $0x15] sm:$0x1]
  %v4978 = vld [vmem:[%s4955 + $0x16] sm:$0x1]
  %v4979 = vld [vmem:[%s4955 + $0x17] sm:$0x1]
  %v4980 = vld [vmem:[%s4955 + $0x18] sm:$0x1]
  %v4981 = vld [vmem:[%s4955 + $0x19] sm:$0x1]
  %v4982 = vld [vmem:[%s4955 + $0x1a] sm:$0x1]
  %v4983 = vld [vmem:[%s4955 + $0x1b] sm:$0x1]
  %v4984 = vld [vmem:[%s4955 + $0x1c] sm:$0x1]
  %v4985 = vld [vmem:[%s4955 + $0x1d] sm:$0x1]
  %v4986 = vld [vmem:[%s4955 + $0x1e] sm:$0x1]
  %v4987 = vld [vmem:[%s4955 + $0x1f] sm:$0x1]
  %v4988 = vld [vmem:[%s4955 + $0x20] sm:$0x1]
  %v4989 = vld [vmem:[%s4955 + $0x21] sm:$0x1]
  %v4990 = vld [vmem:[%s4955 + $0x22] sm:$0x1]
  %v4991 = vld [vmem:[%s4955 + $0x23] sm:$0x1]
  %v4992 = vld [vmem:[%s4955 + $0x24] sm:$0x1]
  %v4993 = vld [vmem:[%s4955 + $0x25] sm:$0x1]
  %v4994 = vld [vmem:[%s4955 + $0x26] sm:$0x1]
  %v4995 = vld [vmem:[%s4955 + $0x27] sm:$0x1]
  %v4996 = vld [vmem:[%s4955 + $0x28] sm:$0x1]
  %v4997 = vld [vmem:[%s4955 + $0x29] sm:$0x1]
  %v4998 = vld [vmem:[%s4955 + $0x2a] sm:$0x1]
  %v4999 = vld [vmem:[%s4955 + $0x2b] sm:$0x1]
  %v5000 = vld [vmem:[%s4955 + $0x2c] sm:$0x1]
  %v5001 = vld [vmem:[%s4955 + $0x2d] sm:$0x1]
  %v5002 = vld [vmem:[%s4955 + $0x2e] sm:$0x1]
  %v5003 = vld [vmem:[%s4955 + $0x2f] sm:$0x1]
  %v5004 = vld [vmem:[%s4955 + $0x30] sm:$0x1]
  %v5005 = vld [vmem:[%s4955 + $0x31] sm:$0x1]
  %v5006 = vld [vmem:[%s4955 + $0x32] sm:$0x1]
  %v5007 = vld [vmem:[%s4955 + $0x33] sm:$0x1]
  %v5008 = vld [vmem:[%s4955 + $0x34] sm:$0x1]
  %v5009 = vld [vmem:[%s4955 + $0x35] sm:$0x1]
  %v5010 = vld [vmem:[%s4955 + $0x36] sm:$0x1]
  %v5011 = vld [vmem:[%s4955 + $0x37] sm:$0x1]
  %v5012 = vld [vmem:[%s4955 + $0x38] sm:$0x1]
  %v5013 = vld [vmem:[%s4955 + $0x39] sm:$0x1]
  %v5014 = vld [vmem:[%s4955 + $0x3a] sm:$0x1]
  %v5015 = vld [vmem:[%s4955 + $0x3b] sm:$0x1]
  %v5016 = vld [vmem:[%s4955 + $0x3c] sm:$0x1]
  %v5017 = vld [vmem:[%s4955 + $0x3d] sm:$0x1]
  %v5018 = vld [vmem:[%s4955 + $0x3e] sm:$0x1]
  %v5019 = vld [vmem:[%s4955 + $0x3f] sm:$0x1]
  %v5020 = vld [vmem:[%s4955 + $0x40] sm:$0x1]
  %v5021 = vld [vmem:[%s4955 + $0x41] sm:$0x1]
  %v5022 = vld [vmem:[%s4955 + $0x42] sm:$0x1]
  %v5023 = vld [vmem:[%s4955 + $0x43] sm:$0x1]
  %v5024 = vld [vmem:[%s4955 + $0x44] sm:$0x1]
  %v5025 = vld [vmem:[%s4955 + $0x45] sm:$0x1]
  %v5026 = vld [vmem:[%s4955 + $0x46] sm:$0x1]
  %v5027 = vld [vmem:[%s4955 + $0x47] sm:$0x1]
  %s5028 = scalar_lea.vmem %s2, 360
  %v5029 = vld [vmem:[%s5028] sm:$0x1]
  %v5030 = vld [vmem:[%s5028 + $0x1] sm:$0x1]
  %v5031 = vld [vmem:[%s5028 + $0x2] sm:$0x1]
  %v5032 = vld [vmem:[%s5028 + $0x3] sm:$0x1]
  %v5033 = vld [vmem:[%s5028 + $0x4] sm:$0x1]
  %v5034 = vld [vmem:[%s5028 + $0x5] sm:$0x1]
  %v5035 = vld [vmem:[%s5028 + $0x6] sm:$0x1]
  %v5036 = vld [vmem:[%s5028 + $0x7] sm:$0x1]
  %v5037 = vld [vmem:[%s5028 + $0x8] sm:$0x1]
  %v5038 = vld [vmem:[%s5028 + $0x9] sm:$0x1]
  %v5039 = vld [vmem:[%s5028 + $0xa] sm:$0x1]
  %v5040 = vld [vmem:[%s5028 + $0xb] sm:$0x1]
  %v5041 = vld [vmem:[%s5028 + $0xc] sm:$0x1]
  %v5042 = vld [vmem:[%s5028 + $0xd] sm:$0x1]
  %v5043 = vld [vmem:[%s5028 + $0xe] sm:$0x1]
  %v5044 = vld [vmem:[%s5028 + $0xf] sm:$0x1]
  %v5045 = vld [vmem:[%s5028 + $0x10] sm:$0x1]
  %v5046 = vld [vmem:[%s5028 + $0x11] sm:$0x1]
  %v5047 = vld [vmem:[%s5028 + $0x12] sm:$0x1]
  %v5048 = vld [vmem:[%s5028 + $0x13] sm:$0x1]
  %v5049 = vld [vmem:[%s5028 + $0x14] sm:$0x1]
  %v5050 = vld [vmem:[%s5028 + $0x15] sm:$0x1]
  %v5051 = vld [vmem:[%s5028 + $0x16] sm:$0x1]
  %v5052 = vld [vmem:[%s5028 + $0x17] sm:$0x1]
  %v5053 = vld [vmem:[%s5028 + $0x18] sm:$0x1]
  %v5054 = vld [vmem:[%s5028 + $0x19] sm:$0x1]
  %v5055 = vld [vmem:[%s5028 + $0x1a] sm:$0x1]
  %v5056 = vld [vmem:[%s5028 + $0x1b] sm:$0x1]
  %v5057 = vld [vmem:[%s5028 + $0x1c] sm:$0x1]
  %v5058 = vld [vmem:[%s5028 + $0x1d] sm:$0x1]
  %v5059 = vld [vmem:[%s5028 + $0x1e] sm:$0x1]
  %v5060 = vld [vmem:[%s5028 + $0x1f] sm:$0x1]
  %v5061 = vld [vmem:[%s5028 + $0x20] sm:$0x1]
  %v5062 = vld [vmem:[%s5028 + $0x21] sm:$0x1]
  %v5063 = vld [vmem:[%s5028 + $0x22] sm:$0x1]
  %v5064 = vld [vmem:[%s5028 + $0x23] sm:$0x1]
  %v5065 = vld [vmem:[%s5028 + $0x24] sm:$0x1]
  %v5066 = vld [vmem:[%s5028 + $0x25] sm:$0x1]
  %v5067 = vld [vmem:[%s5028 + $0x26] sm:$0x1]
  %v5068 = vld [vmem:[%s5028 + $0x27] sm:$0x1]
  %v5069 = vld [vmem:[%s5028 + $0x28] sm:$0x1]
  %v5070 = vld [vmem:[%s5028 + $0x29] sm:$0x1]
  %v5071 = vld [vmem:[%s5028 + $0x2a] sm:$0x1]
  %v5072 = vld [vmem:[%s5028 + $0x2b] sm:$0x1]
  %v5073 = vld [vmem:[%s5028 + $0x2c] sm:$0x1]
  %v5074 = vld [vmem:[%s5028 + $0x2d] sm:$0x1]
  %v5075 = vld [vmem:[%s5028 + $0x2e] sm:$0x1]
  %v5076 = vld [vmem:[%s5028 + $0x2f] sm:$0x1]
  %v5077 = vld [vmem:[%s5028 + $0x30] sm:$0x1]
  %v5078 = vld [vmem:[%s5028 + $0x31] sm:$0x1]
  %v5079 = vld [vmem:[%s5028 + $0x32] sm:$0x1]
  %v5080 = vld [vmem:[%s5028 + $0x33] sm:$0x1]
  %v5081 = vld [vmem:[%s5028 + $0x34] sm:$0x1]
  %v5082 = vld [vmem:[%s5028 + $0x35] sm:$0x1]
  %v5083 = vld [vmem:[%s5028 + $0x36] sm:$0x1]
  %v5084 = vld [vmem:[%s5028 + $0x37] sm:$0x1]
  %v5085 = vld [vmem:[%s5028 + $0x38] sm:$0x1]
  %v5086 = vld [vmem:[%s5028 + $0x39] sm:$0x1]
  %v5087 = vld [vmem:[%s5028 + $0x3a] sm:$0x1]
  %v5088 = vld [vmem:[%s5028 + $0x3b] sm:$0x1]
  %v5089 = vld [vmem:[%s5028 + $0x3c] sm:$0x1]
  %v5090 = vld [vmem:[%s5028 + $0x3d] sm:$0x1]
  %v5091 = vld [vmem:[%s5028 + $0x3e] sm:$0x1]
  %v5092 = vld [vmem:[%s5028 + $0x3f] sm:$0x1]
  %v5093 = vld [vmem:[%s5028 + $0x40] sm:$0x1]
  %v5094 = vld [vmem:[%s5028 + $0x41] sm:$0x1]
  %v5095 = vld [vmem:[%s5028 + $0x42] sm:$0x1]
  %v5096 = vld [vmem:[%s5028 + $0x43] sm:$0x1]
  %v5097 = vld [vmem:[%s5028 + $0x44] sm:$0x1]
  %v5098 = vld [vmem:[%s5028 + $0x45] sm:$0x1]
  %v5099 = vld [vmem:[%s5028 + $0x46] sm:$0x1]
  %v5100 = vld [vmem:[%s5028 + $0x47] sm:$0x1]
  %v5137 = vlaneseq
  %v5138 = vshrl.u32 %v5137, 7
  %v5139 = vsub.s32 0, %v5138
  %v5140 = vrot.slane %v4956, %v5139
  %v5141 = vlaneseq
  %v5142 = vshrl.u32 %v5141, 7
  %v5143 = vsub.s32 0, %v5142
  %v5144 = vrot.slane %v4957, %v5143
  %v5145 = vlaneseq
  %v5146 = vshrl.u32 %v5145, 7
  %v5147 = vsub.s32 0, %v5146
  %v5148 = vrot.slane %v4958, %v5147
  %v5149 = vlaneseq
  %v5150 = vshrl.u32 %v5149, 7
  %v5151 = vsub.s32 0, %v5150
  %v5152 = vrot.slane %v4959, %v5151
  %v5153 = vlaneseq
  %v5154 = vshrl.u32 %v5153, 7
  %v5155 = vsub.s32 0, %v5154
  %v5156 = vrot.slane %v4960, %v5155
  %v5157 = vlaneseq
  %v5158 = vshrl.u32 %v5157, 7
  %v5159 = vsub.s32 0, %v5158
  %v5160 = vrot.slane %v4961, %v5159
  %v5161 = vlaneseq
  %v5162 = vshrl.u32 %v5161, 7
  %v5163 = vsub.s32 0, %v5162
  %v5164 = vrot.slane %v4962, %v5163
  %v5165 = vlaneseq
  %v5166 = vshrl.u32 %v5165, 7
  %v5167 = vsub.s32 0, %v5166
  %v5168 = vrot.slane %v4963, %v5167
  %v5169 = vlaneseq
  %v5170 = vshrl.u32 %v5169, 7
  %v5171 = vsub.s32 0, %v5170
  %v5172 = vrot.slane %v4964, %v5171
  %v5173 = vlaneseq
  %v5174 = vshrl.u32 %v5173, 7
  %v5175 = vsub.s32 0, %v5174
  %v5176 = vrot.slane %v4965, %v5175
  %v5177 = vlaneseq
  %v5178 = vshrl.u32 %v5177, 7
  %v5179 = vsub.s32 0, %v5178
  %v5180 = vrot.slane %v4966, %v5179
  %v5181 = vlaneseq
  %v5182 = vshrl.u32 %v5181, 7
  %v5183 = vsub.s32 0, %v5182
  %v5184 = vrot.slane %v4967, %v5183
  %v5185 = vlaneseq
  %v5186 = vshrl.u32 %v5185, 7
  %v5187 = vsub.s32 0, %v5186
  %v5188 = vrot.slane %v4968, %v5187
  %v5189 = vlaneseq
  %v5190 = vshrl.u32 %v5189, 7
  %v5191 = vsub.s32 0, %v5190
  %v5192 = vrot.slane %v4969, %v5191
  %v5193 = vlaneseq
  %v5194 = vshrl.u32 %v5193, 7
  %v5195 = vsub.s32 0, %v5194
  %v5196 = vrot.slane %v4970, %v5195
  %v5197 = vlaneseq
  %v5198 = vshrl.u32 %v5197, 7
  %v5199 = vsub.s32 0, %v5198
  %v5200 = vrot.slane %v4971, %v5199
  %v5201 = vlaneseq
  %v5202 = vshrl.u32 %v5201, 7
  %v5203 = vsub.s32 0, %v5202
  %v5204 = vrot.slane %v4972, %v5203
  %v5205 = vlaneseq
  %v5206 = vshrl.u32 %v5205, 7
  %v5207 = vsub.s32 0, %v5206
  %v5208 = vrot.slane %v4973, %v5207
  %v5209 = vlaneseq
  %v5210 = vshrl.u32 %v5209, 7
  %v5211 = vsub.s32 0, %v5210
  %v5212 = vrot.slane %v4974, %v5211
  %v5213 = vlaneseq
  %v5214 = vshrl.u32 %v5213, 7
  %v5215 = vsub.s32 0, %v5214
  %v5216 = vrot.slane %v4975, %v5215
  %v5217 = vlaneseq
  %v5218 = vshrl.u32 %v5217, 7
  %v5219 = vsub.s32 0, %v5218
  %v5220 = vrot.slane %v4976, %v5219
  %v5221 = vlaneseq
  %v5222 = vshrl.u32 %v5221, 7
  %v5223 = vsub.s32 0, %v5222
  %v5224 = vrot.slane %v4977, %v5223
  %v5225 = vlaneseq
  %v5226 = vshrl.u32 %v5225, 7
  %v5227 = vsub.s32 0, %v5226
  %v5228 = vrot.slane %v4978, %v5227
  %v5229 = vlaneseq
  %v5230 = vshrl.u32 %v5229, 7
  %v5231 = vsub.s32 0, %v5230
  %v5232 = vrot.slane %v4979, %v5231
  %v5233 = vlaneseq
  %v5234 = vshrl.u32 %v5233, 7
  %v5235 = vsub.s32 0, %v5234
  %v5236 = vrot.slane %v4980, %v5235
  %v5237 = vlaneseq
  %v5238 = vshrl.u32 %v5237, 7
  %v5239 = vsub.s32 0, %v5238
  %v5240 = vrot.slane %v4981, %v5239
  %v5241 = vlaneseq
  %v5242 = vshrl.u32 %v5241, 7
  %v5243 = vsub.s32 0, %v5242
  %v5244 = vrot.slane %v4982, %v5243
  %v5245 = vlaneseq
  %v5246 = vshrl.u32 %v5245, 7
  %v5247 = vsub.s32 0, %v5246
  %v5248 = vrot.slane %v4983, %v5247
  %v5249 = vlaneseq
  %v5250 = vshrl.u32 %v5249, 7
  %v5251 = vsub.s32 0, %v5250
  %v5252 = vrot.slane %v4984, %v5251
  %v5253 = vlaneseq
  %v5254 = vshrl.u32 %v5253, 7
  %v5255 = vsub.s32 0, %v5254
  %v5256 = vrot.slane %v4985, %v5255
  %v5257 = vlaneseq
  %v5258 = vshrl.u32 %v5257, 7
  %v5259 = vsub.s32 0, %v5258
  %v5260 = vrot.slane %v4986, %v5259
  %v5261 = vlaneseq
  %v5262 = vshrl.u32 %v5261, 7
  %v5263 = vsub.s32 0, %v5262
  %v5264 = vrot.slane %v4987, %v5263
  %v5265 = vlaneseq
  %v5266 = vshrl.u32 %v5265, 7
  %v5267 = vsub.s32 0, %v5266
  %v5268 = vrot.slane %v4988, %v5267
  %v5269 = vlaneseq
  %v5270 = vshrl.u32 %v5269, 7
  %v5271 = vsub.s32 0, %v5270
  %v5272 = vrot.slane %v4989, %v5271
  %v5273 = vlaneseq
  %v5274 = vshrl.u32 %v5273, 7
  %v5275 = vsub.s32 0, %v5274
  %v5276 = vrot.slane %v4990, %v5275
  %v5277 = vlaneseq
  %v5278 = vshrl.u32 %v5277, 7
  %v5279 = vsub.s32 0, %v5278
  %v5280 = vrot.slane %v4991, %v5279
  %v5317 = vmul.f32 %v5140, %v4379
  %v5318 = vmul.f32 %v5144, %v4380
  %v5319 = vmul.f32 %v5148, %v4381
  %v5320 = vmul.f32 %v5152, %v4382
  %v5321 = vmul.f32 %v5156, %v4383
  %v5322 = vmul.f32 %v5160, %v4384
  %v5323 = vmul.f32 %v5164, %v4385
  %v5324 = vmul.f32 %v5168, %v4386
  %v5325 = vmul.f32 %v5172, %v4387
  %v5326 = vmul.f32 %v5176, %v4388
  %v5327 = vmul.f32 %v5180, %v4389
  %v5328 = vmul.f32 %v5184, %v4390
  %v5329 = vmul.f32 %v5188, %v4391
  %v5330 = vmul.f32 %v5192, %v4392
  %v5331 = vmul.f32 %v5196, %v4393
  %v5332 = vmul.f32 %v5200, %v4394
  %v5333 = vmul.f32 %v5204, %v4395
  %v5334 = vmul.f32 %v5208, %v4396
  %v5335 = vmul.f32 %v5212, %v4919
  %v5336 = vmul.f32 %v5216, %v4920
  %v5337 = vmul.f32 %v5220, %v4921
  %v5338 = vmul.f32 %v5224, %v4922
  %v5339 = vmul.f32 %v5228, %v4923
  %v5340 = vmul.f32 %v5232, %v4924
  %v5341 = vmul.f32 %v5236, %v4925
  %v5342 = vmul.f32 %v5240, %v4926
  %v5343 = vmul.f32 %v5244, %v4927
  %v5344 = vmul.f32 %v5248, %v4928
  %v5345 = vmul.f32 %v5252, %v4929
  %v5346 = vmul.f32 %v5256, %v4930
  %v5347 = vmul.f32 %v5260, %v4931
  %v5348 = vmul.f32 %v5264, %v4932
  %v5349 = vmul.f32 %v5268, %v4933
  %v5350 = vmul.f32 %v5272, %v4934
  %v5351 = vmul.f32 %v5276, %v4935
  %v5352 = vmul.f32 %v5280, %v4936
  %v5389 = vlaneseq
  %v5390 = vshrl.u32 %v5389, 7
  %v5391 = vsub.s32 0, %v5390
  %v5392 = vrot.slane %v5029, %v5391
  %v5393 = vlaneseq
  %v5394 = vshrl.u32 %v5393, 7
  %v5395 = vsub.s32 0, %v5394
  %v5396 = vrot.slane %v5030, %v5395
  %v5397 = vlaneseq
  %v5398 = vshrl.u32 %v5397, 7
  %v5399 = vsub.s32 0, %v5398
  %v5400 = vrot.slane %v5031, %v5399
  %v5401 = vlaneseq
  %v5402 = vshrl.u32 %v5401, 7
  %v5403 = vsub.s32 0, %v5402
  %v5404 = vrot.slane %v5032, %v5403
  %v5405 = vlaneseq
  %v5406 = vshrl.u32 %v5405, 7
  %v5407 = vsub.s32 0, %v5406
  %v5408 = vrot.slane %v5033, %v5407
  %v5409 = vlaneseq
  %v5410 = vshrl.u32 %v5409, 7
  %v5411 = vsub.s32 0, %v5410
  %v5412 = vrot.slane %v5034, %v5411
  %v5413 = vlaneseq
  %v5414 = vshrl.u32 %v5413, 7
  %v5415 = vsub.s32 0, %v5414
  %v5416 = vrot.slane %v5035, %v5415
  %v5417 = vlaneseq
  %v5418 = vshrl.u32 %v5417, 7
  %v5419 = vsub.s32 0, %v5418
  %v5420 = vrot.slane %v5036, %v5419
  %v5421 = vlaneseq
  %v5422 = vshrl.u32 %v5421, 7
  %v5423 = vsub.s32 0, %v5422
  %v5424 = vrot.slane %v5037, %v5423
  %v5425 = vlaneseq
  %v5426 = vshrl.u32 %v5425, 7
  %v5427 = vsub.s32 0, %v5426
  %v5428 = vrot.slane %v5038, %v5427
  %v5429 = vlaneseq
  %v5430 = vshrl.u32 %v5429, 7
  %v5431 = vsub.s32 0, %v5430
  %v5432 = vrot.slane %v5039, %v5431
  %v5433 = vlaneseq
  %v5434 = vshrl.u32 %v5433, 7
  %v5435 = vsub.s32 0, %v5434
  %v5436 = vrot.slane %v5040, %v5435
  %v5437 = vlaneseq
  %v5438 = vshrl.u32 %v5437, 7
  %v5439 = vsub.s32 0, %v5438
  %v5440 = vrot.slane %v5041, %v5439
  %v5441 = vlaneseq
  %v5442 = vshrl.u32 %v5441, 7
  %v5443 = vsub.s32 0, %v5442
  %v5444 = vrot.slane %v5042, %v5443
  %v5445 = vlaneseq
  %v5446 = vshrl.u32 %v5445, 7
  %v5447 = vsub.s32 0, %v5446
  %v5448 = vrot.slane %v5043, %v5447
  %v5449 = vlaneseq
  %v5450 = vshrl.u32 %v5449, 7
  %v5451 = vsub.s32 0, %v5450
  %v5452 = vrot.slane %v5044, %v5451
  %v5453 = vlaneseq
  %v5454 = vshrl.u32 %v5453, 7
  %v5455 = vsub.s32 0, %v5454
  %v5456 = vrot.slane %v5045, %v5455
  %v5457 = vlaneseq
  %v5458 = vshrl.u32 %v5457, 7
  %v5459 = vsub.s32 0, %v5458
  %v5460 = vrot.slane %v5046, %v5459
  %v5461 = vlaneseq
  %v5462 = vshrl.u32 %v5461, 7
  %v5463 = vsub.s32 0, %v5462
  %v5464 = vrot.slane %v5047, %v5463
  %v5465 = vlaneseq
  %v5466 = vshrl.u32 %v5465, 7
  %v5467 = vsub.s32 0, %v5466
  %v5468 = vrot.slane %v5048, %v5467
  %v5469 = vlaneseq
  %v5470 = vshrl.u32 %v5469, 7
  %v5471 = vsub.s32 0, %v5470
  %v5472 = vrot.slane %v5049, %v5471
  %v5473 = vlaneseq
  %v5474 = vshrl.u32 %v5473, 7
  %v5475 = vsub.s32 0, %v5474
  %v5476 = vrot.slane %v5050, %v5475
  %v5477 = vlaneseq
  %v5478 = vshrl.u32 %v5477, 7
  %v5479 = vsub.s32 0, %v5478
  %v5480 = vrot.slane %v5051, %v5479
  %v5481 = vlaneseq
  %v5482 = vshrl.u32 %v5481, 7
  %v5483 = vsub.s32 0, %v5482
  %v5484 = vrot.slane %v5052, %v5483
  %v5485 = vlaneseq
  %v5486 = vshrl.u32 %v5485, 7
  %v5487 = vsub.s32 0, %v5486
  %v5488 = vrot.slane %v5053, %v5487
  %v5489 = vlaneseq
  %v5490 = vshrl.u32 %v5489, 7
  %v5491 = vsub.s32 0, %v5490
  %v5492 = vrot.slane %v5054, %v5491
  %v5493 = vlaneseq
  %v5494 = vshrl.u32 %v5493, 7
  %v5495 = vsub.s32 0, %v5494
  %v5496 = vrot.slane %v5055, %v5495
  %v5497 = vlaneseq
  %v5498 = vshrl.u32 %v5497, 7
  %v5499 = vsub.s32 0, %v5498
  %v5500 = vrot.slane %v5056, %v5499
  %v5501 = vlaneseq
  %v5502 = vshrl.u32 %v5501, 7
  %v5503 = vsub.s32 0, %v5502
  %v5504 = vrot.slane %v5057, %v5503
  %v5505 = vlaneseq
  %v5506 = vshrl.u32 %v5505, 7
  %v5507 = vsub.s32 0, %v5506
  %v5508 = vrot.slane %v5058, %v5507
  %v5509 = vlaneseq
  %v5510 = vshrl.u32 %v5509, 7
  %v5511 = vsub.s32 0, %v5510
  %v5512 = vrot.slane %v5059, %v5511
  %v5513 = vlaneseq
  %v5514 = vshrl.u32 %v5513, 7
  %v5515 = vsub.s32 0, %v5514
  %v5516 = vrot.slane %v5060, %v5515
  %v5517 = vlaneseq
  %v5518 = vshrl.u32 %v5517, 7
  %v5519 = vsub.s32 0, %v5518
  %v5520 = vrot.slane %v5061, %v5519
  %v5521 = vlaneseq
  %v5522 = vshrl.u32 %v5521, 7
  %v5523 = vsub.s32 0, %v5522
  %v5524 = vrot.slane %v5062, %v5523
  %v5525 = vlaneseq
  %v5526 = vshrl.u32 %v5525, 7
  %v5527 = vsub.s32 0, %v5526
  %v5528 = vrot.slane %v5063, %v5527
  %v5529 = vlaneseq
  %v5530 = vshrl.u32 %v5529, 7
  %v5531 = vsub.s32 0, %v5530
  %v5532 = vrot.slane %v5064, %v5531
  %v5569 = vmul.f32 %v5392, %v4397
  %v5570 = vmul.f32 %v5396, %v4398
  %v5571 = vmul.f32 %v5400, %v4399
  %v5572 = vmul.f32 %v5404, %v4400
  %v5573 = vmul.f32 %v5408, %v4401
  %v5574 = vmul.f32 %v5412, %v4402
  %v5575 = vmul.f32 %v5416, %v4403
  %v5576 = vmul.f32 %v5420, %v4404
  %v5577 = vmul.f32 %v5424, %v4405
  %v5578 = vmul.f32 %v5428, %v4406
  %v5579 = vmul.f32 %v5432, %v4407
  %v5580 = vmul.f32 %v5436, %v4408
  %v5581 = vmul.f32 %v5440, %v4409
  %v5582 = vmul.f32 %v5444, %v4410
  %v5583 = vmul.f32 %v5448, %v4411
  %v5584 = vmul.f32 %v5452, %v4412
  %v5585 = vmul.f32 %v5456, %v4413
  %v5586 = vmul.f32 %v5460, %v4414
  %v5587 = vmul.f32 %v5464, %v4937
  %v5588 = vmul.f32 %v5468, %v4938
  %v5589 = vmul.f32 %v5472, %v4939
  %v5590 = vmul.f32 %v5476, %v4940
  %v5591 = vmul.f32 %v5480, %v4941
  %v5592 = vmul.f32 %v5484, %v4942
  %v5593 = vmul.f32 %v5488, %v4943
  %v5594 = vmul.f32 %v5492, %v4944
  %v5595 = vmul.f32 %v5496, %v4945
  %v5596 = vmul.f32 %v5500, %v4946
  %v5597 = vmul.f32 %v5504, %v4947
  %v5598 = vmul.f32 %v5508, %v4948
  %v5599 = vmul.f32 %v5512, %v4949
  %v5600 = vmul.f32 %v5516, %v4950
  %v5601 = vmul.f32 %v5520, %v4951
  %v5602 = vmul.f32 %v5524, %v4952
  %v5603 = vmul.f32 %v5528, %v4953
  %v5604 = vmul.f32 %v5532, %v4954
  %v5605 = vadd.f32 %v5317, %v5569
  %v5606 = vadd.f32 %v5318, %v5570
  %v5607 = vadd.f32 %v5319, %v5571
  %v5608 = vadd.f32 %v5320, %v5572
  %v5609 = vadd.f32 %v5321, %v5573
  %v5610 = vadd.f32 %v5322, %v5574
  %v5611 = vadd.f32 %v5323, %v5575
  %v5612 = vadd.f32 %v5324, %v5576
  %v5613 = vadd.f32 %v5325, %v5577
  %v5614 = vadd.f32 %v5326, %v5578
  %v5615 = vadd.f32 %v5327, %v5579
  %v5616 = vadd.f32 %v5328, %v5580
  %v5617 = vadd.f32 %v5329, %v5581
  %v5618 = vadd.f32 %v5330, %v5582
  %v5619 = vadd.f32 %v5331, %v5583
  %v5620 = vadd.f32 %v5332, %v5584
  %v5621 = vadd.f32 %v5333, %v5585
  %v5622 = vadd.f32 %v5334, %v5586
  %v5623 = vadd.f32 %v5335, %v5587
  %v5624 = vadd.f32 %v5336, %v5588
  %v5625 = vadd.f32 %v5337, %v5589
  %v5626 = vadd.f32 %v5338, %v5590
  %v5627 = vadd.f32 %v5339, %v5591
  %v5628 = vadd.f32 %v5340, %v5592
  %v5629 = vadd.f32 %v5341, %v5593
  %v5630 = vadd.f32 %v5342, %v5594
  %v5631 = vadd.f32 %v5343, %v5595
  %v5632 = vadd.f32 %v5344, %v5596
  %v5633 = vadd.f32 %v5345, %v5597
  %v5634 = vadd.f32 %v5346, %v5598
  %v5635 = vadd.f32 %v5347, %v5599
  %v5636 = vadd.f32 %v5348, %v5600
  %v5637 = vadd.f32 %v5349, %v5601
  %v5638 = vadd.f32 %v5350, %v5602
  %v5639 = vadd.f32 %v5351, %v5603
  %v5640 = vadd.f32 %v5352, %v5604
  %v5677 = vlaneseq
  %v5678 = vshrl.u32 %v5677, 7
  %v5679 = vsub.s32 0, %v5678
  %v5680 = vrot.slane %v4992, %v5679
  %v5681 = vlaneseq
  %v5682 = vshrl.u32 %v5681, 7
  %v5683 = vsub.s32 0, %v5682
  %v5684 = vrot.slane %v4993, %v5683
  %v5685 = vlaneseq
  %v5686 = vshrl.u32 %v5685, 7
  %v5687 = vsub.s32 0, %v5686
  %v5688 = vrot.slane %v4994, %v5687
  %v5689 = vlaneseq
  %v5690 = vshrl.u32 %v5689, 7
  %v5691 = vsub.s32 0, %v5690
  %v5692 = vrot.slane %v4995, %v5691
  %v5693 = vlaneseq
  %v5694 = vshrl.u32 %v5693, 7
  %v5695 = vsub.s32 0, %v5694
  %v5696 = vrot.slane %v4996, %v5695
  %v5697 = vlaneseq
  %v5698 = vshrl.u32 %v5697, 7
  %v5699 = vsub.s32 0, %v5698
  %v5700 = vrot.slane %v4997, %v5699
  %v5701 = vlaneseq
  %v5702 = vshrl.u32 %v5701, 7
  %v5703 = vsub.s32 0, %v5702
  %v5704 = vrot.slane %v4998, %v5703
  %v5705 = vlaneseq
  %v5706 = vshrl.u32 %v5705, 7
  %v5707 = vsub.s32 0, %v5706
  %v5708 = vrot.slane %v4999, %v5707
  %v5709 = vlaneseq
  %v5710 = vshrl.u32 %v5709, 7
  %v5711 = vsub.s32 0, %v5710
  %v5712 = vrot.slane %v5000, %v5711
  %v5713 = vlaneseq
  %v5714 = vshrl.u32 %v5713, 7
  %v5715 = vsub.s32 0, %v5714
  %v5716 = vrot.slane %v5001, %v5715
  %v5717 = vlaneseq
  %v5718 = vshrl.u32 %v5717, 7
  %v5719 = vsub.s32 0, %v5718
  %v5720 = vrot.slane %v5002, %v5719
  %v5721 = vlaneseq
  %v5722 = vshrl.u32 %v5721, 7
  %v5723 = vsub.s32 0, %v5722
  %v5724 = vrot.slane %v5003, %v5723
  %v5725 = vlaneseq
  %v5726 = vshrl.u32 %v5725, 7
  %v5727 = vsub.s32 0, %v5726
  %v5728 = vrot.slane %v5004, %v5727
  %v5729 = vlaneseq
  %v5730 = vshrl.u32 %v5729, 7
  %v5731 = vsub.s32 0, %v5730
  %v5732 = vrot.slane %v5005, %v5731
  %v5733 = vlaneseq
  %v5734 = vshrl.u32 %v5733, 7
  %v5735 = vsub.s32 0, %v5734
  %v5736 = vrot.slane %v5006, %v5735
  %v5737 = vlaneseq
  %v5738 = vshrl.u32 %v5737, 7
  %v5739 = vsub.s32 0, %v5738
  %v5740 = vrot.slane %v5007, %v5739
  %v5741 = vlaneseq
  %v5742 = vshrl.u32 %v5741, 7
  %v5743 = vsub.s32 0, %v5742
  %v5744 = vrot.slane %v5008, %v5743
  %v5745 = vlaneseq
  %v5746 = vshrl.u32 %v5745, 7
  %v5747 = vsub.s32 0, %v5746
  %v5748 = vrot.slane %v5009, %v5747
  %v5749 = vlaneseq
  %v5750 = vshrl.u32 %v5749, 7
  %v5751 = vsub.s32 0, %v5750
  %v5752 = vrot.slane %v5010, %v5751
  %v5753 = vlaneseq
  %v5754 = vshrl.u32 %v5753, 7
  %v5755 = vsub.s32 0, %v5754
  %v5756 = vrot.slane %v5011, %v5755
  %v5757 = vlaneseq
  %v5758 = vshrl.u32 %v5757, 7
  %v5759 = vsub.s32 0, %v5758
  %v5760 = vrot.slane %v5012, %v5759
  %v5761 = vlaneseq
  %v5762 = vshrl.u32 %v5761, 7
  %v5763 = vsub.s32 0, %v5762
  %v5764 = vrot.slane %v5013, %v5763
  %v5765 = vlaneseq
  %v5766 = vshrl.u32 %v5765, 7
  %v5767 = vsub.s32 0, %v5766
  %v5768 = vrot.slane %v5014, %v5767
  %v5769 = vlaneseq
  %v5770 = vshrl.u32 %v5769, 7
  %v5771 = vsub.s32 0, %v5770
  %v5772 = vrot.slane %v5015, %v5771
  %v5773 = vlaneseq
  %v5774 = vshrl.u32 %v5773, 7
  %v5775 = vsub.s32 0, %v5774
  %v5776 = vrot.slane %v5016, %v5775
  %v5777 = vlaneseq
  %v5778 = vshrl.u32 %v5777, 7
  %v5779 = vsub.s32 0, %v5778
  %v5780 = vrot.slane %v5017, %v5779
  %v5781 = vlaneseq
  %v5782 = vshrl.u32 %v5781, 7
  %v5783 = vsub.s32 0, %v5782
  %v5784 = vrot.slane %v5018, %v5783
  %v5785 = vlaneseq
  %v5786 = vshrl.u32 %v5785, 7
  %v5787 = vsub.s32 0, %v5786
  %v5788 = vrot.slane %v5019, %v5787
  %v5789 = vlaneseq
  %v5790 = vshrl.u32 %v5789, 7
  %v5791 = vsub.s32 0, %v5790
  %v5792 = vrot.slane %v5020, %v5791
  %v5793 = vlaneseq
  %v5794 = vshrl.u32 %v5793, 7
  %v5795 = vsub.s32 0, %v5794
  %v5796 = vrot.slane %v5021, %v5795
  %v5797 = vlaneseq
  %v5798 = vshrl.u32 %v5797, 7
  %v5799 = vsub.s32 0, %v5798
  %v5800 = vrot.slane %v5022, %v5799
  %v5801 = vlaneseq
  %v5802 = vshrl.u32 %v5801, 7
  %v5803 = vsub.s32 0, %v5802
  %v5804 = vrot.slane %v5023, %v5803
  %v5805 = vlaneseq
  %v5806 = vshrl.u32 %v5805, 7
  %v5807 = vsub.s32 0, %v5806
  %v5808 = vrot.slane %v5024, %v5807
  %v5809 = vlaneseq
  %v5810 = vshrl.u32 %v5809, 7
  %v5811 = vsub.s32 0, %v5810
  %v5812 = vrot.slane %v5025, %v5811
  %v5813 = vlaneseq
  %v5814 = vshrl.u32 %v5813, 7
  %v5815 = vsub.s32 0, %v5814
  %v5816 = vrot.slane %v5026, %v5815
  %v5817 = vlaneseq
  %v5818 = vshrl.u32 %v5817, 7
  %v5819 = vsub.s32 0, %v5818
  %v5820 = vrot.slane %v5027, %v5819
  %v5857 = vmul.f32 %v5680, %v4397
  %v5858 = vmul.f32 %v5684, %v4398
  %v5859 = vmul.f32 %v5688, %v4399
  %v5860 = vmul.f32 %v5692, %v4400
  %v5861 = vmul.f32 %v5696, %v4401
  %v5862 = vmul.f32 %v5700, %v4402
  %v5863 = vmul.f32 %v5704, %v4403
  %v5864 = vmul.f32 %v5708, %v4404
  %v5865 = vmul.f32 %v5712, %v4405
  %v5866 = vmul.f32 %v5716, %v4406
  %v5867 = vmul.f32 %v5720, %v4407
  %v5868 = vmul.f32 %v5724, %v4408
  %v5869 = vmul.f32 %v5728, %v4409
  %v5870 = vmul.f32 %v5732, %v4410
  %v5871 = vmul.f32 %v5736, %v4411
  %v5872 = vmul.f32 %v5740, %v4412
  %v5873 = vmul.f32 %v5744, %v4413
  %v5874 = vmul.f32 %v5748, %v4414
  %v5875 = vmul.f32 %v5752, %v4937
  %v5876 = vmul.f32 %v5756, %v4938
  %v5877 = vmul.f32 %v5760, %v4939
  %v5878 = vmul.f32 %v5764, %v4940
  %v5879 = vmul.f32 %v5768, %v4941
  %v5880 = vmul.f32 %v5772, %v4942
  %v5881 = vmul.f32 %v5776, %v4943
  %v5882 = vmul.f32 %v5780, %v4944
  %v5883 = vmul.f32 %v5784, %v4945
  %v5884 = vmul.f32 %v5788, %v4946
  %v5885 = vmul.f32 %v5792, %v4947
  %v5886 = vmul.f32 %v5796, %v4948
  %v5887 = vmul.f32 %v5800, %v4949
  %v5888 = vmul.f32 %v5804, %v4950
  %v5889 = vmul.f32 %v5808, %v4951
  %v5890 = vmul.f32 %v5812, %v4952
  %v5891 = vmul.f32 %v5816, %v4953
  %v5892 = vmul.f32 %v5820, %v4954
  %v5929 = vlaneseq
  %v5930 = vshrl.u32 %v5929, 7
  %v5931 = vsub.s32 0, %v5930
  %v5932 = vrot.slane %v5065, %v5931
  %v5933 = vlaneseq
  %v5934 = vshrl.u32 %v5933, 7
  %v5935 = vsub.s32 0, %v5934
  %v5936 = vrot.slane %v5066, %v5935
  %v5937 = vlaneseq
  %v5938 = vshrl.u32 %v5937, 7
  %v5939 = vsub.s32 0, %v5938
  %v5940 = vrot.slane %v5067, %v5939
  %v5941 = vlaneseq
  %v5942 = vshrl.u32 %v5941, 7
  %v5943 = vsub.s32 0, %v5942
  %v5944 = vrot.slane %v5068, %v5943
  %v5945 = vlaneseq
  %v5946 = vshrl.u32 %v5945, 7
  %v5947 = vsub.s32 0, %v5946
  %v5948 = vrot.slane %v5069, %v5947
  %v5949 = vlaneseq
  %v5950 = vshrl.u32 %v5949, 7
  %v5951 = vsub.s32 0, %v5950
  %v5952 = vrot.slane %v5070, %v5951
  %v5953 = vlaneseq
  %v5954 = vshrl.u32 %v5953, 7
  %v5955 = vsub.s32 0, %v5954
  %v5956 = vrot.slane %v5071, %v5955
  %v5957 = vlaneseq
  %v5958 = vshrl.u32 %v5957, 7
  %v5959 = vsub.s32 0, %v5958
  %v5960 = vrot.slane %v5072, %v5959
  %v5961 = vlaneseq
  %v5962 = vshrl.u32 %v5961, 7
  %v5963 = vsub.s32 0, %v5962
  %v5964 = vrot.slane %v5073, %v5963
  %v5965 = vlaneseq
  %v5966 = vshrl.u32 %v5965, 7
  %v5967 = vsub.s32 0, %v5966
  %v5968 = vrot.slane %v5074, %v5967
  %v5969 = vlaneseq
  %v5970 = vshrl.u32 %v5969, 7
  %v5971 = vsub.s32 0, %v5970
  %v5972 = vrot.slane %v5075, %v5971
  %v5973 = vlaneseq
  %v5974 = vshrl.u32 %v5973, 7
  %v5975 = vsub.s32 0, %v5974
  %v5976 = vrot.slane %v5076, %v5975
  %v5977 = vlaneseq
  %v5978 = vshrl.u32 %v5977, 7
  %v5979 = vsub.s32 0, %v5978
  %v5980 = vrot.slane %v5077, %v5979
  %v5981 = vlaneseq
  %v5982 = vshrl.u32 %v5981, 7
  %v5983 = vsub.s32 0, %v5982
  %v5984 = vrot.slane %v5078, %v5983
  %v5985 = vlaneseq
  %v5986 = vshrl.u32 %v5985, 7
  %v5987 = vsub.s32 0, %v5986
  %v5988 = vrot.slane %v5079, %v5987
  %v5989 = vlaneseq
  %v5990 = vshrl.u32 %v5989, 7
  %v5991 = vsub.s32 0, %v5990
  %v5992 = vrot.slane %v5080, %v5991
  %v5993 = vlaneseq
  %v5994 = vshrl.u32 %v5993, 7
  %v5995 = vsub.s32 0, %v5994
  %v5996 = vrot.slane %v5081, %v5995
  %v5997 = vlaneseq
  %v5998 = vshrl.u32 %v5997, 7
  %v5999 = vsub.s32 0, %v5998
  %v6000 = vrot.slane %v5082, %v5999
  %v6001 = vlaneseq
  %v6002 = vshrl.u32 %v6001, 7
  %v6003 = vsub.s32 0, %v6002
  %v6004 = vrot.slane %v5083, %v6003
  %v6005 = vlaneseq
  %v6006 = vshrl.u32 %v6005, 7
  %v6007 = vsub.s32 0, %v6006
  %v6008 = vrot.slane %v5084, %v6007
  %v6009 = vlaneseq
  %v6010 = vshrl.u32 %v6009, 7
  %v6011 = vsub.s32 0, %v6010
  %v6012 = vrot.slane %v5085, %v6011
  %v6013 = vlaneseq
  %v6014 = vshrl.u32 %v6013, 7
  %v6015 = vsub.s32 0, %v6014
  %v6016 = vrot.slane %v5086, %v6015
  %v6017 = vlaneseq
  %v6018 = vshrl.u32 %v6017, 7
  %v6019 = vsub.s32 0, %v6018
  %v6020 = vrot.slane %v5087, %v6019
  %v6021 = vlaneseq
  %v6022 = vshrl.u32 %v6021, 7
  %v6023 = vsub.s32 0, %v6022
  %v6024 = vrot.slane %v5088, %v6023
  %v6025 = vlaneseq
  %v6026 = vshrl.u32 %v6025, 7
  %v6027 = vsub.s32 0, %v6026
  %v6028 = vrot.slane %v5089, %v6027
  %v6029 = vlaneseq
  %v6030 = vshrl.u32 %v6029, 7
  %v6031 = vsub.s32 0, %v6030
  %v6032 = vrot.slane %v5090, %v6031
  %v6033 = vlaneseq
  %v6034 = vshrl.u32 %v6033, 7
  %v6035 = vsub.s32 0, %v6034
  %v6036 = vrot.slane %v5091, %v6035
  %v6037 = vlaneseq
  %v6038 = vshrl.u32 %v6037, 7
  %v6039 = vsub.s32 0, %v6038
  %v6040 = vrot.slane %v5092, %v6039
  %v6041 = vlaneseq
  %v6042 = vshrl.u32 %v6041, 7
  %v6043 = vsub.s32 0, %v6042
  %v6044 = vrot.slane %v5093, %v6043
  %v6045 = vlaneseq
  %v6046 = vshrl.u32 %v6045, 7
  %v6047 = vsub.s32 0, %v6046
  %v6048 = vrot.slane %v5094, %v6047
  %v6049 = vlaneseq
  %v6050 = vshrl.u32 %v6049, 7
  %v6051 = vsub.s32 0, %v6050
  %v6052 = vrot.slane %v5095, %v6051
  %v6053 = vlaneseq
  %v6054 = vshrl.u32 %v6053, 7
  %v6055 = vsub.s32 0, %v6054
  %v6056 = vrot.slane %v5096, %v6055
  %v6057 = vlaneseq
  %v6058 = vshrl.u32 %v6057, 7
  %v6059 = vsub.s32 0, %v6058
  %v6060 = vrot.slane %v5097, %v6059
  %v6061 = vlaneseq
  %v6062 = vshrl.u32 %v6061, 7
  %v6063 = vsub.s32 0, %v6062
  %v6064 = vrot.slane %v5098, %v6063
  %v6065 = vlaneseq
  %v6066 = vshrl.u32 %v6065, 7
  %v6067 = vsub.s32 0, %v6066
  %v6068 = vrot.slane %v5099, %v6067
  %v6069 = vlaneseq
  %v6070 = vshrl.u32 %v6069, 7
  %v6071 = vsub.s32 0, %v6070
  %v6072 = vrot.slane %v5100, %v6071
  %v6109 = vmul.f32 %v5932, %v4379
  %v6110 = vmul.f32 %v5936, %v4380
  %v6111 = vmul.f32 %v5940, %v4381
  %v6112 = vmul.f32 %v5944, %v4382
  %v6113 = vmul.f32 %v5948, %v4383
  %v6114 = vmul.f32 %v5952, %v4384
  %v6115 = vmul.f32 %v5956, %v4385
  %v6116 = vmul.f32 %v5960, %v4386
  %v6117 = vmul.f32 %v5964, %v4387
  %v6118 = vmul.f32 %v5968, %v4388
  %v6119 = vmul.f32 %v5972, %v4389
  %v6120 = vmul.f32 %v5976, %v4390
  %v6121 = vmul.f32 %v5980, %v4391
  %v6122 = vmul.f32 %v5984, %v4392
  %v6123 = vmul.f32 %v5988, %v4393
  %v6124 = vmul.f32 %v5992, %v4394
  %v6125 = vmul.f32 %v5996, %v4395
  %v6126 = vmul.f32 %v6000, %v4396
  %v6127 = vmul.f32 %v6004, %v4919
  %v6128 = vmul.f32 %v6008, %v4920
  %v6129 = vmul.f32 %v6012, %v4921
  %v6130 = vmul.f32 %v6016, %v4922
  %v6131 = vmul.f32 %v6020, %v4923
  %v6132 = vmul.f32 %v6024, %v4924
  %v6133 = vmul.f32 %v6028, %v4925
  %v6134 = vmul.f32 %v6032, %v4926
  %v6135 = vmul.f32 %v6036, %v4927
  %v6136 = vmul.f32 %v6040, %v4928
  %v6137 = vmul.f32 %v6044, %v4929
  %v6138 = vmul.f32 %v6048, %v4930
  %v6139 = vmul.f32 %v6052, %v4931
  %v6140 = vmul.f32 %v6056, %v4932
  %v6141 = vmul.f32 %v6060, %v4933
  %v6142 = vmul.f32 %v6064, %v4934
  %v6143 = vmul.f32 %v6068, %v4935
  %v6144 = vmul.f32 %v6072, %v4936
  %v6145 = vadd.f32 %v5857, %v6109
  %v6146 = vadd.f32 %v5858, %v6110
  %v6147 = vadd.f32 %v5859, %v6111
  %v6148 = vadd.f32 %v5860, %v6112
  %v6149 = vadd.f32 %v5861, %v6113
  %v6150 = vadd.f32 %v5862, %v6114
  %v6151 = vadd.f32 %v5863, %v6115
  %v6152 = vadd.f32 %v5864, %v6116
  %v6153 = vadd.f32 %v5865, %v6117
  %v6154 = vadd.f32 %v5866, %v6118
  %v6155 = vadd.f32 %v5867, %v6119
  %v6156 = vadd.f32 %v5868, %v6120
  %v6157 = vadd.f32 %v5869, %v6121
  %v6158 = vadd.f32 %v5870, %v6122
  %v6159 = vadd.f32 %v5871, %v6123
  %v6160 = vadd.f32 %v5872, %v6124
  %v6161 = vadd.f32 %v5873, %v6125
  %v6162 = vadd.f32 %v5874, %v6126
  %v6163 = vadd.f32 %v5875, %v6127
  %v6164 = vadd.f32 %v5876, %v6128
  %v6165 = vadd.f32 %v5877, %v6129
  %v6166 = vadd.f32 %v5878, %v6130
  %v6167 = vadd.f32 %v5879, %v6131
  %v6168 = vadd.f32 %v5880, %v6132
  %v6169 = vadd.f32 %v5881, %v6133
  %v6170 = vadd.f32 %v5882, %v6134
  %v6171 = vadd.f32 %v5883, %v6135
  %v6172 = vadd.f32 %v5884, %v6136
  %v6173 = vadd.f32 %v5885, %v6137
  %v6174 = vadd.f32 %v5886, %v6138
  %v6175 = vadd.f32 %v5887, %v6139
  %v6176 = vadd.f32 %v5888, %v6140
  %v6177 = vadd.f32 %v5889, %v6141
  %v6178 = vadd.f32 %v5890, %v6142
  %v6179 = vadd.f32 %v5891, %v6143
  %v6180 = vadd.f32 %v5892, %v6144
  %v6181 = vadd.f32 %v5605, %v5606
  %v6182 = vadd.f32 %v5614, %v5615
  %v6183 = vadd.f32 %v5623, %v5624
  %v6184 = vadd.f32 %v5632, %v5633
  %v6185 = vadd.f32 %v6145, %v6146
  %v6186 = vadd.f32 %v6154, %v6155
  %v6187 = vadd.f32 %v6163, %v6164
  %v6188 = vadd.f32 %v6172, %v6173
  %v6189 = vadd.f32 %v6181, %v5607
  %v6190 = vadd.f32 %v6182, %v5616
  %v6191 = vadd.f32 %v6183, %v5625
  %v6192 = vadd.f32 %v6184, %v5634
  %v6193 = vadd.f32 %v6185, %v6147
  %v6194 = vadd.f32 %v6186, %v6156
  %v6195 = vadd.f32 %v6187, %v6165
  %v6196 = vadd.f32 %v6188, %v6174
  %v6197 = vadd.f32 %v6189, %v5608
  %v6198 = vadd.f32 %v6190, %v5617
  %v6199 = vadd.f32 %v6191, %v5626
  %v6200 = vadd.f32 %v6192, %v5635
  %v6201 = vadd.f32 %v6193, %v6148
  %v6202 = vadd.f32 %v6194, %v6157
  %v6203 = vadd.f32 %v6195, %v6166
  %v6204 = vadd.f32 %v6196, %v6175
  %v6205 = vadd.f32 %v6197, %v5609
  %v6206 = vadd.f32 %v6198, %v5618
  %v6207 = vadd.f32 %v6199, %v5627
  %v6208 = vadd.f32 %v6200, %v5636
  %v6209 = vadd.f32 %v6201, %v6149
  %v6210 = vadd.f32 %v6202, %v6158
  %v6211 = vadd.f32 %v6203, %v6167
  %v6212 = vadd.f32 %v6204, %v6176
  %v6213 = vadd.f32 %v6205, %v5610
  %v6214 = vadd.f32 %v6206, %v5619
  %v6215 = vadd.f32 %v6207, %v5628
  %v6216 = vadd.f32 %v6208, %v5637
  %v6217 = vadd.f32 %v6209, %v6150
  %v6218 = vadd.f32 %v6210, %v6159
  %v6219 = vadd.f32 %v6211, %v6168
  %v6220 = vadd.f32 %v6212, %v6177
  %v6221 = vadd.f32 %v6213, %v5611
  %v6222 = vadd.f32 %v6214, %v5620
  %v6223 = vadd.f32 %v6215, %v5629
  %v6224 = vadd.f32 %v6216, %v5638
  %v6225 = vadd.f32 %v6217, %v6151
  %v6226 = vadd.f32 %v6218, %v6160
  %v6227 = vadd.f32 %v6219, %v6169
  %v6228 = vadd.f32 %v6220, %v6178
  %v6229 = vadd.f32 %v6221, %v5612
  %v6230 = vadd.f32 %v6222, %v5621
  %v6231 = vadd.f32 %v6223, %v5630
  %v6232 = vadd.f32 %v6224, %v5639
  %v6233 = vadd.f32 %v6225, %v6152
  %v6234 = vadd.f32 %v6226, %v6161
  %v6235 = vadd.f32 %v6227, %v6170
  %v6236 = vadd.f32 %v6228, %v6179
  %v6237 = vadd.f32 %v6229, %v5613
  %v6238 = vadd.f32 %v6230, %v5622
  %v6239 = vadd.f32 %v6231, %v5631
  %v6240 = vadd.f32 %v6232, %v5640
  %v6241 = vadd.f32 %v6233, %v6153
  %v6242 = vadd.f32 %v6234, %v6162
  %v6243 = vadd.f32 %v6235, %v6171
  %v6244 = vadd.f32 %v6236, %v6180
  %v6245 = vmul.f32 %v6237, 0.11111111
  %v6246 = vmul.f32 %v6238, 0.11111111
  %v6247 = vmul.f32 %v6239, 0.11111111
  %v6248 = vmul.f32 %v6240, 0.11111111
  %v6249 = vmul.f32 %v6241, 0.11111111
  %v6250 = vmul.f32 %v6242, 0.11111111
  %v6251 = vmul.f32 %v6243, 0.11111111
  %v6252 = vmul.f32 %v6244, 0.11111111
  %v6253 = vld [vmem:[%s3] sm:$0x1]
  %v6254 = vld [vmem:[%s3 + $0x1] sm:$0x1]
  %v6255 = vld [vmem:[%s3 + $0x2] sm:$0x1]
  %v6256 = vld [vmem:[%s3 + $0x3] sm:$0x1]
  %v6257 = vld [vmem:[%s3 + $0x4] sm:$0x1]
  %v6258 = vld [vmem:[%s3 + $0x5] sm:$0x1]
  %v6259 = vld [vmem:[%s3 + $0x6] sm:$0x1]
  %v6260 = vld [vmem:[%s3 + $0x7] sm:$0x1]
  %v6269 = vlaneseq
  %v6270 = vshrl.u32 %v6269, 7
  %v6271 = vsub.s32 0, %v6270
  %v6272 = vrot.slane %v6253, %v6271
  %v6273 = vlaneseq
  %v6274 = vshrl.u32 %v6273, 7
  %v6275 = vsub.s32 0, %v6274
  %v6276 = vrot.slane %v6254, %v6275
  %v6277 = vlaneseq
  %v6278 = vshrl.u32 %v6277, 7
  %v6279 = vsub.s32 0, %v6278
  %v6280 = vrot.slane %v6255, %v6279
  %v6281 = vlaneseq
  %v6282 = vshrl.u32 %v6281, 7
  %v6283 = vsub.s32 0, %v6282
  %v6284 = vrot.slane %v6256, %v6283
  %v6285 = vlaneseq
  %v6286 = vshrl.u32 %v6285, 7
  %v6287 = vsub.s32 0, %v6286
  %v6288 = vrot.slane %v6257, %v6287
  %v6289 = vlaneseq
  %v6290 = vshrl.u32 %v6289, 7
  %v6291 = vsub.s32 0, %v6290
  %v6292 = vrot.slane %v6258, %v6291
  %v6293 = vlaneseq
  %v6294 = vshrl.u32 %v6293, 7
  %v6295 = vsub.s32 0, %v6294
  %v6296 = vrot.slane %v6259, %v6295
  %v6297 = vlaneseq
  %v6298 = vshrl.u32 %v6297, 7
  %v6299 = vsub.s32 0, %v6298
  %v6300 = vrot.slane %v6260, %v6299
  %v6309 = vadd.f32 %v6245, %v6272
  %v6310 = vadd.f32 %v6246, %v6276
  %v6311 = vadd.f32 %v6247, %v6280
  %v6312 = vadd.f32 %v6248, %v6284
  %v6313 = vadd.f32 %v6249, %v6288
  %v6314 = vadd.f32 %v6250, %v6292
  %v6315 = vadd.f32 %v6251, %v6296
  %v6316 = vadd.f32 %v6252, %v6300
  %6317 = vst [vmem:[%s4] sm:$0xf] %v6309
  %6318 = vst [vmem:[%s4 + $0x4] sm:$0xf] %v6310
  %6319 = vst [vmem:[%s4 + $0x8] sm:$0xf] %v6311
  %6320 = vst [vmem:[%s4 + $0xc] sm:$0xf] %v6312
  %6321 = vst [vmem:[%s4 + $0x10] sm:$0xf] %v6313
  %6322 = vst [vmem:[%s4 + $0x14] sm:$0xf] %v6314
  %6323 = vst [vmem:[%s4 + $0x18] sm:$0xf] %v6315
  %6324 = vst [vmem:[%s4 + $0x1c] sm:$0xf] %v6316
  // Predicated region
  $region18: #{_lambda_.1} parent=0 // pred_check
    _
  $region19: #{_lambda_.1} parent=0 // pred_check_branch
    %6326 = sbr.rel (0) target = $region21
  $region20: #{_lambda_.1} parent=0 // pred_region
    _
  $region21: #{_lambda_.1} parent=0 // pred_fallthru
    _
  // Predicated region
  $region22: #{_lambda_.1} parent=0 // pred_check
    _
  $region23: #{_lambda_.1} parent=0 // pred_check_branch
    %6328 = sbr.rel (0) target = $region25
  $region24: #{_lambda_.1} parent=0 // pred_region
    _
  $region25: #{_lambda_.1} parent=0 // pred_fallthru
    _

</llo_original>
